<compile_context>
chip_gen: v7x
topology: tpu7x:2x2x1
jax: 0.10.0
libtpu: 0.0.40
codegen_flags: <defaults>
</compile_context>

<pallas_src>
import jax
import jax.numpy as jnp
from jax.experimental import pallas as pl
from jax.experimental.pallas import tpu as pltpu


# ----------------------------------------------------------------------------
# Fused kernel: conv(3x3, SAME) + bias + ReLU + global-avg-pool + 2-layer head.
# One grid step == Bt images.
# ----------------------------------------------------------------------------
def plcil_fused_kernel(x_ref, wc_ref, bc_ref, w1_ref, b1_ref, w2_ref, b2_ref, o_ref):
    """
    x_ref : (Bt, H+2, W+2, Cin) f32   haloed NHWC input block
    wc_ref: (9*Cin, Cout)       bf16  conv weight, im2col row order (dh, dw, cin)
    bc_ref: (1, Cout)           f32
    w1_ref: (Cout, F)           bf16
    b1_ref: (1, F)              f32
    w2_ref: (F, NCp)            bf16  (output columns zero-padded to 128 lanes)
    b2_ref: (1, NCp)            f32   (zero-padded to 128 lanes)
    o_ref : (Bt, NCp)           f32   lane-dense logits block
    """
    Bt, Hp, Wp, Cin = x_ref.shape
    H, W = Hp - 2, Wp - 2
    inv_hw = 1.0 / float(H * W)

    pooled_rows = []
    for b in range(Bt):
        # In-VMEM im2col for one image: 9 statically shifted (H*W, Cin) windows of
        # the VMEM-resident haloed tile, concatenated on the lane axis.  Single
        # hoisted f32->bf16 cast of the patch matrix, then ONE K=9*Cin MXU dot
        # (instead of 9 K=Cin dots + 8 f32 accumulator adds).
        taps = [
            x_ref[b, dh:dh + H, dw:dw + W, :].reshape(H * W, Cin)
            for dh in range(3) for dw in range(3)
        ]
        patches = jnp.concatenate(taps, axis=-1).astype(jnp.bfloat16)   # (H*W, 9*Cin)
        conv = jnp.dot(patches, wc_ref[...],
                       preferred_element_type=jnp.float32)              # (H*W, Cout) f32
        conv = jnp.maximum(conv + bc_ref[...], 0.0)                     # bias once + ReLU
        # Global average pool.  Per-image processing keeps only this short-lived
        # (H*W, Cout) tile and a (1, Cout) row live -> no accumulator spills.
        pooled_rows.append(jnp.sum(conv, axis=0, keepdims=True) * inv_hw)

    pooled = jnp.concatenate(pooled_rows, axis=0)                        # (Bt, Cout) f32

    # Two-layer head on the MXU with M = Bt rows; accumulation / biases in f32.
    feats = jnp.dot(pooled.astype(jnp.bfloat16), w1_ref[...],
                    preferred_element_type=jnp.float32) + b1_ref[...]    # (Bt, F)
    logits = jnp.dot(feats.astype(jnp.bfloat16), w2_ref[...],
                     preferred_element_type=jnp.float32) + b2_ref[...]   # (Bt, NCp)
    o_ref[...] = logits.astype(o_ref.dtype)                              # lane-dense store


def plcil_forward(x_nchw, params, block_b=8):
    """Forward pass of PLCiLTrainer (synthetic IncrementalNet backbone + head)."""
    w_conv, b_conv = params["w_conv"], params["b_conv"]
    w1, b1 = params["w1"], params["b1"]
    w2, b2 = params["w2"], params["b2"]

    B, Cin, H, W = x_nchw.shape
    Cout = w_conv.shape[1]
    F = w1.shape[1]
    NC = w2.shape[1]
    NCp = pl.cdiv(NC, 128) * 128          # lane-dense logits width
    Bt = min(block_b, B)                  # images per grid step
    Bpad = pl.cdiv(B, Bt) * Bt
    n_steps = Bpad // Bt

    # NCHW -> NHWC, 1-pixel halo for the SAME conv, batch padded to a multiple of Bt.
    # TODO(synk): pre-cast xp to bf16 (halves input DMA) once odd-offset packed-sublane
    # slicing of bf16 refs is verified on the target toolchain; kept f32 here for a
    # known-clean lowering of the shifted in-kernel window loads.
    x = jnp.transpose(x_nchw, (0, 2, 3, 1))                       # [B, H, W, Cin]
    xp = jnp.pad(x, ((0, Bpad - B), (1, 1), (1, 1), (0, 0)))      # [Bpad, H+2, W+2, Cin]

    # amp emulation: matmul operands in bf16, accumulation / biases in f32.
    wc = w_conv.astype(jnp.bfloat16)                              # (9*Cin, Cout), im2col order
    w1b = w1.astype(jnp.bfloat16)
    w2b = jnp.pad(w2, ((0, 0), (0, NCp - NC))).astype(jnp.bfloat16)   # (F, NCp)
    b2p = jnp.pad(b2, ((0, 0), (0, NCp - NC)))                        # (1, NCp) f32

    flops = Bpad * (2 * H * W * 9 * Cin * Cout + 2 * Cout * F + 2 * F * NCp)
    bytes_accessed = (xp.size * 4 + wc.size * 2 + b_conv.size * 4
                      + w1b.size * 2 + b1.size * 4 + w2b.size * 2 + b2p.size * 4
                      + Bpad * NCp * 4)

    logits_p = pl.pallas_call(
        plcil_fused_kernel,
        out_shape=jax.ShapeDtypeStruct((Bpad, NCp), jnp.float32),
        grid=(n_steps,),
        in_specs=[
            pl.BlockSpec((Bt, H + 2, W + 2, Cin), lambda g: (g, 0, 0, 0)),
            pl.BlockSpec((9 * Cin, Cout), lambda g: (0, 0)),
            pl.BlockSpec((1, Cout), lambda g: (0, 0)),
            pl.BlockSpec((Cout, F), lambda g: (0, 0)),
            pl.BlockSpec((1, F), lambda g: (0, 0)),
            pl.BlockSpec((F, NCp), lambda g: (0, 0)),
            pl.BlockSpec((1, NCp), lambda g: (0, 0)),
        ],
        out_specs=pl.BlockSpec((Bt, NCp), lambda g: (g, 0)),
        compiler_params=pltpu.CompilerParams(
            dimension_semantics=("parallel",)),
        cost_estimate=pl.CostEstimate(flops=flops, transcendentals=0,
                                      bytes_accessed=bytes_accessed),
    )(xp, wc, b_conv, w1b, b1, w2b, b2p)

    return logits_p[:B, :NC]


def plcil_reference(x_nchw, params):
    """Pure-JAX f32 reference (same math, no bf16 rounding)."""
    w_conv, b_conv = params["w_conv"], params["b_conv"]
    w1, b1 = params["w1"], params["b1"]
    w2, b2 = params["w2"], params["b2"]
    B, Cin, H, W = x_nchw.shape
    Cout = w_conv.shape[1]
    x = jnp.transpose(x_nchw, (0, 2, 3, 1))
    xp = jnp.pad(x, ((0, 0), (1, 1), (1, 1), (0, 0)))
    patch_list = []
    for dh in range(3):
        for dw in range(3):
            patch_list.append(xp[:, dh:dh + H, dw:dw + W, :])
    patches = jnp.concatenate(patch_list, axis=-1).reshape(B * H * W, 9 * Cin)
    conv = jnp.maximum(patches @ w_conv + b_conv, 0.0).reshape(B, H * W, Cout)
    pooled = conv.mean(axis=1)
    feats = pooled @ w1 + b1
    return feats @ w2 + b2


if __name__ == "__main__":
    # Small shapes consistent with the module's forward (conv-style NCHW input).
    B, Cin, H, W = 2, 4, 16, 16
    Cout = 16
    feature_size = 128   # matches PLCiLTrainer(feature_size=128)
    n_classes = 10       # as if trainer.increment_classes(10) was called

    key = jax.random.PRNGKey(0)
    k_x, k_wc, k_bc, k_w1, k_b1, k_w2, k_b2 = jax.random.split(key, 7)

    x = jax.random.normal(k_x, (B, Cin, H, W), dtype=jnp.float32)

    params = {
        # conv weight in im2col layout: row index = (dh*3+dw)*Cin + cin
        "w_conv": jax.random.normal(k_wc, (9 * Cin, Cout), jnp.float32) * 0.1,
        "b_conv": jax.random.normal(k_bc, (1, Cout), jnp.float32) * 0.05,
        "w1": jax.random.normal(k_w1, (Cout, feature_size), jnp.float32) * 0.1,
        "b1": jax.random.normal(k_b1, (1, feature_size), jnp.float32) * 0.05,
        "w2": jax.random.normal(k_w2, (feature_size, n_classes), jnp.float32) * 0.1,
        "b2": jax.random.normal(k_b2, (1, n_classes), jnp.float32) * 0.05,
    }

    logits = jax.jit(plcil_forward)(x, params)
    logits = jax.block_until_ready(logits)
    assert logits.shape == (B, n_classes)
    assert logits.dtype == jnp.float32

    # Sanity check against the pure-JAX reference (loose tol: bf16 MXU inputs).
    ref = plcil_reference(x, params)
    assert jnp.allclose(logits, ref, rtol=5e-2, atol=1e-1), (
        f"max abs err {jnp.max(jnp.abs(logits - ref))}"
    )

    print("KERNEL_OK")
</pallas_src>

<mosaic_0001>
module attributes {stable_mosaic.version = 11 : i64} {
  func.func @plcil_fused_kernel(%arg0: i32, %arg1: memref<2x18x18x4xf32, #tpu.memory_space<vmem>>, %arg2: memref<36x16xbf16, #tpu.memory_space<vmem>>, %arg3: memref<1x16xf32, #tpu.memory_space<vmem>>, %arg4: memref<16x128xbf16, #tpu.memory_space<vmem>>, %arg5: memref<1x128xf32, #tpu.memory_space<vmem>>, %arg6: memref<128x128xbf16, #tpu.memory_space<vmem>>, %arg7: memref<1x128xf32, #tpu.memory_space<vmem>>, %arg8: memref<2x128xf32, #tpu.memory_space<vmem>>) attributes {dimension_semantics = [#tpu.dimension_semantics<parallel>], iteration_bounds = array<i64: 1>, scalar_prefetch = 0 : i64, scratch_operands = 0 : i64, tpu.core_type = #tpu.core_type<tc>, window_params = [{transform_indices = @transform_0, window_bounds = array<i64: 2, 18, 18, 4>}, {pipeline_mode = #tpu.pipeline_mode<synchronous>, transform_indices = @transform_1, window_bounds = array<i64: 36, 16>}, {pipeline_mode = #tpu.pipeline_mode<synchronous>, transform_indices = @transform_2, window_bounds = array<i64: 1, 16>}, {pipeline_mode = #tpu.pipeline_mode<synchronous>, transform_indices = @transform_3, window_bounds = array<i64: 16, 128>}, {pipeline_mode = #tpu.pipeline_mode<synchronous>, transform_indices = @transform_4, window_bounds = array<i64: 1, 128>}, {pipeline_mode = #tpu.pipeline_mode<synchronous>, transform_indices = @transform_5, window_bounds = array<i64: 128, 128>}, {pipeline_mode = #tpu.pipeline_mode<synchronous>, transform_indices = @transform_6, window_bounds = array<i64: 1, 128>}, {transform_indices = @transform_7, window_bounds = array<i64: 2, 128>}]} {
    %c0 = arith.constant 0 : index
    %c0_0 = arith.constant 0 : index
    %c0_1 = arith.constant 0 : index
    %c0_2 = arith.constant 0 : index
    %0 = vector.load %arg1[%c0, %c0_0, %c0_1, %c0_2] : memref<2x18x18x4xf32, #tpu.memory_space<vmem>>, vector<1x16x16x4xf32>
    %1 = vector.shape_cast %0 : vector<1x16x16x4xf32> to vector<16x16x4xf32>
    %2 = vector.shape_cast %1 : vector<16x16x4xf32> to vector<256x4xf32>
    %c0_3 = arith.constant 0 : index
    %c0_4 = arith.constant 0 : index
    %c1 = arith.constant 1 : index
    %c0_5 = arith.constant 0 : index
    %3 = vector.load %arg1[%c0_3, %c0_4, %c1, %c0_5] : memref<2x18x18x4xf32, #tpu.memory_space<vmem>>, vector<1x16x16x4xf32>
    %4 = vector.shape_cast %3 : vector<1x16x16x4xf32> to vector<16x16x4xf32>
    %5 = vector.shape_cast %4 : vector<16x16x4xf32> to vector<256x4xf32>
    %c0_6 = arith.constant 0 : index
    %c0_7 = arith.constant 0 : index
    %c2 = arith.constant 2 : index
    %c0_8 = arith.constant 0 : index
    %6 = vector.load %arg1[%c0_6, %c0_7, %c2, %c0_8] : memref<2x18x18x4xf32, #tpu.memory_space<vmem>>, vector<1x16x16x4xf32>
    %7 = vector.shape_cast %6 : vector<1x16x16x4xf32> to vector<16x16x4xf32>
    %8 = vector.shape_cast %7 : vector<16x16x4xf32> to vector<256x4xf32>
    %c0_9 = arith.constant 0 : index
    %c1_10 = arith.constant 1 : index
    %c0_11 = arith.constant 0 : index
    %c0_12 = arith.constant 0 : index
    %9 = vector.load %arg1[%c0_9, %c1_10, %c0_11, %c0_12] : memref<2x18x18x4xf32, #tpu.memory_space<vmem>>, vector<1x16x16x4xf32>
    %10 = vector.shape_cast %9 : vector<1x16x16x4xf32> to vector<16x16x4xf32>
    %11 = vector.shape_cast %10 : vector<16x16x4xf32> to vector<256x4xf32>
    %c0_13 = arith.constant 0 : index
    %c1_14 = arith.constant 1 : index
    %c1_15 = arith.constant 1 : index
    %c0_16 = arith.constant 0 : index
    %12 = vector.load %arg1[%c0_13, %c1_14, %c1_15, %c0_16] : memref<2x18x18x4xf32, #tpu.memory_space<vmem>>, vector<1x16x16x4xf32>
    %13 = vector.shape_cast %12 : vector<1x16x16x4xf32> to vector<16x16x4xf32>
    %14 = vector.shape_cast %13 : vector<16x16x4xf32> to vector<256x4xf32>
    %c0_17 = arith.constant 0 : index
    %c1_18 = arith.constant 1 : index
    %c2_19 = arith.constant 2 : index
    %c0_20 = arith.constant 0 : index
    %15 = vector.load %arg1[%c0_17, %c1_18, %c2_19, %c0_20] : memref<2x18x18x4xf32, #tpu.memory_space<vmem>>, vector<1x16x16x4xf32>
    %16 = vector.shape_cast %15 : vector<1x16x16x4xf32> to vector<16x16x4xf32>
    %17 = vector.shape_cast %16 : vector<16x16x4xf32> to vector<256x4xf32>
    %c0_21 = arith.constant 0 : index
    %c2_22 = arith.constant 2 : index
    %c0_23 = arith.constant 0 : index
    %c0_24 = arith.constant 0 : index
    %18 = vector.load %arg1[%c0_21, %c2_22, %c0_23, %c0_24] : memref<2x18x18x4xf32, #tpu.memory_space<vmem>>, vector<1x16x16x4xf32>
    %19 = vector.shape_cast %18 : vector<1x16x16x4xf32> to vector<16x16x4xf32>
    %20 = vector.shape_cast %19 : vector<16x16x4xf32> to vector<256x4xf32>
    %c0_25 = arith.constant 0 : index
    %c2_26 = arith.constant 2 : index
    %c1_27 = arith.constant 1 : index
    %c0_28 = arith.constant 0 : index
    %21 = vector.load %arg1[%c0_25, %c2_26, %c1_27, %c0_28] : memref<2x18x18x4xf32, #tpu.memory_space<vmem>>, vector<1x16x16x4xf32>
    %22 = vector.shape_cast %21 : vector<1x16x16x4xf32> to vector<16x16x4xf32>
    %23 = vector.shape_cast %22 : vector<16x16x4xf32> to vector<256x4xf32>
    %c0_29 = arith.constant 0 : index
    %c2_30 = arith.constant 2 : index
    %c2_31 = arith.constant 2 : index
    %c0_32 = arith.constant 0 : index
    %24 = vector.load %arg1[%c0_29, %c2_30, %c2_31, %c0_32] : memref<2x18x18x4xf32, #tpu.memory_space<vmem>>, vector<1x16x16x4xf32>
    %25 = vector.shape_cast %24 : vector<1x16x16x4xf32> to vector<16x16x4xf32>
    %26 = vector.shape_cast %25 : vector<16x16x4xf32> to vector<256x4xf32>
    %27 = tpu.concatenate %2, %5, %8, %11, %14, %17, %20, %23, %26 in 1 : vector<256x4xf32>, vector<256x4xf32>, vector<256x4xf32>, vector<256x4xf32>, vector<256x4xf32>, vector<256x4xf32>, vector<256x4xf32>, vector<256x4xf32>, vector<256x4xf32> -> vector<256x36xf32>
    %28 = arith.truncf %27 : vector<256x36xf32> to vector<256x36xbf16>
    %c0_33 = arith.constant 0 : index
    %c0_34 = arith.constant 0 : index
    %29 = vector.load %arg2[%c0_33, %c0_34] : memref<36x16xbf16, #tpu.memory_space<vmem>>, vector<36x16xbf16>
    %cst = arith.constant dense<0.000000e+00> : vector<256x16xf32>
    %30 = tpu.matmul %28, %29, %cst {dimension_numbers = #tpu.dot_dimension_numbers<[1], [0], [0], [1], [0, 0, 1, 1], [], []>} : vector<256x36xbf16>, vector<36x16xbf16>, vector<256x16xf32> -> vector<256x16xf32>
    %c0_35 = arith.constant 0 : index
    %c0_36 = arith.constant 0 : index
    %31 = vector.load %arg3[%c0_35, %c0_36] : memref<1x16xf32, #tpu.memory_space<vmem>>, vector<1x16xf32>
    %32 = vector.broadcast %31 : vector<1x16xf32> to vector<256x16xf32>
    %33 = arith.addf %30, %32 : vector<256x16xf32>
    %cst_37 = arith.constant 0.000000e+00 : f32
    %34 = vector.broadcast %cst_37 : f32 to vector<256x16xf32>
    %35 = arith.maximumf %33, %34 : vector<256x16xf32>
    %cst_38 = arith.constant dense<0.000000e+00> : vector<16xf32>
    %36 = vector.multi_reduction <add>, %35, %cst_38 [0] : vector<256x16xf32> to vector<16xf32>
    %37 = vector.shape_cast %36 : vector<16xf32> to vector<1x16xf32>
    %cst_39 = arith.constant 3.906250e-03 : f32
    %38 = vector.broadcast %cst_39 : f32 to vector<1x16xf32>
    %39 = arith.mulf %37, %38 : vector<1x16xf32>
    %c1_40 = arith.constant 1 : index
    %c0_41 = arith.constant 0 : index
    %c0_42 = arith.constant 0 : index
    %c0_43 = arith.constant 0 : index
    %40 = vector.load %arg1[%c1_40, %c0_41, %c0_42, %c0_43] : memref<2x18x18x4xf32, #tpu.memory_space<vmem>>, vector<1x16x16x4xf32>
    %41 = vector.shape_cast %40 : vector<1x16x16x4xf32> to vector<16x16x4xf32>
    %42 = vector.shape_cast %41 : vector<16x16x4xf32> to vector<256x4xf32>
    %c1_44 = arith.constant 1 : index
    %c0_45 = arith.constant 0 : index
    %c1_46 = arith.constant 1 : index
    %c0_47 = arith.constant 0 : index
    %43 = vector.load %arg1[%c1_44, %c0_45, %c1_46, %c0_47] : memref<2x18x18x4xf32, #tpu.memory_space<vmem>>, vector<1x16x16x4xf32>
    %44 = vector.shape_cast %43 : vector<1x16x16x4xf32> to vector<16x16x4xf32>
    %45 = vector.shape_cast %44 : vector<16x16x4xf32> to vector<256x4xf32>
    %c1_48 = arith.constant 1 : index
    %c0_49 = arith.constant 0 : index
    %c2_50 = arith.constant 2 : index
    %c0_51 = arith.constant 0 : index
    %46 = vector.load %arg1[%c1_48, %c0_49, %c2_50, %c0_51] : memref<2x18x18x4xf32, #tpu.memory_space<vmem>>, vector<1x16x16x4xf32>
    %47 = vector.shape_cast %46 : vector<1x16x16x4xf32> to vector<16x16x4xf32>
    %48 = vector.shape_cast %47 : vector<16x16x4xf32> to vector<256x4xf32>
    %c1_52 = arith.constant 1 : index
    %c1_53 = arith.constant 1 : index
    %c0_54 = arith.constant 0 : index
    %c0_55 = arith.constant 0 : index
    %49 = vector.load %arg1[%c1_52, %c1_53, %c0_54, %c0_55] : memref<2x18x18x4xf32, #tpu.memory_space<vmem>>, vector<1x16x16x4xf32>
    %50 = vector.shape_cast %49 : vector<1x16x16x4xf32> to vector<16x16x4xf32>
    %51 = vector.shape_cast %50 : vector<16x16x4xf32> to vector<256x4xf32>
    %c1_56 = arith.constant 1 : index
    %c1_57 = arith.constant 1 : index
    %c1_58 = arith.constant 1 : index
    %c0_59 = arith.constant 0 : index
    %52 = vector.load %arg1[%c1_56, %c1_57, %c1_58, %c0_59] : memref<2x18x18x4xf32, #tpu.memory_space<vmem>>, vector<1x16x16x4xf32>
    %53 = vector.shape_cast %52 : vector<1x16x16x4xf32> to vector<16x16x4xf32>
    %54 = vector.shape_cast %53 : vector<16x16x4xf32> to vector<256x4xf32>
    %c1_60 = arith.constant 1 : index
    %c1_61 = arith.constant 1 : index
    %c2_62 = arith.constant 2 : index
    %c0_63 = arith.constant 0 : index
    %55 = vector.load %arg1[%c1_60, %c1_61, %c2_62, %c0_63] : memref<2x18x18x4xf32, #tpu.memory_space<vmem>>, vector<1x16x16x4xf32>
    %56 = vector.shape_cast %55 : vector<1x16x16x4xf32> to vector<16x16x4xf32>
    %57 = vector.shape_cast %56 : vector<16x16x4xf32> to vector<256x4xf32>
    %c1_64 = arith.constant 1 : index
    %c2_65 = arith.constant 2 : index
    %c0_66 = arith.constant 0 : index
    %c0_67 = arith.constant 0 : index
    %58 = vector.load %arg1[%c1_64, %c2_65, %c0_66, %c0_67] : memref<2x18x18x4xf32, #tpu.memory_space<vmem>>, vector<1x16x16x4xf32>
    %59 = vector.shape_cast %58 : vector<1x16x16x4xf32> to vector<16x16x4xf32>
    %60 = vector.shape_cast %59 : vector<16x16x4xf32> to vector<256x4xf32>
    %c1_68 = arith.constant 1 : index
    %c2_69 = arith.constant 2 : index
    %c1_70 = arith.constant 1 : index
    %c0_71 = arith.constant 0 : index
    %61 = vector.load %arg1[%c1_68, %c2_69, %c1_70, %c0_71] : memref<2x18x18x4xf32, #tpu.memory_space<vmem>>, vector<1x16x16x4xf32>
    %62 = vector.shape_cast %61 : vector<1x16x16x4xf32> to vector<16x16x4xf32>
    %63 = vector.shape_cast %62 : vector<16x16x4xf32> to vector<256x4xf32>
    %c1_72 = arith.constant 1 : index
    %c2_73 = arith.constant 2 : index
    %c2_74 = arith.constant 2 : index
    %c0_75 = arith.constant 0 : index
    %64 = vector.load %arg1[%c1_72, %c2_73, %c2_74, %c0_75] : memref<2x18x18x4xf32, #tpu.memory_space<vmem>>, vector<1x16x16x4xf32>
    %65 = vector.shape_cast %64 : vector<1x16x16x4xf32> to vector<16x16x4xf32>
    %66 = vector.shape_cast %65 : vector<16x16x4xf32> to vector<256x4xf32>
    %67 = tpu.concatenate %42, %45, %48, %51, %54, %57, %60, %63, %66 in 1 : vector<256x4xf32>, vector<256x4xf32>, vector<256x4xf32>, vector<256x4xf32>, vector<256x4xf32>, vector<256x4xf32>, vector<256x4xf32>, vector<256x4xf32>, vector<256x4xf32> -> vector<256x36xf32>
    %68 = arith.truncf %67 : vector<256x36xf32> to vector<256x36xbf16>
    %c0_76 = arith.constant 0 : index
    %c0_77 = arith.constant 0 : index
    %69 = vector.load %arg2[%c0_76, %c0_77] : memref<36x16xbf16, #tpu.memory_space<vmem>>, vector<36x16xbf16>
    %cst_78 = arith.constant dense<0.000000e+00> : vector<256x16xf32>
    %70 = tpu.matmul %68, %69, %cst_78 {dimension_numbers = #tpu.dot_dimension_numbers<[1], [0], [0], [1], [0, 0, 1, 1], [], []>} : vector<256x36xbf16>, vector<36x16xbf16>, vector<256x16xf32> -> vector<256x16xf32>
    %c0_79 = arith.constant 0 : index
    %c0_80 = arith.constant 0 : index
    %71 = vector.load %arg3[%c0_79, %c0_80] : memref<1x16xf32, #tpu.memory_space<vmem>>, vector<1x16xf32>
    %72 = vector.broadcast %71 : vector<1x16xf32> to vector<256x16xf32>
    %73 = arith.addf %70, %72 : vector<256x16xf32>
    %cst_81 = arith.constant 0.000000e+00 : f32
    %74 = vector.broadcast %cst_81 : f32 to vector<256x16xf32>
    %75 = arith.maximumf %73, %74 : vector<256x16xf32>
    %cst_82 = arith.constant dense<0.000000e+00> : vector<16xf32>
    %76 = vector.multi_reduction <add>, %75, %cst_82 [0] : vector<256x16xf32> to vector<16xf32>
    %77 = vector.shape_cast %76 : vector<16xf32> to vector<1x16xf32>
    %cst_83 = arith.constant 3.906250e-03 : f32
    %78 = vector.broadcast %cst_83 : f32 to vector<1x16xf32>
    %79 = arith.mulf %77, %78 : vector<1x16xf32>
    %80 = tpu.concatenate %39, %79 in 0 : vector<1x16xf32>, vector<1x16xf32> -> vector<2x16xf32>
    %81 = arith.truncf %80 : vector<2x16xf32> to vector<2x16xbf16>
    %c0_84 = arith.constant 0 : index
    %c0_85 = arith.constant 0 : index
    %82 = vector.load %arg4[%c0_84, %c0_85] : memref<16x128xbf16, #tpu.memory_space<vmem>>, vector<16x128xbf16>
    %cst_86 = arith.constant dense<0.000000e+00> : vector<2x128xf32>
    %83 = tpu.matmul %81, %82, %cst_86 {dimension_numbers = #tpu.dot_dimension_numbers<[1], [0], [0], [1], [0, 0, 1, 1], [], []>} : vector<2x16xbf16>, vector<16x128xbf16>, vector<2x128xf32> -> vector<2x128xf32>
    %c0_87 = arith.constant 0 : index
    %c0_88 = arith.constant 0 : index
    %84 = vector.load %arg5[%c0_87, %c0_88] : memref<1x128xf32, #tpu.memory_space<vmem>>, vector<1x128xf32>
    %85 = vector.broadcast %84 : vector<1x128xf32> to vector<2x128xf32>
    %86 = arith.addf %83, %85 : vector<2x128xf32>
    %87 = arith.truncf %86 : vector<2x128xf32> to vector<2x128xbf16>
    %c0_89 = arith.constant 0 : index
    %c0_90 = arith.constant 0 : index
    %88 = vector.load %arg6[%c0_89, %c0_90] : memref<128x128xbf16, #tpu.memory_space<vmem>>, vector<128x128xbf16>
    %cst_91 = arith.constant dense<0.000000e+00> : vector<2x128xf32>
    %89 = tpu.matmul %87, %88, %cst_91 {dimension_numbers = #tpu.dot_dimension_numbers<[1], [0], [0], [1], [0, 0, 1, 1], [], []>} : vector<2x128xbf16>, vector<128x128xbf16>, vector<2x128xf32> -> vector<2x128xf32>
    %c0_92 = arith.constant 0 : index
    %c0_93 = arith.constant 0 : index
    %90 = vector.load %arg7[%c0_92, %c0_93] : memref<1x128xf32, #tpu.memory_space<vmem>>, vector<1x128xf32>
    %91 = vector.broadcast %90 : vector<1x128xf32> to vector<2x128xf32>
    %92 = arith.addf %89, %91 : vector<2x128xf32>
    %c0_94 = arith.constant 0 : index
    %c0_95 = arith.constant 0 : index
    %93 = vector.load %arg8[%c0_94, %c0_95] : memref<2x128xf32, #tpu.memory_space<vmem>>, vector<2x128xf32>
    tpu.vector_store %arg8[%c0_94, %c0_95], %92 {strides = array<i32>} : memref<2x128xf32, #tpu.memory_space<vmem>>, vector<2x128xf32>,
    return
  }
  func.func @transform_0(%arg0: i32) -> (i32, i32, i32, i32) {
    %c0_i32 = arith.constant 0 : i32
    %c0_i32_0 = arith.constant 0 : i32
    %c0_i32_1 = arith.constant 0 : i32
    %c0_i32_2 = arith.constant 0 : i32
    return %arg0, %c0_i32, %c0_i32_0, %c0_i32_1 : i32, i32, i32, i32
  }
  func.func @transform_1(%arg0: i32) -> (i32, i32) {
    %c0_i32 = arith.constant 0 : i32
    %c0_i32_0 = arith.constant 0 : i32
    %c0_i32_1 = arith.constant 0 : i32
    return %c0_i32, %c0_i32_0 : i32, i32
  }
  func.func @transform_2(%arg0: i32) -> (i32, i32) {
    %c0_i32 = arith.constant 0 : i32
    %c0_i32_0 = arith.constant 0 : i32
    %c0_i32_1 = arith.constant 0 : i32
    return %c0_i32, %c0_i32_0 : i32, i32
  }
  func.func @transform_3(%arg0: i32) -> (i32, i32) {
    %c0_i32 = arith.constant 0 : i32
    %c0_i32_0 = arith.constant 0 : i32
    %c0_i32_1 = arith.constant 0 : i32
    return %c0_i32, %c0_i32_0 : i32, i32
  }
  func.func @transform_4(%arg0: i32) -> (i32, i32) {
    %c0_i32 = arith.constant 0 : i32
    %c0_i32_0 = arith.constant 0 : i32
    %c0_i32_1 = arith.constant 0 : i32
    return %c0_i32, %c0_i32_0 : i32, i32
  }
  func.func @transform_5(%arg0: i32) -> (i32, i32) {
    %c0_i32 = arith.constant 0 : i32
    %c0_i32_0 = arith.constant 0 : i32
    %c0_i32_1 = arith.constant 0 : i32
    return %c0_i32, %c0_i32_0 : i32, i32
  }
  func.func @transform_6(%arg0: i32) -> (i32, i32) {
    %c0_i32 = arith.constant 0 : i32
    %c0_i32_0 = arith.constant 0 : i32
    %c0_i32_1 = arith.constant 0 : i32
    return %c0_i32, %c0_i32_0 : i32, i32
  }
  func.func @transform_7(%arg0: i32) -> (i32, i32) {
    %c0_i32 = arith.constant 0 : i32
    %c0_i32_0 = arith.constant 0 : i32
    return %arg0, %c0_i32 : i32, i32
  }
}

</mosaic_0001>

<llo_original>
// kernel: plcil_forward.1
$region0: #{plcil_forward.1}
  #allocation0 [shape = 'u32[]', space=smem, size = 0x4, offset = 0x4, fixed_abs, tag = 'smem constant byte address 0x4 - core index']
  #allocation1 [shape = 'u32[144,128]{1,0:T(1,128)}', space=vmem, size = 0x12000, scoped, tag = 'internal scratch']
  %s0 = inlined_call_operand.vmem [shape: f32[2,18,18,4], index: 0, kind: input, shape index: {}]
  %s1 = inlined_call_operand.vmem [shape: bf16[36,16], index: 1, kind: input, shape index: {}]
  %s2 = inlined_call_operand.vmem [shape: f32[1,16], index: 2, kind: input, shape index: {}]
  %s3 = inlined_call_operand.vmem [shape: bf16[16,128], index: 3, kind: input, shape index: {}]
  %s4 = inlined_call_operand.vmem [shape: f32[1,128], index: 4, kind: input, shape index: {}]
  %s5 = inlined_call_operand.vmem [shape: bf16[128,128], index: 5, kind: input, shape index: {}]
  %s6 = inlined_call_operand.vmem [shape: f32[1,128], index: 6, kind: input, shape index: {}]
  %s7 = inlined_call_operand.hbm [shape: f32[2,128], index: 7, kind: output, shape index: {}]
  %s8 = sld [smem:[#allocation0]]
  $region38: #{plcil_forward.1} parent=0
    _
  %s10 = ssub.s32 1, %s8
  %s11 = scalar_select 0, %s10, %s8
  $region1: #{plcil_forward.1} parent=0
    #allocation2 [shape = 'u8[1024]{0}', space=vmem, size = 0x400, scoped, tag = 'output window, operand 0, single buffered']
    #allocation3 [shape = 's32[1]{0}', space=sflag, size = 0x4, scoped, tag = 'scoped memory for plcil_forward.1']
    %12 = vsyncpa [#allocation3], 0
    // Predicated region
    $region2: #{plcil_forward.1} parent=1 // pred_check
      _
    $region3: #{plcil_forward.1} parent=1 // pred_check_branch
      %14 = sbr.rel (0) target = $region5
    $region4: #{plcil_forward.1} parent=1 // pred_region
      _
    $region5: #{plcil_forward.1} parent=1 // pred_fallthru
      _
    // Predicated region
    $region6: #{plcil_forward.1} parent=1 // pred_check
      _
    $region7: #{plcil_forward.1} parent=1 // pred_check_branch
      %16 = sbr.rel (0) target = $region9
    $region8: #{plcil_forward.1} parent=1 // pred_region
      _
    $region9: #{plcil_forward.1} parent=1 // pred_fallthru
      _
    // Predicated region
    $region10: #{plcil_forward.1} parent=1 // pred_check
      _
    $region11: #{plcil_forward.1} parent=1 // pred_check_branch
      %18 = sbr.rel (0) target = $region13
    $region12: #{plcil_forward.1} parent=1 // pred_region
      _
    $region13: #{plcil_forward.1} parent=1 // pred_fallthru
      _
    // Predicated region
    $region14: #{plcil_forward.1} parent=1 // pred_check
      _
    $region15: #{plcil_forward.1} parent=1 // pred_check_branch
      %20 = sbr.rel (0) target = $region17
    $region16: #{plcil_forward.1} parent=1 // pred_region
      _
    $region17: #{plcil_forward.1} parent=1 // pred_fallthru
      _
    // Predicated region
    $region18: #{plcil_forward.1} parent=1 // pred_check
      _
    $region19: #{plcil_forward.1} parent=1 // pred_check_branch
      %22 = sbr.rel (0) target = $region21
    $region20: #{plcil_forward.1} parent=1 // pred_region
      _
    $region21: #{plcil_forward.1} parent=1 // pred_fallthru
      _
    // Predicated region
    $region22: #{plcil_forward.1} parent=1 // pred_check
      _
    $region23: #{plcil_forward.1} parent=1 // pred_check_branch
      %24 = sbr.rel (0) target = $region25
    $region24: #{plcil_forward.1} parent=1 // pred_region
      _
    $region25: #{plcil_forward.1} parent=1 // pred_fallthru
      _
    // Predicated region
    $region26: #{plcil_forward.1} parent=1 // pred_check
      _
    $region27: #{plcil_forward.1} parent=1 // pred_check_branch
      %26 = sbr.rel (0) target = $region29
    $region28: #{plcil_forward.1} parent=1 // pred_region
      _
    $region29: #{plcil_forward.1} parent=1 // pred_fallthru
      _
    %v28 = vld [vmem:[%s0] sm:$0xff]
    %v29 = vld [vmem:[%s0 + $0x8] sm:$0xff]
    %v30 = vld [vmem:[%s0 + $0x18] sm:$0xff]
    %v31 = vld [vmem:[%s0 + $0x20] sm:$0xff]
    %v32 = vld [vmem:[%s0 + $0x30] sm:$0xff]
    %v33 = vld [vmem:[%s0 + $0x38] sm:$0xff]
    %v34 = vld [vmem:[%s0 + $0x48] sm:$0xff]
    %v35 = vld [vmem:[%s0 + $0x50] sm:$0xff]
    %v36 = vld [vmem:[%s0 + $0x60] sm:$0xff]
    %v37 = vld [vmem:[%s0 + $0x68] sm:$0xff]
    %v38 = vld [vmem:[%s0 + $0x78] sm:$0xff]
    %v39 = vld [vmem:[%s0 + $0x80] sm:$0xff]
    %v40 = vld [vmem:[%s0 + $0x90] sm:$0xff]
    %v41 = vld [vmem:[%s0 + $0x98] sm:$0xff]
    %v42 = vld [vmem:[%s0 + $0xa8] sm:$0xff]
    %v43 = vld [vmem:[%s0 + $0xb0] sm:$0xff]
    %v44 = vld [vmem:[%s0 + $0xc0] sm:$0xff]
    %v45 = vld [vmem:[%s0 + $0xc8] sm:$0xff]
    %v46 = vld [vmem:[%s0 + $0xd8] sm:$0xff]
    %v47 = vld [vmem:[%s0 + $0xe0] sm:$0xff]
    %v48 = vld [vmem:[%s0 + $0xf0] sm:$0xff]
    %v49 = vld [vmem:[%s0 + $0xf8] sm:$0xff]
    %v50 = vld [vmem:[%s0 + $0x108] sm:$0xff]
    %v51 = vld [vmem:[%s0 + $0x110] sm:$0xff]
    %v52 = vld [vmem:[%s0 + $0x120] sm:$0xff]
    %v53 = vld [vmem:[%s0 + $0x128] sm:$0xff]
    %v54 = vld [vmem:[%s0 + $0x138] sm:$0xff]
    %v55 = vld [vmem:[%s0 + $0x140] sm:$0xff]
    %v56 = vld [vmem:[%s0 + $0x150] sm:$0xff]
    %v57 = vld [vmem:[%s0 + $0x158] sm:$0xff]
    %v58 = vld [vmem:[%s0 + $0x168] sm:$0xff]
    %v59 = vld [vmem:[%s0 + $0x170] sm:$0xff]
    %v60 = vld [vmem:[%s0 + $0x1] sm:$0xff]
    %v61 = vld [vmem:[%s0 + $0x9] sm:$0xff]
    %v62 = vld [vmem:[%s0 + $0x19] sm:$0xff]
    %v63 = vld [vmem:[%s0 + $0x21] sm:$0xff]
    %v64 = vld [vmem:[%s0 + $0x31] sm:$0xff]
    %v65 = vld [vmem:[%s0 + $0x39] sm:$0xff]
    %v66 = vld [vmem:[%s0 + $0x49] sm:$0xff]
    %v67 = vld [vmem:[%s0 + $0x51] sm:$0xff]
    %v68 = vld [vmem:[%s0 + $0x61] sm:$0xff]
    %v69 = vld [vmem:[%s0 + $0x69] sm:$0xff]
    %v70 = vld [vmem:[%s0 + $0x79] sm:$0xff]
    %v71 = vld [vmem:[%s0 + $0x81] sm:$0xff]
    %v72 = vld [vmem:[%s0 + $0x91] sm:$0xff]
    %v73 = vld [vmem:[%s0 + $0x99] sm:$0xff]
    %v74 = vld [vmem:[%s0 + $0xa9] sm:$0xff]
    %v75 = vld [vmem:[%s0 + $0xb1] sm:$0xff]
    %v76 = vld [vmem:[%s0 + $0xc1] sm:$0xff]
    %v77 = vld [vmem:[%s0 + $0xc9] sm:$0xff]
    %v78 = vld [vmem:[%s0 + $0xd9] sm:$0xff]
    %v79 = vld [vmem:[%s0 + $0xe1] sm:$0xff]
    %v80 = vld [vmem:[%s0 + $0xf1] sm:$0xff]
    %v81 = vld [vmem:[%s0 + $0xf9] sm:$0xff]
    %v82 = vld [vmem:[%s0 + $0x109] sm:$0xff]
    %v83 = vld [vmem:[%s0 + $0x111] sm:$0xff]
    %v84 = vld [vmem:[%s0 + $0x121] sm:$0xff]
    %v85 = vld [vmem:[%s0 + $0x129] sm:$0xff]
    %v86 = vld [vmem:[%s0 + $0x139] sm:$0xff]
    %v87 = vld [vmem:[%s0 + $0x141] sm:$0xff]
    %v88 = vld [vmem:[%s0 + $0x151] sm:$0xff]
    %v89 = vld [vmem:[%s0 + $0x159] sm:$0xff]
    %v90 = vld [vmem:[%s0 + $0x169] sm:$0xff]
    %v91 = vld [vmem:[%s0 + $0x171] sm:$0xff]
    %v92 = vld [vmem:[%s0 + $0x2] sm:$0xff]
    %v93 = vld [vmem:[%s0 + $0xa] sm:$0xff]
    %v94 = vld [vmem:[%s0 + $0x1a] sm:$0xff]
    %v95 = vld [vmem:[%s0 + $0x22] sm:$0xff]
    %v96 = vld [vmem:[%s0 + $0x32] sm:$0xff]
    %v97 = vld [vmem:[%s0 + $0x3a] sm:$0xff]
    %v98 = vld [vmem:[%s0 + $0x4a] sm:$0xff]
    %v99 = vld [vmem:[%s0 + $0x52] sm:$0xff]
    %v100 = vld [vmem:[%s0 + $0x62] sm:$0xff]
    %v101 = vld [vmem:[%s0 + $0x6a] sm:$0xff]
    %v102 = vld [vmem:[%s0 + $0x7a] sm:$0xff]
    %v103 = vld [vmem:[%s0 + $0x82] sm:$0xff]
    %v104 = vld [vmem:[%s0 + $0x92] sm:$0xff]
    %v105 = vld [vmem:[%s0 + $0x9a] sm:$0xff]
    %v106 = vld [vmem:[%s0 + $0xaa] sm:$0xff]
    %v107 = vld [vmem:[%s0 + $0xb2] sm:$0xff]
    %v108 = vld [vmem:[%s0 + $0xc2] sm:$0xff]
    %v109 = vld [vmem:[%s0 + $0xca] sm:$0xff]
    %v110 = vld [vmem:[%s0 + $0xda] sm:$0xff]
    %v111 = vld [vmem:[%s0 + $0xe2] sm:$0xff]
    %v112 = vld [vmem:[%s0 + $0xf2] sm:$0xff]
    %v113 = vld [vmem:[%s0 + $0xfa] sm:$0xff]
    %v114 = vld [vmem:[%s0 + $0x10a] sm:$0xff]
    %v115 = vld [vmem:[%s0 + $0x112] sm:$0xff]
    %v116 = vld [vmem:[%s0 + $0x122] sm:$0xff]
    %v117 = vld [vmem:[%s0 + $0x12a] sm:$0xff]
    %v118 = vld [vmem:[%s0 + $0x13a] sm:$0xff]
    %v119 = vld [vmem:[%s0 + $0x142] sm:$0xff]
    %v120 = vld [vmem:[%s0 + $0x152] sm:$0xff]
    %v121 = vld [vmem:[%s0 + $0x15a] sm:$0xff]
    %v122 = vld [vmem:[%s0 + $0x16a] sm:$0xff]
    %v123 = vld [vmem:[%s0 + $0x172] sm:$0xff]
    %s124 = scalar_lea.vmem %s0, 24
    %v125 = vld [vmem:[%s124] sm:$0xff]
    %v126 = vld [vmem:[%s124 + $0x8] sm:$0xff]
    %v127 = vld [vmem:[%s124 + $0x18] sm:$0xff]
    %v128 = vld [vmem:[%s124 + $0x20] sm:$0xff]
    %v129 = vld [vmem:[%s124 + $0x30] sm:$0xff]
    %v130 = vld [vmem:[%s124 + $0x38] sm:$0xff]
    %v131 = vld [vmem:[%s124 + $0x48] sm:$0xff]
    %v132 = vld [vmem:[%s124 + $0x50] sm:$0xff]
    %v133 = vld [vmem:[%s124 + $0x60] sm:$0xff]
    %v134 = vld [vmem:[%s124 + $0x68] sm:$0xff]
    %v135 = vld [vmem:[%s124 + $0x78] sm:$0xff]
    %v136 = vld [vmem:[%s124 + $0x80] sm:$0xff]
    %v137 = vld [vmem:[%s124 + $0x90] sm:$0xff]
    %v138 = vld [vmem:[%s124 + $0x98] sm:$0xff]
    %v139 = vld [vmem:[%s124 + $0xa8] sm:$0xff]
    %v140 = vld [vmem:[%s124 + $0xb0] sm:$0xff]
    %v141 = vld [vmem:[%s124 + $0xc0] sm:$0xff]
    %v142 = vld [vmem:[%s124 + $0xc8] sm:$0xff]
    %v143 = vld [vmem:[%s124 + $0xd8] sm:$0xff]
    %v144 = vld [vmem:[%s124 + $0xe0] sm:$0xff]
    %v145 = vld [vmem:[%s124 + $0xf0] sm:$0xff]
    %v146 = vld [vmem:[%s124 + $0xf8] sm:$0xff]
    %v147 = vld [vmem:[%s124 + $0x108] sm:$0xff]
    %v148 = vld [vmem:[%s124 + $0x110] sm:$0xff]
    %v149 = vld [vmem:[%s124 + $0x120] sm:$0xff]
    %v150 = vld [vmem:[%s124 + $0x128] sm:$0xff]
    %v151 = vld [vmem:[%s124 + $0x138] sm:$0xff]
    %v152 = vld [vmem:[%s124 + $0x140] sm:$0xff]
    %v153 = vld [vmem:[%s124 + $0x150] sm:$0xff]
    %v154 = vld [vmem:[%s124 + $0x158] sm:$0xff]
    %v155 = vld [vmem:[%s124 + $0x168] sm:$0xff]
    %v156 = vld [vmem:[%s124 + $0x170] sm:$0xff]
    %v157 = vld [vmem:[%s124 + $0x1] sm:$0xff]
    %v158 = vld [vmem:[%s124 + $0x9] sm:$0xff]
    %v159 = vld [vmem:[%s124 + $0x19] sm:$0xff]
    %v160 = vld [vmem:[%s124 + $0x21] sm:$0xff]
    %v161 = vld [vmem:[%s124 + $0x31] sm:$0xff]
    %v162 = vld [vmem:[%s124 + $0x39] sm:$0xff]
    %v163 = vld [vmem:[%s124 + $0x49] sm:$0xff]
    %v164 = vld [vmem:[%s124 + $0x51] sm:$0xff]
    %v165 = vld [vmem:[%s124 + $0x61] sm:$0xff]
    %v166 = vld [vmem:[%s124 + $0x69] sm:$0xff]
    %v167 = vld [vmem:[%s124 + $0x79] sm:$0xff]
    %v168 = vld [vmem:[%s124 + $0x81] sm:$0xff]
    %v169 = vld [vmem:[%s124 + $0x91] sm:$0xff]
    %v170 = vld [vmem:[%s124 + $0x99] sm:$0xff]
    %v171 = vld [vmem:[%s124 + $0xa9] sm:$0xff]
    %v172 = vld [vmem:[%s124 + $0xb1] sm:$0xff]
    %v173 = vld [vmem:[%s124 + $0xc1] sm:$0xff]
    %v174 = vld [vmem:[%s124 + $0xc9] sm:$0xff]
    %v175 = vld [vmem:[%s124 + $0xd9] sm:$0xff]
    %v176 = vld [vmem:[%s124 + $0xe1] sm:$0xff]
    %v177 = vld [vmem:[%s124 + $0xf1] sm:$0xff]
    %v178 = vld [vmem:[%s124 + $0xf9] sm:$0xff]
    %v179 = vld [vmem:[%s124 + $0x109] sm:$0xff]
    %v180 = vld [vmem:[%s124 + $0x111] sm:$0xff]
    %v181 = vld [vmem:[%s124 + $0x121] sm:$0xff]
    %v182 = vld [vmem:[%s124 + $0x129] sm:$0xff]
    %v183 = vld [vmem:[%s124 + $0x139] sm:$0xff]
    %v184 = vld [vmem:[%s124 + $0x141] sm:$0xff]
    %v185 = vld [vmem:[%s124 + $0x151] sm:$0xff]
    %v186 = vld [vmem:[%s124 + $0x159] sm:$0xff]
    %v187 = vld [vmem:[%s124 + $0x169] sm:$0xff]
    %v188 = vld [vmem:[%s124 + $0x171] sm:$0xff]
    %v189 = vld [vmem:[%s124 + $0x2] sm:$0xff]
    %v190 = vld [vmem:[%s124 + $0xa] sm:$0xff]
    %v191 = vld [vmem:[%s124 + $0x1a] sm:$0xff]
    %v192 = vld [vmem:[%s124 + $0x22] sm:$0xff]
    %v193 = vld [vmem:[%s124 + $0x32] sm:$0xff]
    %v194 = vld [vmem:[%s124 + $0x3a] sm:$0xff]
    %v195 = vld [vmem:[%s124 + $0x4a] sm:$0xff]
    %v196 = vld [vmem:[%s124 + $0x52] sm:$0xff]
    %v197 = vld [vmem:[%s124 + $0x62] sm:$0xff]
    %v198 = vld [vmem:[%s124 + $0x6a] sm:$0xff]
    %v199 = vld [vmem:[%s124 + $0x7a] sm:$0xff]
    %v200 = vld [vmem:[%s124 + $0x82] sm:$0xff]
    %v201 = vld [vmem:[%s124 + $0x92] sm:$0xff]
    %v202 = vld [vmem:[%s124 + $0x9a] sm:$0xff]
    %v203 = vld [vmem:[%s124 + $0xaa] sm:$0xff]
    %v204 = vld [vmem:[%s124 + $0xb2] sm:$0xff]
    %v205 = vld [vmem:[%s124 + $0xc2] sm:$0xff]
    %v206 = vld [vmem:[%s124 + $0xca] sm:$0xff]
    %v207 = vld [vmem:[%s124 + $0xda] sm:$0xff]
    %v208 = vld [vmem:[%s124 + $0xe2] sm:$0xff]
    %v209 = vld [vmem:[%s124 + $0xf2] sm:$0xff]
    %v210 = vld [vmem:[%s124 + $0xfa] sm:$0xff]
    %v211 = vld [vmem:[%s124 + $0x10a] sm:$0xff]
    %v212 = vld [vmem:[%s124 + $0x112] sm:$0xff]
    %v213 = vld [vmem:[%s124 + $0x122] sm:$0xff]
    %v214 = vld [vmem:[%s124 + $0x12a] sm:$0xff]
    %v215 = vld [vmem:[%s124 + $0x13a] sm:$0xff]
    %v216 = vld [vmem:[%s124 + $0x142] sm:$0xff]
    %v217 = vld [vmem:[%s124 + $0x152] sm:$0xff]
    %v218 = vld [vmem:[%s124 + $0x15a] sm:$0xff]
    %v219 = vld [vmem:[%s124 + $0x16a] sm:$0xff]
    %v220 = vld [vmem:[%s124 + $0x172] sm:$0xff]
    %s221 = scalar_lea.vmem %s0, 48
    %v222 = vld [vmem:[%s221] sm:$0xff]
    %v223 = vld [vmem:[%s221 + $0x8] sm:$0xff]
    %v224 = vld [vmem:[%s221 + $0x18] sm:$0xff]
    %v225 = vld [vmem:[%s221 + $0x20] sm:$0xff]
    %v226 = vld [vmem:[%s221 + $0x30] sm:$0xff]
    %v227 = vld [vmem:[%s221 + $0x38] sm:$0xff]
    %v228 = vld [vmem:[%s221 + $0x48] sm:$0xff]
    %v229 = vld [vmem:[%s221 + $0x50] sm:$0xff]
    %v230 = vld [vmem:[%s221 + $0x60] sm:$0xff]
    %v231 = vld [vmem:[%s221 + $0x68] sm:$0xff]
    %v232 = vld [vmem:[%s221 + $0x78] sm:$0xff]
    %v233 = vld [vmem:[%s221 + $0x80] sm:$0xff]
    %v234 = vld [vmem:[%s221 + $0x90] sm:$0xff]
    %v235 = vld [vmem:[%s221 + $0x98] sm:$0xff]
    %v236 = vld [vmem:[%s221 + $0xa8] sm:$0xff]
    %v237 = vld [vmem:[%s221 + $0xb0] sm:$0xff]
    %v238 = vld [vmem:[%s221 + $0xc0] sm:$0xff]
    %v239 = vld [vmem:[%s221 + $0xc8] sm:$0xff]
    %v240 = vld [vmem:[%s221 + $0xd8] sm:$0xff]
    %v241 = vld [vmem:[%s221 + $0xe0] sm:$0xff]
    %v242 = vld [vmem:[%s221 + $0xf0] sm:$0xff]
    %v243 = vld [vmem:[%s221 + $0xf8] sm:$0xff]
    %v244 = vld [vmem:[%s221 + $0x108] sm:$0xff]
    %v245 = vld [vmem:[%s221 + $0x110] sm:$0xff]
    %v246 = vld [vmem:[%s221 + $0x120] sm:$0xff]
    %v247 = vld [vmem:[%s221 + $0x128] sm:$0xff]
    %v248 = vld [vmem:[%s221 + $0x138] sm:$0xff]
    %v249 = vld [vmem:[%s221 + $0x140] sm:$0xff]
    %v250 = vld [vmem:[%s221 + $0x150] sm:$0xff]
    %v251 = vld [vmem:[%s221 + $0x158] sm:$0xff]
    %v252 = vld [vmem:[%s221 + $0x168] sm:$0xff]
    %v253 = vld [vmem:[%s221 + $0x170] sm:$0xff]
    %v254 = vld [vmem:[%s221 + $0x1] sm:$0xff]
    %v255 = vld [vmem:[%s221 + $0x9] sm:$0xff]
    %v256 = vld [vmem:[%s221 + $0x19] sm:$0xff]
    %v257 = vld [vmem:[%s221 + $0x21] sm:$0xff]
    %v258 = vld [vmem:[%s221 + $0x31] sm:$0xff]
    %v259 = vld [vmem:[%s221 + $0x39] sm:$0xff]
    %v260 = vld [vmem:[%s221 + $0x49] sm:$0xff]
    %v261 = vld [vmem:[%s221 + $0x51] sm:$0xff]
    %v262 = vld [vmem:[%s221 + $0x61] sm:$0xff]
    %v263 = vld [vmem:[%s221 + $0x69] sm:$0xff]
    %v264 = vld [vmem:[%s221 + $0x79] sm:$0xff]
    %v265 = vld [vmem:[%s221 + $0x81] sm:$0xff]
    %v266 = vld [vmem:[%s221 + $0x91] sm:$0xff]
    %v267 = vld [vmem:[%s221 + $0x99] sm:$0xff]
    %v268 = vld [vmem:[%s221 + $0xa9] sm:$0xff]
    %v269 = vld [vmem:[%s221 + $0xb1] sm:$0xff]
    %v270 = vld [vmem:[%s221 + $0xc1] sm:$0xff]
    %v271 = vld [vmem:[%s221 + $0xc9] sm:$0xff]
    %v272 = vld [vmem:[%s221 + $0xd9] sm:$0xff]
    %v273 = vld [vmem:[%s221 + $0xe1] sm:$0xff]
    %v274 = vld [vmem:[%s221 + $0xf1] sm:$0xff]
    %v275 = vld [vmem:[%s221 + $0xf9] sm:$0xff]
    %v276 = vld [vmem:[%s221 + $0x109] sm:$0xff]
    %v277 = vld [vmem:[%s221 + $0x111] sm:$0xff]
    %v278 = vld [vmem:[%s221 + $0x121] sm:$0xff]
    %v279 = vld [vmem:[%s221 + $0x129] sm:$0xff]
    %v280 = vld [vmem:[%s221 + $0x139] sm:$0xff]
    %v281 = vld [vmem:[%s221 + $0x141] sm:$0xff]
    %v282 = vld [vmem:[%s221 + $0x151] sm:$0xff]
    %v283 = vld [vmem:[%s221 + $0x159] sm:$0xff]
    %v284 = vld [vmem:[%s221 + $0x169] sm:$0xff]
    %v285 = vld [vmem:[%s221 + $0x171] sm:$0xff]
    %v286 = vld [vmem:[%s221 + $0x2] sm:$0xff]
    %v287 = vld [vmem:[%s221 + $0xa] sm:$0xff]
    %v288 = vld [vmem:[%s221 + $0x1a] sm:$0xff]
    %v289 = vld [vmem:[%s221 + $0x22] sm:$0xff]
    %v290 = vld [vmem:[%s221 + $0x32] sm:$0xff]
    %v291 = vld [vmem:[%s221 + $0x3a] sm:$0xff]
    %v292 = vld [vmem:[%s221 + $0x4a] sm:$0xff]
    %v293 = vld [vmem:[%s221 + $0x52] sm:$0xff]
    %v294 = vld [vmem:[%s221 + $0x62] sm:$0xff]
    %v295 = vld [vmem:[%s221 + $0x6a] sm:$0xff]
    %v296 = vld [vmem:[%s221 + $0x7a] sm:$0xff]
    %v297 = vld [vmem:[%s221 + $0x82] sm:$0xff]
    %v298 = vld [vmem:[%s221 + $0x92] sm:$0xff]
    %v299 = vld [vmem:[%s221 + $0x9a] sm:$0xff]
    %v300 = vld [vmem:[%s221 + $0xaa] sm:$0xff]
    %v301 = vld [vmem:[%s221 + $0xb2] sm:$0xff]
    %v302 = vld [vmem:[%s221 + $0xc2] sm:$0xff]
    %v303 = vld [vmem:[%s221 + $0xca] sm:$0xff]
    %v304 = vld [vmem:[%s221 + $0xda] sm:$0xff]
    %v305 = vld [vmem:[%s221 + $0xe2] sm:$0xff]
    %v306 = vld [vmem:[%s221 + $0xf2] sm:$0xff]
    %v307 = vld [vmem:[%s221 + $0xfa] sm:$0xff]
    %v308 = vld [vmem:[%s221 + $0x10a] sm:$0xff]
    %v309 = vld [vmem:[%s221 + $0x112] sm:$0xff]
    %v310 = vld [vmem:[%s221 + $0x122] sm:$0xff]
    %v311 = vld [vmem:[%s221 + $0x12a] sm:$0xff]
    %v312 = vld [vmem:[%s221 + $0x13a] sm:$0xff]
    %v313 = vld [vmem:[%s221 + $0x142] sm:$0xff]
    %v314 = vld [vmem:[%s221 + $0x152] sm:$0xff]
    %v315 = vld [vmem:[%s221 + $0x15a] sm:$0xff]
    %v316 = vld [vmem:[%s221 + $0x16a] sm:$0xff]
    %v317 = vld [vmem:[%s221 + $0x172] sm:$0xff]
    %350 = vrot.lane.b32.xlu0 %v60, 4
    %v351 = vpop.permute.xlu0 %350
    %352 = vrot.lane.b32.xlu0 %v61, 4
    %v353 = vpop.permute.xlu0 %352
    %354 = vrot.lane.b32.xlu0 %v62, 4
    %v355 = vpop.permute.xlu0 %354
    %356 = vrot.lane.b32.xlu0 %v63, 4
    %v357 = vpop.permute.xlu0 %356
    %358 = vrot.lane.b32.xlu0 %v64, 4
    %v359 = vpop.permute.xlu0 %358
    %360 = vrot.lane.b32.xlu0 %v65, 4
    %v361 = vpop.permute.xlu0 %360
    %362 = vrot.lane.b32.xlu0 %v66, 4
    %v363 = vpop.permute.xlu0 %362
    %364 = vrot.lane.b32.xlu0 %v67, 4
    %v365 = vpop.permute.xlu0 %364
    %366 = vrot.lane.b32.xlu0 %v68, 4
    %v367 = vpop.permute.xlu0 %366
    %368 = vrot.lane.b32.xlu0 %v69, 4
    %v369 = vpop.permute.xlu0 %368
    %370 = vrot.lane.b32.xlu0 %v70, 4
    %v371 = vpop.permute.xlu0 %370
    %372 = vrot.lane.b32.xlu0 %v71, 4
    %v373 = vpop.permute.xlu0 %372
    %374 = vrot.lane.b32.xlu0 %v72, 4
    %v375 = vpop.permute.xlu0 %374
    %376 = vrot.lane.b32.xlu0 %v73, 4
    %v377 = vpop.permute.xlu0 %376
    %378 = vrot.lane.b32.xlu0 %v74, 4
    %v379 = vpop.permute.xlu0 %378
    %380 = vrot.lane.b32.xlu0 %v75, 4
    %v381 = vpop.permute.xlu0 %380
    %382 = vrot.lane.b32.xlu0 %v76, 4
    %v383 = vpop.permute.xlu0 %382
    %384 = vrot.lane.b32.xlu0 %v77, 4
    %v385 = vpop.permute.xlu0 %384
    %386 = vrot.lane.b32.xlu0 %v78, 4
    %v387 = vpop.permute.xlu0 %386
    %388 = vrot.lane.b32.xlu0 %v79, 4
    %v389 = vpop.permute.xlu0 %388
    %390 = vrot.lane.b32.xlu0 %v80, 4
    %v391 = vpop.permute.xlu0 %390
    %392 = vrot.lane.b32.xlu0 %v81, 4
    %v393 = vpop.permute.xlu0 %392
    %394 = vrot.lane.b32.xlu0 %v82, 4
    %v395 = vpop.permute.xlu0 %394
    %396 = vrot.lane.b32.xlu0 %v83, 4
    %v397 = vpop.permute.xlu0 %396
    %398 = vrot.lane.b32.xlu0 %v84, 4
    %v399 = vpop.permute.xlu0 %398
    %400 = vrot.lane.b32.xlu0 %v85, 4
    %v401 = vpop.permute.xlu0 %400
    %402 = vrot.lane.b32.xlu0 %v86, 4
    %v403 = vpop.permute.xlu0 %402
    %404 = vrot.lane.b32.xlu0 %v87, 4
    %v405 = vpop.permute.xlu0 %404
    %406 = vrot.lane.b32.xlu0 %v88, 4
    %v407 = vpop.permute.xlu0 %406
    %408 = vrot.lane.b32.xlu0 %v89, 4
    %v409 = vpop.permute.xlu0 %408
    %410 = vrot.lane.b32.xlu0 %v90, 4
    %v411 = vpop.permute.xlu0 %410
    %412 = vrot.lane.b32.xlu0 %v91, 4
    %v413 = vpop.permute.xlu0 %412
    %478 = vrot.lane.b32.xlu0 %v92, 8
    %v479 = vpop.permute.xlu0 %478
    %480 = vrot.lane.b32.xlu0 %v93, 8
    %v481 = vpop.permute.xlu0 %480
    %482 = vrot.lane.b32.xlu0 %v94, 8
    %v483 = vpop.permute.xlu0 %482
    %484 = vrot.lane.b32.xlu0 %v95, 8
    %v485 = vpop.permute.xlu0 %484
    %486 = vrot.lane.b32.xlu0 %v96, 8
    %v487 = vpop.permute.xlu0 %486
    %488 = vrot.lane.b32.xlu0 %v97, 8
    %v489 = vpop.permute.xlu0 %488
    %490 = vrot.lane.b32.xlu0 %v98, 8
    %v491 = vpop.permute.xlu0 %490
    %492 = vrot.lane.b32.xlu0 %v99, 8
    %v493 = vpop.permute.xlu0 %492
    %494 = vrot.lane.b32.xlu0 %v100, 8
    %v495 = vpop.permute.xlu0 %494
    %496 = vrot.lane.b32.xlu0 %v101, 8
    %v497 = vpop.permute.xlu0 %496
    %498 = vrot.lane.b32.xlu0 %v102, 8
    %v499 = vpop.permute.xlu0 %498
    %500 = vrot.lane.b32.xlu0 %v103, 8
    %v501 = vpop.permute.xlu0 %500
    %502 = vrot.lane.b32.xlu0 %v104, 8
    %v503 = vpop.permute.xlu0 %502
    %504 = vrot.lane.b32.xlu0 %v105, 8
    %v505 = vpop.permute.xlu0 %504
    %506 = vrot.lane.b32.xlu0 %v106, 8
    %v507 = vpop.permute.xlu0 %506
    %508 = vrot.lane.b32.xlu0 %v107, 8
    %v509 = vpop.permute.xlu0 %508
    %510 = vrot.lane.b32.xlu0 %v108, 8
    %v511 = vpop.permute.xlu0 %510
    %512 = vrot.lane.b32.xlu0 %v109, 8
    %v513 = vpop.permute.xlu0 %512
    %514 = vrot.lane.b32.xlu0 %v110, 8
    %v515 = vpop.permute.xlu0 %514
    %516 = vrot.lane.b32.xlu0 %v111, 8
    %v517 = vpop.permute.xlu0 %516
    %518 = vrot.lane.b32.xlu0 %v112, 8
    %v519 = vpop.permute.xlu0 %518
    %520 = vrot.lane.b32.xlu0 %v113, 8
    %v521 = vpop.permute.xlu0 %520
    %522 = vrot.lane.b32.xlu0 %v114, 8
    %v523 = vpop.permute.xlu0 %522
    %524 = vrot.lane.b32.xlu0 %v115, 8
    %v525 = vpop.permute.xlu0 %524
    %526 = vrot.lane.b32.xlu0 %v116, 8
    %v527 = vpop.permute.xlu0 %526
    %528 = vrot.lane.b32.xlu0 %v117, 8
    %v529 = vpop.permute.xlu0 %528
    %530 = vrot.lane.b32.xlu0 %v118, 8
    %v531 = vpop.permute.xlu0 %530
    %532 = vrot.lane.b32.xlu0 %v119, 8
    %v533 = vpop.permute.xlu0 %532
    %534 = vrot.lane.b32.xlu0 %v120, 8
    %v535 = vpop.permute.xlu0 %534
    %536 = vrot.lane.b32.xlu0 %v121, 8
    %v537 = vpop.permute.xlu0 %536
    %538 = vrot.lane.b32.xlu0 %v122, 8
    %v539 = vpop.permute.xlu0 %538
    %540 = vrot.lane.b32.xlu0 %v123, 8
    %v541 = vpop.permute.xlu0 %540
    %606 = vrot.lane.b32.xlu0 %v125, 12
    %v607 = vpop.permute.xlu0 %606
    %608 = vrot.lane.b32.xlu0 %v126, 12
    %v609 = vpop.permute.xlu0 %608
    %610 = vrot.lane.b32.xlu0 %v127, 12
    %v611 = vpop.permute.xlu0 %610
    %612 = vrot.lane.b32.xlu0 %v128, 12
    %v613 = vpop.permute.xlu0 %612
    %614 = vrot.lane.b32.xlu0 %v129, 12
    %v615 = vpop.permute.xlu0 %614
    %616 = vrot.lane.b32.xlu0 %v130, 12
    %v617 = vpop.permute.xlu0 %616
    %618 = vrot.lane.b32.xlu0 %v131, 12
    %v619 = vpop.permute.xlu0 %618
    %620 = vrot.lane.b32.xlu0 %v132, 12
    %v621 = vpop.permute.xlu0 %620
    %622 = vrot.lane.b32.xlu0 %v133, 12
    %v623 = vpop.permute.xlu0 %622
    %624 = vrot.lane.b32.xlu0 %v134, 12
    %v625 = vpop.permute.xlu0 %624
    %626 = vrot.lane.b32.xlu0 %v135, 12
    %v627 = vpop.permute.xlu0 %626
    %628 = vrot.lane.b32.xlu0 %v136, 12
    %v629 = vpop.permute.xlu0 %628
    %630 = vrot.lane.b32.xlu0 %v137, 12
    %v631 = vpop.permute.xlu0 %630
    %632 = vrot.lane.b32.xlu0 %v138, 12
    %v633 = vpop.permute.xlu0 %632
    %634 = vrot.lane.b32.xlu0 %v139, 12
    %v635 = vpop.permute.xlu0 %634
    %636 = vrot.lane.b32.xlu0 %v140, 12
    %v637 = vpop.permute.xlu0 %636
    %638 = vrot.lane.b32.xlu0 %v141, 12
    %v639 = vpop.permute.xlu0 %638
    %640 = vrot.lane.b32.xlu0 %v142, 12
    %v641 = vpop.permute.xlu0 %640
    %642 = vrot.lane.b32.xlu0 %v143, 12
    %v643 = vpop.permute.xlu0 %642
    %644 = vrot.lane.b32.xlu0 %v144, 12
    %v645 = vpop.permute.xlu0 %644
    %646 = vrot.lane.b32.xlu0 %v145, 12
    %v647 = vpop.permute.xlu0 %646
    %648 = vrot.lane.b32.xlu0 %v146, 12
    %v649 = vpop.permute.xlu0 %648
    %650 = vrot.lane.b32.xlu0 %v147, 12
    %v651 = vpop.permute.xlu0 %650
    %652 = vrot.lane.b32.xlu0 %v148, 12
    %v653 = vpop.permute.xlu0 %652
    %654 = vrot.lane.b32.xlu0 %v149, 12
    %v655 = vpop.permute.xlu0 %654
    %656 = vrot.lane.b32.xlu0 %v150, 12
    %v657 = vpop.permute.xlu0 %656
    %658 = vrot.lane.b32.xlu0 %v151, 12
    %v659 = vpop.permute.xlu0 %658
    %660 = vrot.lane.b32.xlu0 %v152, 12
    %v661 = vpop.permute.xlu0 %660
    %662 = vrot.lane.b32.xlu0 %v153, 12
    %v663 = vpop.permute.xlu0 %662
    %664 = vrot.lane.b32.xlu0 %v154, 12
    %v665 = vpop.permute.xlu0 %664
    %666 = vrot.lane.b32.xlu0 %v155, 12
    %v667 = vpop.permute.xlu0 %666
    %668 = vrot.lane.b32.xlu0 %v156, 12
    %v669 = vpop.permute.xlu0 %668
    %734 = vrot.lane.b32.xlu0 %v157, 16
    %v735 = vpop.permute.xlu0 %734
    %736 = vrot.lane.b32.xlu0 %v158, 16
    %v737 = vpop.permute.xlu0 %736
    %738 = vrot.lane.b32.xlu0 %v159, 16
    %v739 = vpop.permute.xlu0 %738
    %740 = vrot.lane.b32.xlu0 %v160, 16
    %v741 = vpop.permute.xlu0 %740
    %742 = vrot.lane.b32.xlu0 %v161, 16
    %v743 = vpop.permute.xlu0 %742
    %744 = vrot.lane.b32.xlu0 %v162, 16
    %v745 = vpop.permute.xlu0 %744
    %746 = vrot.lane.b32.xlu0 %v163, 16
    %v747 = vpop.permute.xlu0 %746
    %748 = vrot.lane.b32.xlu0 %v164, 16
    %v749 = vpop.permute.xlu0 %748
    %750 = vrot.lane.b32.xlu0 %v165, 16
    %v751 = vpop.permute.xlu0 %750
    %752 = vrot.lane.b32.xlu0 %v166, 16
    %v753 = vpop.permute.xlu0 %752
    %754 = vrot.lane.b32.xlu0 %v167, 16
    %v755 = vpop.permute.xlu0 %754
    %756 = vrot.lane.b32.xlu0 %v168, 16
    %v757 = vpop.permute.xlu0 %756
    %758 = vrot.lane.b32.xlu0 %v169, 16
    %v759 = vpop.permute.xlu0 %758
    %760 = vrot.lane.b32.xlu0 %v170, 16
    %v761 = vpop.permute.xlu0 %760
    %762 = vrot.lane.b32.xlu0 %v171, 16
    %v763 = vpop.permute.xlu0 %762
    %764 = vrot.lane.b32.xlu0 %v172, 16
    %v765 = vpop.permute.xlu0 %764
    %766 = vrot.lane.b32.xlu0 %v173, 16
    %v767 = vpop.permute.xlu0 %766
    %768 = vrot.lane.b32.xlu0 %v174, 16
    %v769 = vpop.permute.xlu0 %768
    %770 = vrot.lane.b32.xlu0 %v175, 16
    %v771 = vpop.permute.xlu0 %770
    %772 = vrot.lane.b32.xlu0 %v176, 16
    %v773 = vpop.permute.xlu0 %772
    %774 = vrot.lane.b32.xlu0 %v177, 16
    %v775 = vpop.permute.xlu0 %774
    %776 = vrot.lane.b32.xlu0 %v178, 16
    %v777 = vpop.permute.xlu0 %776
    %778 = vrot.lane.b32.xlu0 %v179, 16
    %v779 = vpop.permute.xlu0 %778
    %780 = vrot.lane.b32.xlu0 %v180, 16
    %v781 = vpop.permute.xlu0 %780
    %782 = vrot.lane.b32.xlu0 %v181, 16
    %v783 = vpop.permute.xlu0 %782
    %784 = vrot.lane.b32.xlu0 %v182, 16
    %v785 = vpop.permute.xlu0 %784
    %786 = vrot.lane.b32.xlu0 %v183, 16
    %v787 = vpop.permute.xlu0 %786
    %788 = vrot.lane.b32.xlu0 %v184, 16
    %v789 = vpop.permute.xlu0 %788
    %790 = vrot.lane.b32.xlu0 %v185, 16
    %v791 = vpop.permute.xlu0 %790
    %792 = vrot.lane.b32.xlu0 %v186, 16
    %v793 = vpop.permute.xlu0 %792
    %794 = vrot.lane.b32.xlu0 %v187, 16
    %v795 = vpop.permute.xlu0 %794
    %796 = vrot.lane.b32.xlu0 %v188, 16
    %v797 = vpop.permute.xlu0 %796
    %862 = vrot.lane.b32.xlu0 %v189, 20
    %v863 = vpop.permute.xlu0 %862
    %864 = vrot.lane.b32.xlu0 %v190, 20
    %v865 = vpop.permute.xlu0 %864
    %866 = vrot.lane.b32.xlu0 %v191, 20
    %v867 = vpop.permute.xlu0 %866
    %868 = vrot.lane.b32.xlu0 %v192, 20
    %v869 = vpop.permute.xlu0 %868
    %870 = vrot.lane.b32.xlu0 %v193, 20
    %v871 = vpop.permute.xlu0 %870
    %872 = vrot.lane.b32.xlu0 %v194, 20
    %v873 = vpop.permute.xlu0 %872
    %874 = vrot.lane.b32.xlu0 %v195, 20
    %v875 = vpop.permute.xlu0 %874
    %876 = vrot.lane.b32.xlu0 %v196, 20
    %v877 = vpop.permute.xlu0 %876
    %878 = vrot.lane.b32.xlu0 %v197, 20
    %v879 = vpop.permute.xlu0 %878
    %880 = vrot.lane.b32.xlu0 %v198, 20
    %v881 = vpop.permute.xlu0 %880
    %882 = vrot.lane.b32.xlu0 %v199, 20
    %v883 = vpop.permute.xlu0 %882
    %884 = vrot.lane.b32.xlu0 %v200, 20
    %v885 = vpop.permute.xlu0 %884
    %886 = vrot.lane.b32.xlu0 %v201, 20
    %v887 = vpop.permute.xlu0 %886
    %888 = vrot.lane.b32.xlu0 %v202, 20
    %v889 = vpop.permute.xlu0 %888
    %890 = vrot.lane.b32.xlu0 %v203, 20
    %v891 = vpop.permute.xlu0 %890
    %892 = vrot.lane.b32.xlu0 %v204, 20
    %v893 = vpop.permute.xlu0 %892
    %894 = vrot.lane.b32.xlu0 %v205, 20
    %v895 = vpop.permute.xlu0 %894
    %896 = vrot.lane.b32.xlu0 %v206, 20
    %v897 = vpop.permute.xlu0 %896
    %898 = vrot.lane.b32.xlu0 %v207, 20
    %v899 = vpop.permute.xlu0 %898
    %900 = vrot.lane.b32.xlu0 %v208, 20
    %v901 = vpop.permute.xlu0 %900
    %902 = vrot.lane.b32.xlu0 %v209, 20
    %v903 = vpop.permute.xlu0 %902
    %904 = vrot.lane.b32.xlu0 %v210, 20
    %v905 = vpop.permute.xlu0 %904
    %906 = vrot.lane.b32.xlu0 %v211, 20
    %v907 = vpop.permute.xlu0 %906
    %908 = vrot.lane.b32.xlu0 %v212, 20
    %v909 = vpop.permute.xlu0 %908
    %910 = vrot.lane.b32.xlu0 %v213, 20
    %v911 = vpop.permute.xlu0 %910
    %912 = vrot.lane.b32.xlu0 %v214, 20
    %v913 = vpop.permute.xlu0 %912
    %914 = vrot.lane.b32.xlu0 %v215, 20
    %v915 = vpop.permute.xlu0 %914
    %916 = vrot.lane.b32.xlu0 %v216, 20
    %v917 = vpop.permute.xlu0 %916
    %918 = vrot.lane.b32.xlu0 %v217, 20
    %v919 = vpop.permute.xlu0 %918
    %920 = vrot.lane.b32.xlu0 %v218, 20
    %v921 = vpop.permute.xlu0 %920
    %922 = vrot.lane.b32.xlu0 %v219, 20
    %v923 = vpop.permute.xlu0 %922
    %924 = vrot.lane.b32.xlu0 %v220, 20
    %v925 = vpop.permute.xlu0 %924
    %990 = vrot.lane.b32.xlu0 %v222, 24
    %v991 = vpop.permute.xlu0 %990
    %992 = vrot.lane.b32.xlu0 %v223, 24
    %v993 = vpop.permute.xlu0 %992
    %994 = vrot.lane.b32.xlu0 %v224, 24
    %v995 = vpop.permute.xlu0 %994
    %996 = vrot.lane.b32.xlu0 %v225, 24
    %v997 = vpop.permute.xlu0 %996
    %998 = vrot.lane.b32.xlu0 %v226, 24
    %v999 = vpop.permute.xlu0 %998
    %1000 = vrot.lane.b32.xlu0 %v227, 24
    %v1001 = vpop.permute.xlu0 %1000
    %1002 = vrot.lane.b32.xlu0 %v228, 24
    %v1003 = vpop.permute.xlu0 %1002
    %1004 = vrot.lane.b32.xlu0 %v229, 24
    %v1005 = vpop.permute.xlu0 %1004
    %1006 = vrot.lane.b32.xlu0 %v230, 24
    %v1007 = vpop.permute.xlu0 %1006
    %1008 = vrot.lane.b32.xlu0 %v231, 24
    %v1009 = vpop.permute.xlu0 %1008
    %1010 = vrot.lane.b32.xlu0 %v232, 24
    %v1011 = vpop.permute.xlu0 %1010
    %1012 = vrot.lane.b32.xlu0 %v233, 24
    %v1013 = vpop.permute.xlu0 %1012
    %1014 = vrot.lane.b32.xlu0 %v234, 24
    %v1015 = vpop.permute.xlu0 %1014
    %1016 = vrot.lane.b32.xlu0 %v235, 24
    %v1017 = vpop.permute.xlu0 %1016
    %1018 = vrot.lane.b32.xlu0 %v236, 24
    %v1019 = vpop.permute.xlu0 %1018
    %1020 = vrot.lane.b32.xlu0 %v237, 24
    %v1021 = vpop.permute.xlu0 %1020
    %1022 = vrot.lane.b32.xlu0 %v238, 24
    %v1023 = vpop.permute.xlu0 %1022
    %1024 = vrot.lane.b32.xlu0 %v239, 24
    %v1025 = vpop.permute.xlu0 %1024
    %1026 = vrot.lane.b32.xlu0 %v240, 24
    %v1027 = vpop.permute.xlu0 %1026
    %1028 = vrot.lane.b32.xlu0 %v241, 24
    %v1029 = vpop.permute.xlu0 %1028
    %1030 = vrot.lane.b32.xlu0 %v242, 24
    %v1031 = vpop.permute.xlu0 %1030
    %1032 = vrot.lane.b32.xlu0 %v243, 24
    %v1033 = vpop.permute.xlu0 %1032
    %1034 = vrot.lane.b32.xlu0 %v244, 24
    %v1035 = vpop.permute.xlu0 %1034
    %1036 = vrot.lane.b32.xlu0 %v245, 24
    %v1037 = vpop.permute.xlu0 %1036
    %1038 = vrot.lane.b32.xlu0 %v246, 24
    %v1039 = vpop.permute.xlu0 %1038
    %1040 = vrot.lane.b32.xlu0 %v247, 24
    %v1041 = vpop.permute.xlu0 %1040
    %1042 = vrot.lane.b32.xlu0 %v248, 24
    %v1043 = vpop.permute.xlu0 %1042
    %1044 = vrot.lane.b32.xlu0 %v249, 24
    %v1045 = vpop.permute.xlu0 %1044
    %1046 = vrot.lane.b32.xlu0 %v250, 24
    %v1047 = vpop.permute.xlu0 %1046
    %1048 = vrot.lane.b32.xlu0 %v251, 24
    %v1049 = vpop.permute.xlu0 %1048
    %1050 = vrot.lane.b32.xlu0 %v252, 24
    %v1051 = vpop.permute.xlu0 %1050
    %1052 = vrot.lane.b32.xlu0 %v253, 24
    %v1053 = vpop.permute.xlu0 %1052
    %1118 = vrot.lane.b32.xlu0 %v254, 28
    %v1119 = vpop.permute.xlu0 %1118
    %1120 = vrot.lane.b32.xlu0 %v255, 28
    %v1121 = vpop.permute.xlu0 %1120
    %1122 = vrot.lane.b32.xlu0 %v256, 28
    %v1123 = vpop.permute.xlu0 %1122
    %1124 = vrot.lane.b32.xlu0 %v257, 28
    %v1125 = vpop.permute.xlu0 %1124
    %1126 = vrot.lane.b32.xlu0 %v258, 28
    %v1127 = vpop.permute.xlu0 %1126
    %1128 = vrot.lane.b32.xlu0 %v259, 28
    %v1129 = vpop.permute.xlu0 %1128
    %1130 = vrot.lane.b32.xlu0 %v260, 28
    %v1131 = vpop.permute.xlu0 %1130
    %1132 = vrot.lane.b32.xlu0 %v261, 28
    %v1133 = vpop.permute.xlu0 %1132
    %1134 = vrot.lane.b32.xlu0 %v262, 28
    %v1135 = vpop.permute.xlu0 %1134
    %1136 = vrot.lane.b32.xlu0 %v263, 28
    %v1137 = vpop.permute.xlu0 %1136
    %1138 = vrot.lane.b32.xlu0 %v264, 28
    %v1139 = vpop.permute.xlu0 %1138
    %1140 = vrot.lane.b32.xlu0 %v265, 28
    %v1141 = vpop.permute.xlu0 %1140
    %1142 = vrot.lane.b32.xlu0 %v266, 28
    %v1143 = vpop.permute.xlu0 %1142
    %1144 = vrot.lane.b32.xlu0 %v267, 28
    %v1145 = vpop.permute.xlu0 %1144
    %1146 = vrot.lane.b32.xlu0 %v268, 28
    %v1147 = vpop.permute.xlu0 %1146
    %1148 = vrot.lane.b32.xlu0 %v269, 28
    %v1149 = vpop.permute.xlu0 %1148
    %1150 = vrot.lane.b32.xlu0 %v270, 28
    %v1151 = vpop.permute.xlu0 %1150
    %1152 = vrot.lane.b32.xlu0 %v271, 28
    %v1153 = vpop.permute.xlu0 %1152
    %1154 = vrot.lane.b32.xlu0 %v272, 28
    %v1155 = vpop.permute.xlu0 %1154
    %1156 = vrot.lane.b32.xlu0 %v273, 28
    %v1157 = vpop.permute.xlu0 %1156
    %1158 = vrot.lane.b32.xlu0 %v274, 28
    %v1159 = vpop.permute.xlu0 %1158
    %1160 = vrot.lane.b32.xlu0 %v275, 28
    %v1161 = vpop.permute.xlu0 %1160
    %1162 = vrot.lane.b32.xlu0 %v276, 28
    %v1163 = vpop.permute.xlu0 %1162
    %1164 = vrot.lane.b32.xlu0 %v277, 28
    %v1165 = vpop.permute.xlu0 %1164
    %1166 = vrot.lane.b32.xlu0 %v278, 28
    %v1167 = vpop.permute.xlu0 %1166
    %1168 = vrot.lane.b32.xlu0 %v279, 28
    %v1169 = vpop.permute.xlu0 %1168
    %1170 = vrot.lane.b32.xlu0 %v280, 28
    %v1171 = vpop.permute.xlu0 %1170
    %1172 = vrot.lane.b32.xlu0 %v281, 28
    %v1173 = vpop.permute.xlu0 %1172
    %1174 = vrot.lane.b32.xlu0 %v282, 28
    %v1175 = vpop.permute.xlu0 %1174
    %1176 = vrot.lane.b32.xlu0 %v283, 28
    %v1177 = vpop.permute.xlu0 %1176
    %1178 = vrot.lane.b32.xlu0 %v284, 28
    %v1179 = vpop.permute.xlu0 %1178
    %1180 = vrot.lane.b32.xlu0 %v285, 28
    %v1181 = vpop.permute.xlu0 %1180
    %1246 = vrot.lane.b32.xlu0 %v286, 32
    %v1247 = vpop.permute.xlu0 %1246
    %1248 = vrot.lane.b32.xlu0 %v287, 32
    %v1249 = vpop.permute.xlu0 %1248
    %1250 = vrot.lane.b32.xlu0 %v288, 32
    %v1251 = vpop.permute.xlu0 %1250
    %1252 = vrot.lane.b32.xlu0 %v289, 32
    %v1253 = vpop.permute.xlu0 %1252
    %1254 = vrot.lane.b32.xlu0 %v290, 32
    %v1255 = vpop.permute.xlu0 %1254
    %1256 = vrot.lane.b32.xlu0 %v291, 32
    %v1257 = vpop.permute.xlu0 %1256
    %1258 = vrot.lane.b32.xlu0 %v292, 32
    %v1259 = vpop.permute.xlu0 %1258
    %1260 = vrot.lane.b32.xlu0 %v293, 32
    %v1261 = vpop.permute.xlu0 %1260
    %1262 = vrot.lane.b32.xlu0 %v294, 32
    %v1263 = vpop.permute.xlu0 %1262
    %1264 = vrot.lane.b32.xlu0 %v295, 32
    %v1265 = vpop.permute.xlu0 %1264
    %1266 = vrot.lane.b32.xlu0 %v296, 32
    %v1267 = vpop.permute.xlu0 %1266
    %1268 = vrot.lane.b32.xlu0 %v297, 32
    %v1269 = vpop.permute.xlu0 %1268
    %1270 = vrot.lane.b32.xlu0 %v298, 32
    %v1271 = vpop.permute.xlu0 %1270
    %1272 = vrot.lane.b32.xlu0 %v299, 32
    %v1273 = vpop.permute.xlu0 %1272
    %1274 = vrot.lane.b32.xlu0 %v300, 32
    %v1275 = vpop.permute.xlu0 %1274
    %1276 = vrot.lane.b32.xlu0 %v301, 32
    %v1277 = vpop.permute.xlu0 %1276
    %1278 = vrot.lane.b32.xlu0 %v302, 32
    %v1279 = vpop.permute.xlu0 %1278
    %1280 = vrot.lane.b32.xlu0 %v303, 32
    %v1281 = vpop.permute.xlu0 %1280
    %1282 = vrot.lane.b32.xlu0 %v304, 32
    %v1283 = vpop.permute.xlu0 %1282
    %1284 = vrot.lane.b32.xlu0 %v305, 32
    %v1285 = vpop.permute.xlu0 %1284
    %1286 = vrot.lane.b32.xlu0 %v306, 32
    %v1287 = vpop.permute.xlu0 %1286
    %1288 = vrot.lane.b32.xlu0 %v307, 32
    %v1289 = vpop.permute.xlu0 %1288
    %1290 = vrot.lane.b32.xlu0 %v308, 32
    %v1291 = vpop.permute.xlu0 %1290
    %1292 = vrot.lane.b32.xlu0 %v309, 32
    %v1293 = vpop.permute.xlu0 %1292
    %1294 = vrot.lane.b32.xlu0 %v310, 32
    %v1295 = vpop.permute.xlu0 %1294
    %1296 = vrot.lane.b32.xlu0 %v311, 32
    %v1297 = vpop.permute.xlu0 %1296
    %1298 = vrot.lane.b32.xlu0 %v312, 32
    %v1299 = vpop.permute.xlu0 %1298
    %1300 = vrot.lane.b32.xlu0 %v313, 32
    %v1301 = vpop.permute.xlu0 %1300
    %1302 = vrot.lane.b32.xlu0 %v314, 32
    %v1303 = vpop.permute.xlu0 %1302
    %1304 = vrot.lane.b32.xlu0 %v315, 32
    %v1305 = vpop.permute.xlu0 %1304
    %1306 = vrot.lane.b32.xlu0 %v316, 32
    %v1307 = vpop.permute.xlu0 %1306
    %1308 = vrot.lane.b32.xlu0 %v317, 32
    %v1309 = vpop.permute.xlu0 %1308
    %vm1342 = vcmask 31744
    %v1343 = vsel %vm1342, %v28, %v351
    %v1344 = vsel %vm1342, %v29, %v353
    %v1345 = vsel %vm1342, %v30, %v355
    %v1346 = vsel %vm1342, %v31, %v357
    %v1347 = vsel %vm1342, %v32, %v359
    %v1348 = vsel %vm1342, %v33, %v361
    %v1349 = vsel %vm1342, %v34, %v363
    %v1350 = vsel %vm1342, %v35, %v365
    %v1351 = vsel %vm1342, %v36, %v367
    %v1352 = vsel %vm1342, %v37, %v369
    %v1353 = vsel %vm1342, %v38, %v371
    %v1354 = vsel %vm1342, %v39, %v373
    %v1355 = vsel %vm1342, %v40, %v375
    %v1356 = vsel %vm1342, %v41, %v377
    %v1357 = vsel %vm1342, %v42, %v379
    %v1358 = vsel %vm1342, %v43, %v381
    %v1359 = vsel %vm1342, %v44, %v383
    %v1360 = vsel %vm1342, %v45, %v385
    %v1361 = vsel %vm1342, %v46, %v387
    %v1362 = vsel %vm1342, %v47, %v389
    %v1363 = vsel %vm1342, %v48, %v391
    %v1364 = vsel %vm1342, %v49, %v393
    %v1365 = vsel %vm1342, %v50, %v395
    %v1366 = vsel %vm1342, %v51, %v397
    %v1367 = vsel %vm1342, %v52, %v399
    %v1368 = vsel %vm1342, %v53, %v401
    %v1369 = vsel %vm1342, %v54, %v403
    %v1370 = vsel %vm1342, %v55, %v405
    %v1371 = vsel %vm1342, %v56, %v407
    %v1372 = vsel %vm1342, %v57, %v409
    %v1373 = vsel %vm1342, %v58, %v411
    %v1374 = vsel %vm1342, %v59, %v413
    %vm1375 = vcmask 64512
    %v1376 = vsel %vm1375, %v1343, %v479
    %v1377 = vsel %vm1375, %v1344, %v481
    %v1378 = vsel %vm1375, %v1345, %v483
    %v1379 = vsel %vm1375, %v1346, %v485
    %v1380 = vsel %vm1375, %v1347, %v487
    %v1381 = vsel %vm1375, %v1348, %v489
    %v1382 = vsel %vm1375, %v1349, %v491
    %v1383 = vsel %vm1375, %v1350, %v493
    %v1384 = vsel %vm1375, %v1351, %v495
    %v1385 = vsel %vm1375, %v1352, %v497
    %v1386 = vsel %vm1375, %v1353, %v499
    %v1387 = vsel %vm1375, %v1354, %v501
    %v1388 = vsel %vm1375, %v1355, %v503
    %v1389 = vsel %vm1375, %v1356, %v505
    %v1390 = vsel %vm1375, %v1357, %v507
    %v1391 = vsel %vm1375, %v1358, %v509
    %v1392 = vsel %vm1375, %v1359, %v511
    %v1393 = vsel %vm1375, %v1360, %v513
    %v1394 = vsel %vm1375, %v1361, %v515
    %v1395 = vsel %vm1375, %v1362, %v517
    %v1396 = vsel %vm1375, %v1363, %v519
    %v1397 = vsel %vm1375, %v1364, %v521
    %v1398 = vsel %vm1375, %v1365, %v523
    %v1399 = vsel %vm1375, %v1366, %v525
    %v1400 = vsel %vm1375, %v1367, %v527
    %v1401 = vsel %vm1375, %v1368, %v529
    %v1402 = vsel %vm1375, %v1369, %v531
    %v1403 = vsel %vm1375, %v1370, %v533
    %v1404 = vsel %vm1375, %v1371, %v535
    %v1405 = vsel %vm1375, %v1372, %v537
    %v1406 = vsel %vm1375, %v1373, %v539
    %v1407 = vsel %vm1375, %v1374, %v541
    %vm1408 = vcmask 97280
    %v1409 = vsel %vm1408, %v1376, %v607
    %v1410 = vsel %vm1408, %v1377, %v609
    %v1411 = vsel %vm1408, %v1378, %v611
    %v1412 = vsel %vm1408, %v1379, %v613
    %v1413 = vsel %vm1408, %v1380, %v615
    %v1414 = vsel %vm1408, %v1381, %v617
    %v1415 = vsel %vm1408, %v1382, %v619
    %v1416 = vsel %vm1408, %v1383, %v621
    %v1417 = vsel %vm1408, %v1384, %v623
    %v1418 = vsel %vm1408, %v1385, %v625
    %v1419 = vsel %vm1408, %v1386, %v627
    %v1420 = vsel %vm1408, %v1387, %v629
    %v1421 = vsel %vm1408, %v1388, %v631
    %v1422 = vsel %vm1408, %v1389, %v633
    %v1423 = vsel %vm1408, %v1390, %v635
    %v1424 = vsel %vm1408, %v1391, %v637
    %v1425 = vsel %vm1408, %v1392, %v639
    %v1426 = vsel %vm1408, %v1393, %v641
    %v1427 = vsel %vm1408, %v1394, %v643
    %v1428 = vsel %vm1408, %v1395, %v645
    %v1429 = vsel %vm1408, %v1396, %v647
    %v1430 = vsel %vm1408, %v1397, %v649
    %v1431 = vsel %vm1408, %v1398, %v651
    %v1432 = vsel %vm1408, %v1399, %v653
    %v1433 = vsel %vm1408, %v1400, %v655
    %v1434 = vsel %vm1408, %v1401, %v657
    %v1435 = vsel %vm1408, %v1402, %v659
    %v1436 = vsel %vm1408, %v1403, %v661
    %v1437 = vsel %vm1408, %v1404, %v663
    %v1438 = vsel %vm1408, %v1405, %v665
    %v1439 = vsel %vm1408, %v1406, %v667
    %v1440 = vsel %vm1408, %v1407, %v669
    %vm1441 = vcmask 130048
    %v1442 = vsel %vm1441, %v1409, %v735
    %v1443 = vsel %vm1441, %v1410, %v737
    %v1444 = vsel %vm1441, %v1411, %v739
    %v1445 = vsel %vm1441, %v1412, %v741
    %v1446 = vsel %vm1441, %v1413, %v743
    %v1447 = vsel %vm1441, %v1414, %v745
    %v1448 = vsel %vm1441, %v1415, %v747
    %v1449 = vsel %vm1441, %v1416, %v749
    %v1450 = vsel %vm1441, %v1417, %v751
    %v1451 = vsel %vm1441, %v1418, %v753
    %v1452 = vsel %vm1441, %v1419, %v755
    %v1453 = vsel %vm1441, %v1420, %v757
    %v1454 = vsel %vm1441, %v1421, %v759
    %v1455 = vsel %vm1441, %v1422, %v761
    %v1456 = vsel %vm1441, %v1423, %v763
    %v1457 = vsel %vm1441, %v1424, %v765
    %v1458 = vsel %vm1441, %v1425, %v767
    %v1459 = vsel %vm1441, %v1426, %v769
    %v1460 = vsel %vm1441, %v1427, %v771
    %v1461 = vsel %vm1441, %v1428, %v773
    %v1462 = vsel %vm1441, %v1429, %v775
    %v1463 = vsel %vm1441, %v1430, %v777
    %v1464 = vsel %vm1441, %v1431, %v779
    %v1465 = vsel %vm1441, %v1432, %v781
    %v1466 = vsel %vm1441, %v1433, %v783
    %v1467 = vsel %vm1441, %v1434, %v785
    %v1468 = vsel %vm1441, %v1435, %v787
    %v1469 = vsel %vm1441, %v1436, %v789
    %v1470 = vsel %vm1441, %v1437, %v791
    %v1471 = vsel %vm1441, %v1438, %v793
    %v1472 = vsel %vm1441, %v1439, %v795
    %v1473 = vsel %vm1441, %v1440, %v797
    %vm1474 = vcmask 162816
    %v1475 = vsel %vm1474, %v1442, %v863
    %v1476 = vsel %vm1474, %v1443, %v865
    %v1477 = vsel %vm1474, %v1444, %v867
    %v1478 = vsel %vm1474, %v1445, %v869
    %v1479 = vsel %vm1474, %v1446, %v871
    %v1480 = vsel %vm1474, %v1447, %v873
    %v1481 = vsel %vm1474, %v1448, %v875
    %v1482 = vsel %vm1474, %v1449, %v877
    %v1483 = vsel %vm1474, %v1450, %v879
    %v1484 = vsel %vm1474, %v1451, %v881
    %v1485 = vsel %vm1474, %v1452, %v883
    %v1486 = vsel %vm1474, %v1453, %v885
    %v1487 = vsel %vm1474, %v1454, %v887
    %v1488 = vsel %vm1474, %v1455, %v889
    %v1489 = vsel %vm1474, %v1456, %v891
    %v1490 = vsel %vm1474, %v1457, %v893
    %v1491 = vsel %vm1474, %v1458, %v895
    %v1492 = vsel %vm1474, %v1459, %v897
    %v1493 = vsel %vm1474, %v1460, %v899
    %v1494 = vsel %vm1474, %v1461, %v901
    %v1495 = vsel %vm1474, %v1462, %v903
    %v1496 = vsel %vm1474, %v1463, %v905
    %v1497 = vsel %vm1474, %v1464, %v907
    %v1498 = vsel %vm1474, %v1465, %v909
    %v1499 = vsel %vm1474, %v1466, %v911
    %v1500 = vsel %vm1474, %v1467, %v913
    %v1501 = vsel %vm1474, %v1468, %v915
    %v1502 = vsel %vm1474, %v1469, %v917
    %v1503 = vsel %vm1474, %v1470, %v919
    %v1504 = vsel %vm1474, %v1471, %v921
    %v1505 = vsel %vm1474, %v1472, %v923
    %v1506 = vsel %vm1474, %v1473, %v925
    %vm1507 = vcmask 195584
    %v1508 = vsel %vm1507, %v1475, %v991
    %v1509 = vsel %vm1507, %v1476, %v993
    %v1510 = vsel %vm1507, %v1477, %v995
    %v1511 = vsel %vm1507, %v1478, %v997
    %v1512 = vsel %vm1507, %v1479, %v999
    %v1513 = vsel %vm1507, %v1480, %v1001
    %v1514 = vsel %vm1507, %v1481, %v1003
    %v1515 = vsel %vm1507, %v1482, %v1005
    %v1516 = vsel %vm1507, %v1483, %v1007
    %v1517 = vsel %vm1507, %v1484, %v1009
    %v1518 = vsel %vm1507, %v1485, %v1011
    %v1519 = vsel %vm1507, %v1486, %v1013
    %v1520 = vsel %vm1507, %v1487, %v1015
    %v1521 = vsel %vm1507, %v1488, %v1017
    %v1522 = vsel %vm1507, %v1489, %v1019
    %v1523 = vsel %vm1507, %v1490, %v1021
    %v1524 = vsel %vm1507, %v1491, %v1023
    %v1525 = vsel %vm1507, %v1492, %v1025
    %v1526 = vsel %vm1507, %v1493, %v1027
    %v1527 = vsel %vm1507, %v1494, %v1029
    %v1528 = vsel %vm1507, %v1495, %v1031
    %v1529 = vsel %vm1507, %v1496, %v1033
    %v1530 = vsel %vm1507, %v1497, %v1035
    %v1531 = vsel %vm1507, %v1498, %v1037
    %v1532 = vsel %vm1507, %v1499, %v1039
    %v1533 = vsel %vm1507, %v1500, %v1041
    %v1534 = vsel %vm1507, %v1501, %v1043
    %v1535 = vsel %vm1507, %v1502, %v1045
    %v1536 = vsel %vm1507, %v1503, %v1047
    %v1537 = vsel %vm1507, %v1504, %v1049
    %v1538 = vsel %vm1507, %v1505, %v1051
    %v1539 = vsel %vm1507, %v1506, %v1053
    %vm1540 = vcmask 228352
    %v1541 = vsel %vm1540, %v1508, %v1119
    %v1542 = vsel %vm1540, %v1509, %v1121
    %v1543 = vsel %vm1540, %v1510, %v1123
    %v1544 = vsel %vm1540, %v1511, %v1125
    %v1545 = vsel %vm1540, %v1512, %v1127
    %v1546 = vsel %vm1540, %v1513, %v1129
    %v1547 = vsel %vm1540, %v1514, %v1131
    %v1548 = vsel %vm1540, %v1515, %v1133
    %v1549 = vsel %vm1540, %v1516, %v1135
    %v1550 = vsel %vm1540, %v1517, %v1137
    %v1551 = vsel %vm1540, %v1518, %v1139
    %v1552 = vsel %vm1540, %v1519, %v1141
    %v1553 = vsel %vm1540, %v1520, %v1143
    %v1554 = vsel %vm1540, %v1521, %v1145
    %v1555 = vsel %vm1540, %v1522, %v1147
    %v1556 = vsel %vm1540, %v1523, %v1149
    %v1557 = vsel %vm1540, %v1524, %v1151
    %v1558 = vsel %vm1540, %v1525, %v1153
    %v1559 = vsel %vm1540, %v1526, %v1155
    %v1560 = vsel %vm1540, %v1527, %v1157
    %v1561 = vsel %vm1540, %v1528, %v1159
    %v1562 = vsel %vm1540, %v1529, %v1161
    %v1563 = vsel %vm1540, %v1530, %v1163
    %v1564 = vsel %vm1540, %v1531, %v1165
    %v1565 = vsel %vm1540, %v1532, %v1167
    %v1566 = vsel %vm1540, %v1533, %v1169
    %v1567 = vsel %vm1540, %v1534, %v1171
    %v1568 = vsel %vm1540, %v1535, %v1173
    %v1569 = vsel %vm1540, %v1536, %v1175
    %v1570 = vsel %vm1540, %v1537, %v1177
    %v1571 = vsel %vm1540, %v1538, %v1179
    %v1572 = vsel %vm1540, %v1539, %v1181
    %vm1573 = vcmask 261120
    %v1574 = vsel %vm1573, %v1541, %v1247
    %v1575 = vsel %vm1573, %v1542, %v1249
    %v1576 = vsel %vm1573, %v1543, %v1251
    %v1577 = vsel %vm1573, %v1544, %v1253
    %v1578 = vsel %vm1573, %v1545, %v1255
    %v1579 = vsel %vm1573, %v1546, %v1257
    %v1580 = vsel %vm1573, %v1547, %v1259
    %v1581 = vsel %vm1573, %v1548, %v1261
    %v1582 = vsel %vm1573, %v1549, %v1263
    %v1583 = vsel %vm1573, %v1550, %v1265
    %v1584 = vsel %vm1573, %v1551, %v1267
    %v1585 = vsel %vm1573, %v1552, %v1269
    %v1586 = vsel %vm1573, %v1553, %v1271
    %v1587 = vsel %vm1573, %v1554, %v1273
    %v1588 = vsel %vm1573, %v1555, %v1275
    %v1589 = vsel %vm1573, %v1556, %v1277
    %v1590 = vsel %vm1573, %v1557, %v1279
    %v1591 = vsel %vm1573, %v1558, %v1281
    %v1592 = vsel %vm1573, %v1559, %v1283
    %v1593 = vsel %vm1573, %v1560, %v1285
    %v1594 = vsel %vm1573, %v1561, %v1287
    %v1595 = vsel %vm1573, %v1562, %v1289
    %v1596 = vsel %vm1573, %v1563, %v1291
    %v1597 = vsel %vm1573, %v1564, %v1293
    %v1598 = vsel %vm1573, %v1565, %v1295
    %v1599 = vsel %vm1573, %v1566, %v1297
    %v1600 = vsel %vm1573, %v1567, %v1299
    %v1601 = vsel %vm1573, %v1568, %v1301
    %v1602 = vsel %vm1573, %v1569, %v1303
    %v1603 = vsel %vm1573, %v1570, %v1305
    %v1604 = vsel %vm1573, %v1571, %v1307
    %v1605 = vsel %vm1573, %v1572, %v1309
    %v1606 = vpack.c.bf16 %v1575, %v1574
    %v1607 = vpack.c.bf16 %v1577, %v1576
    %v1608 = vpack.c.bf16 %v1579, %v1578
    %v1609 = vpack.c.bf16 %v1581, %v1580
    %v1610 = vpack.c.bf16 %v1583, %v1582
    %v1611 = vpack.c.bf16 %v1585, %v1584
    %v1612 = vpack.c.bf16 %v1587, %v1586
    %v1613 = vpack.c.bf16 %v1589, %v1588
    %v1614 = vpack.c.bf16 %v1591, %v1590
    %v1615 = vpack.c.bf16 %v1593, %v1592
    %v1616 = vpack.c.bf16 %v1595, %v1594
    %v1617 = vpack.c.bf16 %v1597, %v1596
    %v1618 = vpack.c.bf16 %v1599, %v1598
    %v1619 = vpack.c.bf16 %v1601, %v1600
    %v1620 = vpack.c.bf16 %v1603, %v1602
    %v1621 = vpack.c.bf16 %v1605, %v1604
    %v1622 = vld [vmem:[%s1] sm:$0xf]
    %v1623 = vld [vmem:[%s1 + $0x4] sm:$0xf]
    %v1624 = vld [vmem:[%s1 + $0x8] sm:$0xf]
    %v1625 = vld [vmem:[%s1 + $0xc] sm:$0xf]
    %v1626 = vld [vmem:[%s1 + $0x10] sm:$0x3]
    %v1627 = vld [vmem:[%s2] sm:$0x1]
    %v1629 = vlaneseq
    %v1630 = vshrl.u32 %v1629, 7
    %v1631 = vsub.s32 0, %v1630
    %v1632 = vrot.slane %v1627, %v1631
    %v1639 = vunpack.c.l.b16 %v1622
    %v1640 = vunpack.c.l.b16 %v1623
    %v1641 = vunpack.c.l.b16 %v1624
    %v1642 = vunpack.c.l.b16 %v1625
    %v1643 = vunpack.c.l.b16 %v1626
    %v1644 = vpack.c.b16 %v1640, %v1639
    %v1645 = vpack.c.b16 %v1642, %v1641
    %v1646 = vpack.c.b16 %v1643, %v1643
    %vm1649 = vcmask 293888
    %v1651 = vsel %vm1649, %v1606, 0
    %v1654 = vsel %vm1649, %v1607, 0
    %v1657 = vsel %vm1649, %v1608, 0
    %v1660 = vsel %vm1649, %v1609, 0
    %v1663 = vsel %vm1649, %v1610, 0
    %v1666 = vsel %vm1649, %v1611, 0
    %v1669 = vsel %vm1649, %v1612, 0
    %v1672 = vsel %vm1649, %v1613, 0
    %v1675 = vsel %vm1649, %v1614, 0
    %v1678 = vsel %vm1649, %v1615, 0
    %v1681 = vsel %vm1649, %v1616, 0
    %v1684 = vsel %vm1649, %v1617, 0
    %v1687 = vsel %vm1649, %v1618, 0
    %v1690 = vsel %vm1649, %v1619, 0
    %v1693 = vsel %vm1649, %v1620, 0
    %v1696 = vsel %vm1649, %v1621, 0
    %vm1698 = vcmask 1041408
    %v1700 = vsel %vm1698, %v1646, 0
    %1702 = vmatprep.subr.bf16.mxu0 0
    %1703 = vmatpush1.bf16.msra.mxu0 %v1644
    %1704 = vmatprep.subr.bf16.mxu0 0
    %1705 = vmatpush1.bf16.msra.mxu0 %v1645
    %1706 = vmatprep.subr.bf16.mxu0 0
    %1707 = vmatpush1.bf16.msra.mxu0 %v1700
    %1708 = vmatprep.subr.bf16.mxu0 0
    %1709 = vmatpush1.bf16.msra.mxu0 0
    %1710 = vmatprep.subr.bf16.mxu0 0
    %1711 = vmatpush1.bf16.msra.mxu0 0
    %1712 = vmatprep.subr.bf16.mxu0 0
    %1713 = vmatpush1.bf16.msra.mxu0 0
    %1714 = vmatprep.subr.bf16.mxu0 0
    %1715 = vmatpush1.bf16.msra.mxu0 0
    %1716 = vmatprep.subr.bf16.mxu0 0
    %1717 = vmatpush1.bf16.msra.mxu0 0
    %1718 = vmatprep.subr.bf16.mxu0 0
    %1719 = vmatpush1.bf16.msra.mxu0 0
    %1720 = vmatprep.subr.bf16.mxu0 0
    %1721 = vmatpush1.bf16.msra.mxu0 0
    %1722 = vmatprep.subr.bf16.mxu0 0
    %1723 = vmatpush1.bf16.msra.mxu0 0
    %1724 = vmatprep.subr.bf16.mxu0 0
    %1725 = vmatpush1.bf16.msra.mxu0 0
    %1726 = vmatprep.subr.bf16.mxu0 0
    %1727 = vmatpush1.bf16.msra.mxu0 0
    %1728 = vmatprep.subr.bf16.mxu0 0
    %1729 = vmatpush1.bf16.msra.mxu0 0
    %1730 = vmatprep.subr.bf16.mxu0 0
    %1731 = vmatpush1.bf16.msra.mxu0 0
    %1732 = vmatprep.subr.bf16.mxu0 0
    %1733 = vmatpush1.bf16.msra.mxu0 0
    %1734 = vmatprep.mubr.bf16.mxu0 0
    %1735 = vmatmul.mubr.bf16.gmra.mrb[0].mxu0 %v1651
    %v1736 = vpop.f32.mrb[0].mxu0
    %v1737 = vadd.f32 %v1632, %v1736
    %v1738 = vpop.f32.mrb[0].mxu0
    %v1739 = vpop.f32.mrb[0].mxu0
    %v1740 = vadd.f32 %v1632, %v1739
    %v1741 = vpop.f32.mrb[0].mxu0
    %1742 = vmatprep.mubr.bf16.mxu0 0
    %1743 = vmatmul.mubr.bf16.gmra.mrb[0].mxu0 %v1654
    %v1744 = vpop.f32.mrb[0].mxu0
    %v1745 = vadd.f32 %v1632, %v1744
    %v1746 = vpop.f32.mrb[0].mxu0
    %v1747 = vpop.f32.mrb[0].mxu0
    %v1748 = vadd.f32 %v1632, %v1747
    %v1749 = vpop.f32.mrb[0].mxu0
    %1750 = vmatprep.mubr.bf16.mxu0 0
    %1751 = vmatmul.mubr.bf16.gmra.mrb[0].mxu0 %v1657
    %v1752 = vpop.f32.mrb[0].mxu0
    %v1753 = vadd.f32 %v1632, %v1752
    %v1754 = vpop.f32.mrb[0].mxu0
    %v1755 = vpop.f32.mrb[0].mxu0
    %v1756 = vadd.f32 %v1632, %v1755
    %v1757 = vpop.f32.mrb[0].mxu0
    %1758 = vmatprep.mubr.bf16.mxu0 0
    %1759 = vmatmul.mubr.bf16.gmra.mrb[0].mxu0 %v1660
    %v1760 = vpop.f32.mrb[0].mxu0
    %v1761 = vadd.f32 %v1632, %v1760
    %v1762 = vpop.f32.mrb[0].mxu0
    %v1763 = vpop.f32.mrb[0].mxu0
    %v1764 = vadd.f32 %v1632, %v1763
    %v1765 = vpop.f32.mrb[0].mxu0
    %1766 = vmatprep.mubr.bf16.mxu0 0
    %1767 = vmatmul.mubr.bf16.gmra.mrb[0].mxu0 %v1663
    %v1768 = vpop.f32.mrb[0].mxu0
    %v1769 = vadd.f32 %v1632, %v1768
    %v1770 = vpop.f32.mrb[0].mxu0
    %v1771 = vpop.f32.mrb[0].mxu0
    %v1772 = vadd.f32 %v1632, %v1771
    %v1773 = vpop.f32.mrb[0].mxu0
    %1774 = vmatprep.mubr.bf16.mxu0 0
    %1775 = vmatmul.mubr.bf16.gmra.mrb[0].mxu0 %v1666
    %v1776 = vpop.f32.mrb[0].mxu0
    %v1777 = vadd.f32 %v1632, %v1776
    %v1778 = vpop.f32.mrb[0].mxu0
    %v1779 = vpop.f32.mrb[0].mxu0
    %v1780 = vadd.f32 %v1632, %v1779
    %v1781 = vpop.f32.mrb[0].mxu0
    %1782 = vmatprep.mubr.bf16.mxu0 0
    %1783 = vmatmul.mubr.bf16.gmra.mrb[0].mxu0 %v1669
    %v1784 = vpop.f32.mrb[0].mxu0
    %v1785 = vadd.f32 %v1632, %v1784
    %v1786 = vpop.f32.mrb[0].mxu0
    %v1787 = vpop.f32.mrb[0].mxu0
    %v1788 = vadd.f32 %v1632, %v1787
    %v1789 = vpop.f32.mrb[0].mxu0
    %1790 = vmatprep.mubr.bf16.mxu0 0
    %1791 = vmatmul.mubr.bf16.gmra.mrb[0].mxu0 %v1672
    %v1792 = vpop.f32.mrb[0].mxu0
    %v1793 = vadd.f32 %v1632, %v1792
    %v1794 = vpop.f32.mrb[0].mxu0
    %v1795 = vpop.f32.mrb[0].mxu0
    %v1796 = vadd.f32 %v1632, %v1795
    %v1797 = vpop.f32.mrb[0].mxu0
    %1798 = vmatprep.mubr.bf16.mxu0 0
    %1799 = vmatmul.mubr.bf16.gmra.mrb[0].mxu0 %v1675
    %v1800 = vpop.f32.mrb[0].mxu0
    %v1801 = vadd.f32 %v1632, %v1800
    %v1802 = vpop.f32.mrb[0].mxu0
    %v1803 = vpop.f32.mrb[0].mxu0
    %v1804 = vadd.f32 %v1632, %v1803
    %v1805 = vpop.f32.mrb[0].mxu0
    %1806 = vmatprep.mubr.bf16.mxu0 0
    %1807 = vmatmul.mubr.bf16.gmra.mrb[0].mxu0 %v1678
    %v1808 = vpop.f32.mrb[0].mxu0
    %v1809 = vadd.f32 %v1632, %v1808
    %v1810 = vpop.f32.mrb[0].mxu0
    %v1811 = vpop.f32.mrb[0].mxu0
    %v1812 = vadd.f32 %v1632, %v1811
    %v1813 = vpop.f32.mrb[0].mxu0
    %1814 = vmatprep.mubr.bf16.mxu0 0
    %1815 = vmatmul.mubr.bf16.gmra.mrb[0].mxu0 %v1681
    %v1816 = vpop.f32.mrb[0].mxu0
    %v1817 = vadd.f32 %v1632, %v1816
    %v1818 = vpop.f32.mrb[0].mxu0
    %v1819 = vpop.f32.mrb[0].mxu0
    %v1820 = vadd.f32 %v1632, %v1819
    %v1821 = vpop.f32.mrb[0].mxu0
    %1822 = vmatprep.mubr.bf16.mxu0 0
    %1823 = vmatmul.mubr.bf16.gmra.mrb[0].mxu0 %v1684
    %v1824 = vpop.f32.mrb[0].mxu0
    %v1825 = vadd.f32 %v1632, %v1824
    %v1826 = vpop.f32.mrb[0].mxu0
    %v1827 = vpop.f32.mrb[0].mxu0
    %v1828 = vadd.f32 %v1632, %v1827
    %v1829 = vpop.f32.mrb[0].mxu0
    %1830 = vmatprep.mubr.bf16.mxu0 0
    %1831 = vmatmul.mubr.bf16.gmra.mrb[0].mxu0 %v1687
    %v1832 = vpop.f32.mrb[0].mxu0
    %v1833 = vadd.f32 %v1632, %v1832
    %v1834 = vpop.f32.mrb[0].mxu0
    %v1835 = vpop.f32.mrb[0].mxu0
    %v1836 = vadd.f32 %v1632, %v1835
    %v1837 = vpop.f32.mrb[0].mxu0
    %1838 = vmatprep.mubr.bf16.mxu0 0
    %1839 = vmatmul.mubr.bf16.gmra.mrb[0].mxu0 %v1690
    %v1840 = vpop.f32.mrb[0].mxu0
    %v1841 = vadd.f32 %v1632, %v1840
    %v1842 = vpop.f32.mrb[0].mxu0
    %v1843 = vpop.f32.mrb[0].mxu0
    %v1844 = vadd.f32 %v1632, %v1843
    %v1845 = vpop.f32.mrb[0].mxu0
    %1846 = vmatprep.mubr.bf16.mxu0 0
    %1847 = vmatmul.mubr.bf16.gmra.mrb[0].mxu0 %v1693
    %v1848 = vpop.f32.mrb[0].mxu0
    %v1849 = vadd.f32 %v1632, %v1848
    %v1850 = vpop.f32.mrb[0].mxu0
    %v1851 = vpop.f32.mrb[0].mxu0
    %v1852 = vadd.f32 %v1632, %v1851
    %v1853 = vpop.f32.mrb[0].mxu0
    %1854 = vmatprep.mubr.bf16.mxu0 0
    %1855 = vmatmul.mubr.bf16.gmra.mrb[0].mxu0 %v1696
    %v1856 = vpop.f32.mrb[0].mxu0
    %v1857 = vadd.f32 %v1632, %v1856
    %v1858 = vpop.f32.mrb[0].mxu0
    %v1859 = vpop.f32.mrb[0].mxu0
    %v1860 = vadd.f32 %v1632, %v1859
    %v1861 = vpop.f32.mrb[0].mxu0
    %1862 = vdwg.mxu0
    %v1863 = vmax.f32 %v1737, 0.0
    %v1864 = vmax.f32 %v1740, 0.0
    %v1865 = vmax.f32 %v1745, 0.0
    %v1866 = vmax.f32 %v1748, 0.0
    %v1867 = vmax.f32 %v1753, 0.0
    %v1868 = vmax.f32 %v1756, 0.0
    %v1869 = vmax.f32 %v1761, 0.0
    %v1870 = vmax.f32 %v1764, 0.0
    %v1871 = vmax.f32 %v1769, 0.0
    %v1872 = vmax.f32 %v1772, 0.0
    %v1873 = vmax.f32 %v1777, 0.0
    %v1874 = vmax.f32 %v1780, 0.0
    %v1875 = vmax.f32 %v1785, 0.0
    %v1876 = vmax.f32 %v1788, 0.0
    %v1877 = vmax.f32 %v1793, 0.0
    %v1878 = vmax.f32 %v1796, 0.0
    %v1879 = vmax.f32 %v1801, 0.0
    %v1880 = vmax.f32 %v1804, 0.0
    %v1881 = vmax.f32 %v1809, 0.0
    %v1882 = vmax.f32 %v1812, 0.0
    %v1883 = vmax.f32 %v1817, 0.0
    %v1884 = vmax.f32 %v1820, 0.0
    %v1885 = vmax.f32 %v1825, 0.0
    %v1886 = vmax.f32 %v1828, 0.0
    %v1887 = vmax.f32 %v1833, 0.0
    %v1888 = vmax.f32 %v1836, 0.0
    %v1889 = vmax.f32 %v1841, 0.0
    %v1890 = vmax.f32 %v1844, 0.0
    %v1891 = vmax.f32 %v1849, 0.0
    %v1892 = vmax.f32 %v1852, 0.0
    %v1893 = vmax.f32 %v1857, 0.0
    %v1894 = vmax.f32 %v1860, 0.0
    %v1895 = vsel %vm1441, %v1863, 0.0
    %v1896 = vsel %vm1441, %v1864, 0.0
    %v1897 = vadd.f32 %v1895, %v1896
    %v1898 = vsel %vm1441, %v1865, 0.0
    %v1899 = vadd.f32 %v1897, %v1898
    %v1900 = vsel %vm1441, %v1866, 0.0
    %v1901 = vadd.f32 %v1899, %v1900
    %v1902 = vsel %vm1441, %v1867, 0.0
    %v1903 = vadd.f32 %v1901, %v1902
    %v1904 = vsel %vm1441, %v1868, 0.0
    %v1905 = vadd.f32 %v1903, %v1904
    %v1906 = vsel %vm1441, %v1869, 0.0
    %v1907 = vadd.f32 %v1905, %v1906
    %v1908 = vsel %vm1441, %v1870, 0.0
    %v1909 = vadd.f32 %v1907, %v1908
    %v1910 = vsel %vm1441, %v1871, 0.0
    %v1911 = vadd.f32 %v1909, %v1910
    %v1912 = vsel %vm1441, %v1872, 0.0
    %v1913 = vadd.f32 %v1911, %v1912
    %v1914 = vsel %vm1441, %v1873, 0.0
    %v1915 = vadd.f32 %v1913, %v1914
    %v1916 = vsel %vm1441, %v1874, 0.0
    %v1917 = vadd.f32 %v1915, %v1916
    %v1918 = vsel %vm1441, %v1875, 0.0
    %v1919 = vadd.f32 %v1917, %v1918
    %v1920 = vsel %vm1441, %v1876, 0.0
    %v1921 = vadd.f32 %v1919, %v1920
    %v1922 = vsel %vm1441, %v1877, 0.0
    %v1923 = vadd.f32 %v1921, %v1922
    %v1924 = vsel %vm1441, %v1878, 0.0
    %v1925 = vadd.f32 %v1923, %v1924
    %v1926 = vsel %vm1441, %v1879, 0.0
    %v1927 = vadd.f32 %v1925, %v1926
    %v1928 = vsel %vm1441, %v1880, 0.0
    %v1929 = vadd.f32 %v1927, %v1928
    %v1930 = vsel %vm1441, %v1881, 0.0
    %v1931 = vadd.f32 %v1929, %v1930
    %v1932 = vsel %vm1441, %v1882, 0.0
    %v1933 = vadd.f32 %v1931, %v1932
    %v1934 = vsel %vm1441, %v1883, 0.0
    %v1935 = vadd.f32 %v1933, %v1934
    %v1936 = vsel %vm1441, %v1884, 0.0
    %v1937 = vadd.f32 %v1935, %v1936
    %v1938 = vsel %vm1441, %v1885, 0.0
    %v1939 = vadd.f32 %v1937, %v1938
    %v1940 = vsel %vm1441, %v1886, 0.0
    %v1941 = vadd.f32 %v1939, %v1940
    %v1942 = vsel %vm1441, %v1887, 0.0
    %v1943 = vadd.f32 %v1941, %v1942
    %v1944 = vsel %vm1441, %v1888, 0.0
    %v1945 = vadd.f32 %v1943, %v1944
    %v1946 = vsel %vm1441, %v1889, 0.0
    %v1947 = vadd.f32 %v1945, %v1946
    %v1948 = vsel %vm1441, %v1890, 0.0
    %v1949 = vadd.f32 %v1947, %v1948
    %v1950 = vsel %vm1441, %v1891, 0.0
    %v1951 = vadd.f32 %v1949, %v1950
    %v1952 = vsel %vm1441, %v1892, 0.0
    %v1953 = vadd.f32 %v1951, %v1952
    %v1954 = vsel %vm1441, %v1893, 0.0
    %v1955 = vadd.f32 %v1953, %v1954
    %v1956 = vsel %vm1441, %v1894, 0.0
    %v1957 = vadd.f32 %v1955, %v1956
    %v1958 = vrot.slane %v1957, 4
    %v1959 = vadd.f32 %v1957, %v1958
    %v1960 = vrot.slane %v1959, 2
    %v1961 = vadd.f32 %v1959, %v1960
    %v1962 = vrot.slane %v1961, 1
    %v1963 = vadd.f32 %v1961, %v1962
    %v1964 = vmul.f32 %v1963, 0.00390625
    %s1965 = scalar_lea.vmem %s0, 432
    %v1966 = vld [vmem:[%s1965] sm:$0xff]
    %v1967 = vld [vmem:[%s1965 + $0x8] sm:$0xff]
    %v1968 = vld [vmem:[%s1965 + $0x18] sm:$0xff]
    %v1969 = vld [vmem:[%s1965 + $0x20] sm:$0xff]
    %v1970 = vld [vmem:[%s1965 + $0x30] sm:$0xff]
    %v1971 = vld [vmem:[%s1965 + $0x38] sm:$0xff]
    %v1972 = vld [vmem:[%s1965 + $0x48] sm:$0xff]
    %v1973 = vld [vmem:[%s1965 + $0x50] sm:$0xff]
    %v1974 = vld [vmem:[%s1965 + $0x60] sm:$0xff]
    %v1975 = vld [vmem:[%s1965 + $0x68] sm:$0xff]
    %v1976 = vld [vmem:[%s1965 + $0x78] sm:$0xff]
    %v1977 = vld [vmem:[%s1965 + $0x80] sm:$0xff]
    %v1978 = vld [vmem:[%s1965 + $0x90] sm:$0xff]
    %v1979 = vld [vmem:[%s1965 + $0x98] sm:$0xff]
    %v1980 = vld [vmem:[%s1965 + $0xa8] sm:$0xff]
    %v1981 = vld [vmem:[%s1965 + $0xb0] sm:$0xff]
    %v1982 = vld [vmem:[%s1965 + $0xc0] sm:$0xff]
    %v1983 = vld [vmem:[%s1965 + $0xc8] sm:$0xff]
    %v1984 = vld [vmem:[%s1965 + $0xd8] sm:$0xff]
    %v1985 = vld [vmem:[%s1965 + $0xe0] sm:$0xff]
    %v1986 = vld [vmem:[%s1965 + $0xf0] sm:$0xff]
    %v1987 = vld [vmem:[%s1965 + $0xf8] sm:$0xff]
    %v1988 = vld [vmem:[%s1965 + $0x108] sm:$0xff]
    %v1989 = vld [vmem:[%s1965 + $0x110] sm:$0xff]
    %v1990 = vld [vmem:[%s1965 + $0x120] sm:$0xff]
    %v1991 = vld [vmem:[%s1965 + $0x128] sm:$0xff]
    %v1992 = vld [vmem:[%s1965 + $0x138] sm:$0xff]
    %v1993 = vld [vmem:[%s1965 + $0x140] sm:$0xff]
    %v1994 = vld [vmem:[%s1965 + $0x150] sm:$0xff]
    %v1995 = vld [vmem:[%s1965 + $0x158] sm:$0xff]
    %v1996 = vld [vmem:[%s1965 + $0x168] sm:$0xff]
    %v1997 = vld [vmem:[%s1965 + $0x170] sm:$0xff]
    %v1998 = vld [vmem:[%s1965 + $0x1] sm:$0xff]
    %v1999 = vld [vmem:[%s1965 + $0x9] sm:$0xff]
    %v2000 = vld [vmem:[%s1965 + $0x19] sm:$0xff]
    %v2001 = vld [vmem:[%s1965 + $0x21] sm:$0xff]
    %v2002 = vld [vmem:[%s1965 + $0x31] sm:$0xff]
    %v2003 = vld [vmem:[%s1965 + $0x39] sm:$0xff]
    %v2004 = vld [vmem:[%s1965 + $0x49] sm:$0xff]
    %v2005 = vld [vmem:[%s1965 + $0x51] sm:$0xff]
    %v2006 = vld [vmem:[%s1965 + $0x61] sm:$0xff]
    %v2007 = vld [vmem:[%s1965 + $0x69] sm:$0xff]
    %v2008 = vld [vmem:[%s1965 + $0x79] sm:$0xff]
    %v2009 = vld [vmem:[%s1965 + $0x81] sm:$0xff]
    %v2010 = vld [vmem:[%s1965 + $0x91] sm:$0xff]
    %v2011 = vld [vmem:[%s1965 + $0x99] sm:$0xff]
    %v2012 = vld [vmem:[%s1965 + $0xa9] sm:$0xff]
    %v2013 = vld [vmem:[%s1965 + $0xb1] sm:$0xff]
    %v2014 = vld [vmem:[%s1965 + $0xc1] sm:$0xff]
    %v2015 = vld [vmem:[%s1965 + $0xc9] sm:$0xff]
    %v2016 = vld [vmem:[%s1965 + $0xd9] sm:$0xff]
    %v2017 = vld [vmem:[%s1965 + $0xe1] sm:$0xff]
    %v2018 = vld [vmem:[%s1965 + $0xf1] sm:$0xff]
    %v2019 = vld [vmem:[%s1965 + $0xf9] sm:$0xff]
    %v2020 = vld [vmem:[%s1965 + $0x109] sm:$0xff]
    %v2021 = vld [vmem:[%s1965 + $0x111] sm:$0xff]
    %v2022 = vld [vmem:[%s1965 + $0x121] sm:$0xff]
    %v2023 = vld [vmem:[%s1965 + $0x129] sm:$0xff]
    %v2024 = vld [vmem:[%s1965 + $0x139] sm:$0xff]
    %v2025 = vld [vmem:[%s1965 + $0x141] sm:$0xff]
    %v2026 = vld [vmem:[%s1965 + $0x151] sm:$0xff]
    %v2027 = vld [vmem:[%s1965 + $0x159] sm:$0xff]
    %v2028 = vld [vmem:[%s1965 + $0x169] sm:$0xff]
    %v2029 = vld [vmem:[%s1965 + $0x171] sm:$0xff]
    %v2030 = vld [vmem:[%s1965 + $0x2] sm:$0xff]
    %v2031 = vld [vmem:[%s1965 + $0xa] sm:$0xff]
    %v2032 = vld [vmem:[%s1965 + $0x1a] sm:$0xff]
    %v2033 = vld [vmem:[%s1965 + $0x22] sm:$0xff]
    %v2034 = vld [vmem:[%s1965 + $0x32] sm:$0xff]
    %v2035 = vld [vmem:[%s1965 + $0x3a] sm:$0xff]
    %v2036 = vld [vmem:[%s1965 + $0x4a] sm:$0xff]
    %v2037 = vld [vmem:[%s1965 + $0x52] sm:$0xff]
    %v2038 = vld [vmem:[%s1965 + $0x62] sm:$0xff]
    %v2039 = vld [vmem:[%s1965 + $0x6a] sm:$0xff]
    %v2040 = vld [vmem:[%s1965 + $0x7a] sm:$0xff]
    %v2041 = vld [vmem:[%s1965 + $0x82] sm:$0xff]
    %v2042 = vld [vmem:[%s1965 + $0x92] sm:$0xff]
    %v2043 = vld [vmem:[%s1965 + $0x9a] sm:$0xff]
    %v2044 = vld [vmem:[%s1965 + $0xaa] sm:$0xff]
    %v2045 = vld [vmem:[%s1965 + $0xb2] sm:$0xff]
    %v2046 = vld [vmem:[%s1965 + $0xc2] sm:$0xff]
    %v2047 = vld [vmem:[%s1965 + $0xca] sm:$0xff]
    %v2048 = vld [vmem:[%s1965 + $0xda] sm:$0xff]
    %v2049 = vld [vmem:[%s1965 + $0xe2] sm:$0xff]
    %v2050 = vld [vmem:[%s1965 + $0xf2] sm:$0xff]
    %v2051 = vld [vmem:[%s1965 + $0xfa] sm:$0xff]
    %v2052 = vld [vmem:[%s1965 + $0x10a] sm:$0xff]
    %v2053 = vld [vmem:[%s1965 + $0x112] sm:$0xff]
    %v2054 = vld [vmem:[%s1965 + $0x122] sm:$0xff]
    %v2055 = vld [vmem:[%s1965 + $0x12a] sm:$0xff]
    %v2056 = vld [vmem:[%s1965 + $0x13a] sm:$0xff]
    %v2057 = vld [vmem:[%s1965 + $0x142] sm:$0xff]
    %v2058 = vld [vmem:[%s1965 + $0x152] sm:$0xff]
    %v2059 = vld [vmem:[%s1965 + $0x15a] sm:$0xff]
    %v2060 = vld [vmem:[%s1965 + $0x16a] sm:$0xff]
    %v2061 = vld [vmem:[%s1965 + $0x172] sm:$0xff]
    %s2062 = scalar_lea.vmem %s0, 456
    %v2063 = vld [vmem:[%s2062] sm:$0xff]
    %v2064 = vld [vmem:[%s2062 + $0x8] sm:$0xff]
    %v2065 = vld [vmem:[%s2062 + $0x18] sm:$0xff]
    %v2066 = vld [vmem:[%s2062 + $0x20] sm:$0xff]
    %v2067 = vld [vmem:[%s2062 + $0x30] sm:$0xff]
    %v2068 = vld [vmem:[%s2062 + $0x38] sm:$0xff]
    %v2069 = vld [vmem:[%s2062 + $0x48] sm:$0xff]
    %v2070 = vld [vmem:[%s2062 + $0x50] sm:$0xff]
    %v2071 = vld [vmem:[%s2062 + $0x60] sm:$0xff]
    %v2072 = vld [vmem:[%s2062 + $0x68] sm:$0xff]
    %v2073 = vld [vmem:[%s2062 + $0x78] sm:$0xff]
    %v2074 = vld [vmem:[%s2062 + $0x80] sm:$0xff]
    %v2075 = vld [vmem:[%s2062 + $0x90] sm:$0xff]
    %v2076 = vld [vmem:[%s2062 + $0x98] sm:$0xff]
    %v2077 = vld [vmem:[%s2062 + $0xa8] sm:$0xff]
    %v2078 = vld [vmem:[%s2062 + $0xb0] sm:$0xff]
    %v2079 = vld [vmem:[%s2062 + $0xc0] sm:$0xff]
    %v2080 = vld [vmem:[%s2062 + $0xc8] sm:$0xff]
    %v2081 = vld [vmem:[%s2062 + $0xd8] sm:$0xff]
    %v2082 = vld [vmem:[%s2062 + $0xe0] sm:$0xff]
    %v2083 = vld [vmem:[%s2062 + $0xf0] sm:$0xff]
    %v2084 = vld [vmem:[%s2062 + $0xf8] sm:$0xff]
    %v2085 = vld [vmem:[%s2062 + $0x108] sm:$0xff]
    %v2086 = vld [vmem:[%s2062 + $0x110] sm:$0xff]
    %v2087 = vld [vmem:[%s2062 + $0x120] sm:$0xff]
    %v2088 = vld [vmem:[%s2062 + $0x128] sm:$0xff]
    %v2089 = vld [vmem:[%s2062 + $0x138] sm:$0xff]
    %v2090 = vld [vmem:[%s2062 + $0x140] sm:$0xff]
    %v2091 = vld [vmem:[%s2062 + $0x150] sm:$0xff]
    %v2092 = vld [vmem:[%s2062 + $0x158] sm:$0xff]
    %v2093 = vld [vmem:[%s2062 + $0x168] sm:$0xff]
    %v2094 = vld [vmem:[%s2062 + $0x170] sm:$0xff]
    %v2095 = vld [vmem:[%s2062 + $0x1] sm:$0xff]
    %v2096 = vld [vmem:[%s2062 + $0x9] sm:$0xff]
    %v2097 = vld [vmem:[%s2062 + $0x19] sm:$0xff]
    %v2098 = vld [vmem:[%s2062 + $0x21] sm:$0xff]
    %v2099 = vld [vmem:[%s2062 + $0x31] sm:$0xff]
    %v2100 = vld [vmem:[%s2062 + $0x39] sm:$0xff]
    %v2101 = vld [vmem:[%s2062 + $0x49] sm:$0xff]
    %v2102 = vld [vmem:[%s2062 + $0x51] sm:$0xff]
    %v2103 = vld [vmem:[%s2062 + $0x61] sm:$0xff]
    %v2104 = vld [vmem:[%s2062 + $0x69] sm:$0xff]
    %v2105 = vld [vmem:[%s2062 + $0x79] sm:$0xff]
    %v2106 = vld [vmem:[%s2062 + $0x81] sm:$0xff]
    %v2107 = vld [vmem:[%s2062 + $0x91] sm:$0xff]
    %v2108 = vld [vmem:[%s2062 + $0x99] sm:$0xff]
    %v2109 = vld [vmem:[%s2062 + $0xa9] sm:$0xff]
    %v2110 = vld [vmem:[%s2062 + $0xb1] sm:$0xff]
    %v2111 = vld [vmem:[%s2062 + $0xc1] sm:$0xff]
    %v2112 = vld [vmem:[%s2062 + $0xc9] sm:$0xff]
    %v2113 = vld [vmem:[%s2062 + $0xd9] sm:$0xff]
    %v2114 = vld [vmem:[%s2062 + $0xe1] sm:$0xff]
    %v2115 = vld [vmem:[%s2062 + $0xf1] sm:$0xff]
    %v2116 = vld [vmem:[%s2062 + $0xf9] sm:$0xff]
    %v2117 = vld [vmem:[%s2062 + $0x109] sm:$0xff]
    %v2118 = vld [vmem:[%s2062 + $0x111] sm:$0xff]
    %v2119 = vld [vmem:[%s2062 + $0x121] sm:$0xff]
    %v2120 = vld [vmem:[%s2062 + $0x129] sm:$0xff]
    %v2121 = vld [vmem:[%s2062 + $0x139] sm:$0xff]
    %v2122 = vld [vmem:[%s2062 + $0x141] sm:$0xff]
    %v2123 = vld [vmem:[%s2062 + $0x151] sm:$0xff]
    %v2124 = vld [vmem:[%s2062 + $0x159] sm:$0xff]
    %v2125 = vld [vmem:[%s2062 + $0x169] sm:$0xff]
    %v2126 = vld [vmem:[%s2062 + $0x171] sm:$0xff]
    %v2127 = vld [vmem:[%s2062 + $0x2] sm:$0xff]
    %v2128 = vld [vmem:[%s2062 + $0xa] sm:$0xff]
    %v2129 = vld [vmem:[%s2062 + $0x1a] sm:$0xff]
    %v2130 = vld [vmem:[%s2062 + $0x22] sm:$0xff]
    %v2131 = vld [vmem:[%s2062 + $0x32] sm:$0xff]
    %v2132 = vld [vmem:[%s2062 + $0x3a] sm:$0xff]
    %v2133 = vld [vmem:[%s2062 + $0x4a] sm:$0xff]
    %v2134 = vld [vmem:[%s2062 + $0x52] sm:$0xff]
    %v2135 = vld [vmem:[%s2062 + $0x62] sm:$0xff]
    %v2136 = vld [vmem:[%s2062 + $0x6a] sm:$0xff]
    %v2137 = vld [vmem:[%s2062 + $0x7a] sm:$0xff]
    %v2138 = vld [vmem:[%s2062 + $0x82] sm:$0xff]
    %v2139 = vld [vmem:[%s2062 + $0x92] sm:$0xff]
    %v2140 = vld [vmem:[%s2062 + $0x9a] sm:$0xff]
    %v2141 = vld [vmem:[%s2062 + $0xaa] sm:$0xff]
    %v2142 = vld [vmem:[%s2062 + $0xb2] sm:$0xff]
    %v2143 = vld [vmem:[%s2062 + $0xc2] sm:$0xff]
    %v2144 = vld [vmem:[%s2062 + $0xca] sm:$0xff]
    %v2145 = vld [vmem:[%s2062 + $0xda] sm:$0xff]
    %v2146 = vld [vmem:[%s2062 + $0xe2] sm:$0xff]
    %v2147 = vld [vmem:[%s2062 + $0xf2] sm:$0xff]
    %v2148 = vld [vmem:[%s2062 + $0xfa] sm:$0xff]
    %v2149 = vld [vmem:[%s2062 + $0x10a] sm:$0xff]
    %v2150 = vld [vmem:[%s2062 + $0x112] sm:$0xff]
    %v2151 = vld [vmem:[%s2062 + $0x122] sm:$0xff]
    %v2152 = vld [vmem:[%s2062 + $0x12a] sm:$0xff]
    %v2153 = vld [vmem:[%s2062 + $0x13a] sm:$0xff]
    %v2154 = vld [vmem:[%s2062 + $0x142] sm:$0xff]
    %v2155 = vld [vmem:[%s2062 + $0x152] sm:$0xff]
    %v2156 = vld [vmem:[%s2062 + $0x15a] sm:$0xff]
    %v2157 = vld [vmem:[%s2062 + $0x16a] sm:$0xff]
    %v2158 = vld [vmem:[%s2062 + $0x172] sm:$0xff]
    %s2159 = scalar_lea.vmem %s0, 480
    %v2160 = vld [vmem:[%s2159] sm:$0xff]
    %v2161 = vld [vmem:[%s2159 + $0x8] sm:$0xff]
    %v2162 = vld [vmem:[%s2159 + $0x18] sm:$0xff]
    %v2163 = vld [vmem:[%s2159 + $0x20] sm:$0xff]
    %v2164 = vld [vmem:[%s2159 + $0x30] sm:$0xff]
    %v2165 = vld [vmem:[%s2159 + $0x38] sm:$0xff]
    %v2166 = vld [vmem:[%s2159 + $0x48] sm:$0xff]
    %v2167 = vld [vmem:[%s2159 + $0x50] sm:$0xff]
    %v2168 = vld [vmem:[%s2159 + $0x60] sm:$0xff]
    %v2169 = vld [vmem:[%s2159 + $0x68] sm:$0xff]
    %v2170 = vld [vmem:[%s2159 + $0x78] sm:$0xff]
    %v2171 = vld [vmem:[%s2159 + $0x80] sm:$0xff]
    %v2172 = vld [vmem:[%s2159 + $0x90] sm:$0xff]
    %v2173 = vld [vmem:[%s2159 + $0x98] sm:$0xff]
    %v2174 = vld [vmem:[%s2159 + $0xa8] sm:$0xff]
    %v2175 = vld [vmem:[%s2159 + $0xb0] sm:$0xff]
    %v2176 = vld [vmem:[%s2159 + $0xc0] sm:$0xff]
    %v2177 = vld [vmem:[%s2159 + $0xc8] sm:$0xff]
    %v2178 = vld [vmem:[%s2159 + $0xd8] sm:$0xff]
    %v2179 = vld [vmem:[%s2159 + $0xe0] sm:$0xff]
    %v2180 = vld [vmem:[%s2159 + $0xf0] sm:$0xff]
    %v2181 = vld [vmem:[%s2159 + $0xf8] sm:$0xff]
    %v2182 = vld [vmem:[%s2159 + $0x108] sm:$0xff]
    %v2183 = vld [vmem:[%s2159 + $0x110] sm:$0xff]
    %v2184 = vld [vmem:[%s2159 + $0x120] sm:$0xff]
    %v2185 = vld [vmem:[%s2159 + $0x128] sm:$0xff]
    %v2186 = vld [vmem:[%s2159 + $0x138] sm:$0xff]
    %v2187 = vld [vmem:[%s2159 + $0x140] sm:$0xff]
    %v2188 = vld [vmem:[%s2159 + $0x150] sm:$0xff]
    %v2189 = vld [vmem:[%s2159 + $0x158] sm:$0xff]
    %v2190 = vld [vmem:[%s2159 + $0x168] sm:$0xff]
    %v2191 = vld [vmem:[%s2159 + $0x170] sm:$0xff]
    %v2192 = vld [vmem:[%s2159 + $0x1] sm:$0xff]
    %v2193 = vld [vmem:[%s2159 + $0x9] sm:$0xff]
    %v2194 = vld [vmem:[%s2159 + $0x19] sm:$0xff]
    %v2195 = vld [vmem:[%s2159 + $0x21] sm:$0xff]
    %v2196 = vld [vmem:[%s2159 + $0x31] sm:$0xff]
    %v2197 = vld [vmem:[%s2159 + $0x39] sm:$0xff]
    %v2198 = vld [vmem:[%s2159 + $0x49] sm:$0xff]
    %v2199 = vld [vmem:[%s2159 + $0x51] sm:$0xff]
    %v2200 = vld [vmem:[%s2159 + $0x61] sm:$0xff]
    %v2201 = vld [vmem:[%s2159 + $0x69] sm:$0xff]
    %v2202 = vld [vmem:[%s2159 + $0x79] sm:$0xff]
    %v2203 = vld [vmem:[%s2159 + $0x81] sm:$0xff]
    %v2204 = vld [vmem:[%s2159 + $0x91] sm:$0xff]
    %v2205 = vld [vmem:[%s2159 + $0x99] sm:$0xff]
    %v2206 = vld [vmem:[%s2159 + $0xa9] sm:$0xff]
    %v2207 = vld [vmem:[%s2159 + $0xb1] sm:$0xff]
    %v2208 = vld [vmem:[%s2159 + $0xc1] sm:$0xff]
    %v2209 = vld [vmem:[%s2159 + $0xc9] sm:$0xff]
    %v2210 = vld [vmem:[%s2159 + $0xd9] sm:$0xff]
    %v2211 = vld [vmem:[%s2159 + $0xe1] sm:$0xff]
    %v2212 = vld [vmem:[%s2159 + $0xf1] sm:$0xff]
    %v2213 = vld [vmem:[%s2159 + $0xf9] sm:$0xff]
    %v2214 = vld [vmem:[%s2159 + $0x109] sm:$0xff]
    %v2215 = vld [vmem:[%s2159 + $0x111] sm:$0xff]
    %v2216 = vld [vmem:[%s2159 + $0x121] sm:$0xff]
    %v2217 = vld [vmem:[%s2159 + $0x129] sm:$0xff]
    %v2218 = vld [vmem:[%s2159 + $0x139] sm:$0xff]
    %v2219 = vld [vmem:[%s2159 + $0x141] sm:$0xff]
    %v2220 = vld [vmem:[%s2159 + $0x151] sm:$0xff]
    %v2221 = vld [vmem:[%s2159 + $0x159] sm:$0xff]
    %v2222 = vld [vmem:[%s2159 + $0x169] sm:$0xff]
    %v2223 = vld [vmem:[%s2159 + $0x171] sm:$0xff]
    %v2224 = vld [vmem:[%s2159 + $0x2] sm:$0xff]
    %v2225 = vld [vmem:[%s2159 + $0xa] sm:$0xff]
    %v2226 = vld [vmem:[%s2159 + $0x1a] sm:$0xff]
    %v2227 = vld [vmem:[%s2159 + $0x22] sm:$0xff]
    %v2228 = vld [vmem:[%s2159 + $0x32] sm:$0xff]
    %v2229 = vld [vmem:[%s2159 + $0x3a] sm:$0xff]
    %v2230 = vld [vmem:[%s2159 + $0x4a] sm:$0xff]
    %v2231 = vld [vmem:[%s2159 + $0x52] sm:$0xff]
    %v2232 = vld [vmem:[%s2159 + $0x62] sm:$0xff]
    %v2233 = vld [vmem:[%s2159 + $0x6a] sm:$0xff]
    %v2234 = vld [vmem:[%s2159 + $0x7a] sm:$0xff]
    %v2235 = vld [vmem:[%s2159 + $0x82] sm:$0xff]
    %v2236 = vld [vmem:[%s2159 + $0x92] sm:$0xff]
    %v2237 = vld [vmem:[%s2159 + $0x9a] sm:$0xff]
    %v2238 = vld [vmem:[%s2159 + $0xaa] sm:$0xff]
    %v2239 = vld [vmem:[%s2159 + $0xb2] sm:$0xff]
    %v2240 = vld [vmem:[%s2159 + $0xc2] sm:$0xff]
    %v2241 = vld [vmem:[%s2159 + $0xca] sm:$0xff]
    %v2242 = vld [vmem:[%s2159 + $0xda] sm:$0xff]
    %v2243 = vld [vmem:[%s2159 + $0xe2] sm:$0xff]
    %v2244 = vld [vmem:[%s2159 + $0xf2] sm:$0xff]
    %v2245 = vld [vmem:[%s2159 + $0xfa] sm:$0xff]
    %v2246 = vld [vmem:[%s2159 + $0x10a] sm:$0xff]
    %v2247 = vld [vmem:[%s2159 + $0x112] sm:$0xff]
    %v2248 = vld [vmem:[%s2159 + $0x122] sm:$0xff]
    %v2249 = vld [vmem:[%s2159 + $0x12a] sm:$0xff]
    %v2250 = vld [vmem:[%s2159 + $0x13a] sm:$0xff]
    %v2251 = vld [vmem:[%s2159 + $0x142] sm:$0xff]
    %v2252 = vld [vmem:[%s2159 + $0x152] sm:$0xff]
    %v2253 = vld [vmem:[%s2159 + $0x15a] sm:$0xff]
    %v2254 = vld [vmem:[%s2159 + $0x16a] sm:$0xff]
    %v2255 = vld [vmem:[%s2159 + $0x172] sm:$0xff]
    %2288 = vrot.lane.b32.xlu0 %v1998, 4
    %v2289 = vpop.permute.xlu0 %2288
    %2290 = vrot.lane.b32.xlu0 %v1999, 4
    %v2291 = vpop.permute.xlu0 %2290
    %2292 = vrot.lane.b32.xlu0 %v2000, 4
    %v2293 = vpop.permute.xlu0 %2292
    %2294 = vrot.lane.b32.xlu0 %v2001, 4
    %v2295 = vpop.permute.xlu0 %2294
    %2296 = vrot.lane.b32.xlu0 %v2002, 4
    %v2297 = vpop.permute.xlu0 %2296
    %2298 = vrot.lane.b32.xlu0 %v2003, 4
    %v2299 = vpop.permute.xlu0 %2298
    %2300 = vrot.lane.b32.xlu0 %v2004, 4
    %v2301 = vpop.permute.xlu0 %2300
    %2302 = vrot.lane.b32.xlu0 %v2005, 4
    %v2303 = vpop.permute.xlu0 %2302
    %2304 = vrot.lane.b32.xlu0 %v2006, 4
    %v2305 = vpop.permute.xlu0 %2304
    %2306 = vrot.lane.b32.xlu0 %v2007, 4
    %v2307 = vpop.permute.xlu0 %2306
    %2308 = vrot.lane.b32.xlu0 %v2008, 4
    %v2309 = vpop.permute.xlu0 %2308
    %2310 = vrot.lane.b32.xlu0 %v2009, 4
    %v2311 = vpop.permute.xlu0 %2310
    %2312 = vrot.lane.b32.xlu0 %v2010, 4
    %v2313 = vpop.permute.xlu0 %2312
    %2314 = vrot.lane.b32.xlu0 %v2011, 4
    %v2315 = vpop.permute.xlu0 %2314
    %2316 = vrot.lane.b32.xlu0 %v2012, 4
    %v2317 = vpop.permute.xlu0 %2316
    %2318 = vrot.lane.b32.xlu0 %v2013, 4
    %v2319 = vpop.permute.xlu0 %2318
    %2320 = vrot.lane.b32.xlu0 %v2014, 4
    %v2321 = vpop.permute.xlu0 %2320
    %2322 = vrot.lane.b32.xlu0 %v2015, 4
    %v2323 = vpop.permute.xlu0 %2322
    %2324 = vrot.lane.b32.xlu0 %v2016, 4
    %v2325 = vpop.permute.xlu0 %2324
    %2326 = vrot.lane.b32.xlu0 %v2017, 4
    %v2327 = vpop.permute.xlu0 %2326
    %2328 = vrot.lane.b32.xlu0 %v2018, 4
    %v2329 = vpop.permute.xlu0 %2328
    %2330 = vrot.lane.b32.xlu0 %v2019, 4
    %v2331 = vpop.permute.xlu0 %2330
    %2332 = vrot.lane.b32.xlu0 %v2020, 4
    %v2333 = vpop.permute.xlu0 %2332
    %2334 = vrot.lane.b32.xlu0 %v2021, 4
    %v2335 = vpop.permute.xlu0 %2334
    %2336 = vrot.lane.b32.xlu0 %v2022, 4
    %v2337 = vpop.permute.xlu0 %2336
    %2338 = vrot.lane.b32.xlu0 %v2023, 4
    %v2339 = vpop.permute.xlu0 %2338
    %2340 = vrot.lane.b32.xlu0 %v2024, 4
    %v2341 = vpop.permute.xlu0 %2340
    %2342 = vrot.lane.b32.xlu0 %v2025, 4
    %v2343 = vpop.permute.xlu0 %2342
    %2344 = vrot.lane.b32.xlu0 %v2026, 4
    %v2345 = vpop.permute.xlu0 %2344
    %2346 = vrot.lane.b32.xlu0 %v2027, 4
    %v2347 = vpop.permute.xlu0 %2346
    %2348 = vrot.lane.b32.xlu0 %v2028, 4
    %v2349 = vpop.permute.xlu0 %2348
    %2350 = vrot.lane.b32.xlu0 %v2029, 4
    %v2351 = vpop.permute.xlu0 %2350
    %2416 = vrot.lane.b32.xlu0 %v2030, 8
    %v2417 = vpop.permute.xlu0 %2416
    %2418 = vrot.lane.b32.xlu0 %v2031, 8
    %v2419 = vpop.permute.xlu0 %2418
    %2420 = vrot.lane.b32.xlu0 %v2032, 8
    %v2421 = vpop.permute.xlu0 %2420
    %2422 = vrot.lane.b32.xlu0 %v2033, 8
    %v2423 = vpop.permute.xlu0 %2422
    %2424 = vrot.lane.b32.xlu0 %v2034, 8
    %v2425 = vpop.permute.xlu0 %2424
    %2426 = vrot.lane.b32.xlu0 %v2035, 8
    %v2427 = vpop.permute.xlu0 %2426
    %2428 = vrot.lane.b32.xlu0 %v2036, 8
    %v2429 = vpop.permute.xlu0 %2428
    %2430 = vrot.lane.b32.xlu0 %v2037, 8
    %v2431 = vpop.permute.xlu0 %2430
    %2432 = vrot.lane.b32.xlu0 %v2038, 8
    %v2433 = vpop.permute.xlu0 %2432
    %2434 = vrot.lane.b32.xlu0 %v2039, 8
    %v2435 = vpop.permute.xlu0 %2434
    %2436 = vrot.lane.b32.xlu0 %v2040, 8
    %v2437 = vpop.permute.xlu0 %2436
    %2438 = vrot.lane.b32.xlu0 %v2041, 8
    %v2439 = vpop.permute.xlu0 %2438
    %2440 = vrot.lane.b32.xlu0 %v2042, 8
    %v2441 = vpop.permute.xlu0 %2440
    %2442 = vrot.lane.b32.xlu0 %v2043, 8
    %v2443 = vpop.permute.xlu0 %2442
    %2444 = vrot.lane.b32.xlu0 %v2044, 8
    %v2445 = vpop.permute.xlu0 %2444
    %2446 = vrot.lane.b32.xlu0 %v2045, 8
    %v2447 = vpop.permute.xlu0 %2446
    %2448 = vrot.lane.b32.xlu0 %v2046, 8
    %v2449 = vpop.permute.xlu0 %2448
    %2450 = vrot.lane.b32.xlu0 %v2047, 8
    %v2451 = vpop.permute.xlu0 %2450
    %2452 = vrot.lane.b32.xlu0 %v2048, 8
    %v2453 = vpop.permute.xlu0 %2452
    %2454 = vrot.lane.b32.xlu0 %v2049, 8
    %v2455 = vpop.permute.xlu0 %2454
    %2456 = vrot.lane.b32.xlu0 %v2050, 8
    %v2457 = vpop.permute.xlu0 %2456
    %2458 = vrot.lane.b32.xlu0 %v2051, 8
    %v2459 = vpop.permute.xlu0 %2458
    %2460 = vrot.lane.b32.xlu0 %v2052, 8
    %v2461 = vpop.permute.xlu0 %2460
    %2462 = vrot.lane.b32.xlu0 %v2053, 8
    %v2463 = vpop.permute.xlu0 %2462
    %2464 = vrot.lane.b32.xlu0 %v2054, 8
    %v2465 = vpop.permute.xlu0 %2464
    %2466 = vrot.lane.b32.xlu0 %v2055, 8
    %v2467 = vpop.permute.xlu0 %2466
    %2468 = vrot.lane.b32.xlu0 %v2056, 8
    %v2469 = vpop.permute.xlu0 %2468
    %2470 = vrot.lane.b32.xlu0 %v2057, 8
    %v2471 = vpop.permute.xlu0 %2470
    %2472 = vrot.lane.b32.xlu0 %v2058, 8
    %v2473 = vpop.permute.xlu0 %2472
    %2474 = vrot.lane.b32.xlu0 %v2059, 8
    %v2475 = vpop.permute.xlu0 %2474
    %2476 = vrot.lane.b32.xlu0 %v2060, 8
    %v2477 = vpop.permute.xlu0 %2476
    %2478 = vrot.lane.b32.xlu0 %v2061, 8
    %v2479 = vpop.permute.xlu0 %2478
    %2544 = vrot.lane.b32.xlu0 %v2063, 12
    %v2545 = vpop.permute.xlu0 %2544
    %2546 = vrot.lane.b32.xlu0 %v2064, 12
    %v2547 = vpop.permute.xlu0 %2546
    %2548 = vrot.lane.b32.xlu0 %v2065, 12
    %v2549 = vpop.permute.xlu0 %2548
    %2550 = vrot.lane.b32.xlu0 %v2066, 12
    %v2551 = vpop.permute.xlu0 %2550
    %2552 = vrot.lane.b32.xlu0 %v2067, 12
    %v2553 = vpop.permute.xlu0 %2552
    %2554 = vrot.lane.b32.xlu0 %v2068, 12
    %v2555 = vpop.permute.xlu0 %2554
    %2556 = vrot.lane.b32.xlu0 %v2069, 12
    %v2557 = vpop.permute.xlu0 %2556
    %2558 = vrot.lane.b32.xlu0 %v2070, 12
    %v2559 = vpop.permute.xlu0 %2558
    %2560 = vrot.lane.b32.xlu0 %v2071, 12
    %v2561 = vpop.permute.xlu0 %2560
    %2562 = vrot.lane.b32.xlu0 %v2072, 12
    %v2563 = vpop.permute.xlu0 %2562
    %2564 = vrot.lane.b32.xlu0 %v2073, 12
    %v2565 = vpop.permute.xlu0 %2564
    %2566 = vrot.lane.b32.xlu0 %v2074, 12
    %v2567 = vpop.permute.xlu0 %2566
    %2568 = vrot.lane.b32.xlu0 %v2075, 12
    %v2569 = vpop.permute.xlu0 %2568
    %2570 = vrot.lane.b32.xlu0 %v2076, 12
    %v2571 = vpop.permute.xlu0 %2570
    %2572 = vrot.lane.b32.xlu0 %v2077, 12
    %v2573 = vpop.permute.xlu0 %2572
    %2574 = vrot.lane.b32.xlu0 %v2078, 12
    %v2575 = vpop.permute.xlu0 %2574
    %2576 = vrot.lane.b32.xlu0 %v2079, 12
    %v2577 = vpop.permute.xlu0 %2576
    %2578 = vrot.lane.b32.xlu0 %v2080, 12
    %v2579 = vpop.permute.xlu0 %2578
    %2580 = vrot.lane.b32.xlu0 %v2081, 12
    %v2581 = vpop.permute.xlu0 %2580
    %2582 = vrot.lane.b32.xlu0 %v2082, 12
    %v2583 = vpop.permute.xlu0 %2582
    %2584 = vrot.lane.b32.xlu0 %v2083, 12
    %v2585 = vpop.permute.xlu0 %2584
    %2586 = vrot.lane.b32.xlu0 %v2084, 12
    %v2587 = vpop.permute.xlu0 %2586
    %2588 = vrot.lane.b32.xlu0 %v2085, 12
    %v2589 = vpop.permute.xlu0 %2588
    %2590 = vrot.lane.b32.xlu0 %v2086, 12
    %v2591 = vpop.permute.xlu0 %2590
    %2592 = vrot.lane.b32.xlu0 %v2087, 12
    %v2593 = vpop.permute.xlu0 %2592
    %2594 = vrot.lane.b32.xlu0 %v2088, 12
    %v2595 = vpop.permute.xlu0 %2594
    %2596 = vrot.lane.b32.xlu0 %v2089, 12
    %v2597 = vpop.permute.xlu0 %2596
    %2598 = vrot.lane.b32.xlu0 %v2090, 12
    %v2599 = vpop.permute.xlu0 %2598
    %2600 = vrot.lane.b32.xlu0 %v2091, 12
    %v2601 = vpop.permute.xlu0 %2600
    %2602 = vrot.lane.b32.xlu0 %v2092, 12
    %v2603 = vpop.permute.xlu0 %2602
    %2604 = vrot.lane.b32.xlu0 %v2093, 12
    %v2605 = vpop.permute.xlu0 %2604
    %2606 = vrot.lane.b32.xlu0 %v2094, 12
    %v2607 = vpop.permute.xlu0 %2606
    %2672 = vrot.lane.b32.xlu0 %v2095, 16
    %v2673 = vpop.permute.xlu0 %2672
    %2674 = vrot.lane.b32.xlu0 %v2096, 16
    %v2675 = vpop.permute.xlu0 %2674
    %2676 = vrot.lane.b32.xlu0 %v2097, 16
    %v2677 = vpop.permute.xlu0 %2676
    %2678 = vrot.lane.b32.xlu0 %v2098, 16
    %v2679 = vpop.permute.xlu0 %2678
    %2680 = vrot.lane.b32.xlu0 %v2099, 16
    %v2681 = vpop.permute.xlu0 %2680
    %2682 = vrot.lane.b32.xlu0 %v2100, 16
    %v2683 = vpop.permute.xlu0 %2682
    %2684 = vrot.lane.b32.xlu0 %v2101, 16
    %v2685 = vpop.permute.xlu0 %2684
    %2686 = vrot.lane.b32.xlu0 %v2102, 16
    %v2687 = vpop.permute.xlu0 %2686
    %2688 = vrot.lane.b32.xlu0 %v2103, 16
    %v2689 = vpop.permute.xlu0 %2688
    %2690 = vrot.lane.b32.xlu0 %v2104, 16
    %v2691 = vpop.permute.xlu0 %2690
    %2692 = vrot.lane.b32.xlu0 %v2105, 16
    %v2693 = vpop.permute.xlu0 %2692
    %2694 = vrot.lane.b32.xlu0 %v2106, 16
    %v2695 = vpop.permute.xlu0 %2694
    %2696 = vrot.lane.b32.xlu0 %v2107, 16
    %v2697 = vpop.permute.xlu0 %2696
    %2698 = vrot.lane.b32.xlu0 %v2108, 16
    %v2699 = vpop.permute.xlu0 %2698
    %2700 = vrot.lane.b32.xlu0 %v2109, 16
    %v2701 = vpop.permute.xlu0 %2700
    %2702 = vrot.lane.b32.xlu0 %v2110, 16
    %v2703 = vpop.permute.xlu0 %2702
    %2704 = vrot.lane.b32.xlu0 %v2111, 16
    %v2705 = vpop.permute.xlu0 %2704
    %2706 = vrot.lane.b32.xlu0 %v2112, 16
    %v2707 = vpop.permute.xlu0 %2706
    %2708 = vrot.lane.b32.xlu0 %v2113, 16
    %v2709 = vpop.permute.xlu0 %2708
    %2710 = vrot.lane.b32.xlu0 %v2114, 16
    %v2711 = vpop.permute.xlu0 %2710
    %2712 = vrot.lane.b32.xlu0 %v2115, 16
    %v2713 = vpop.permute.xlu0 %2712
    %2714 = vrot.lane.b32.xlu0 %v2116, 16
    %v2715 = vpop.permute.xlu0 %2714
    %2716 = vrot.lane.b32.xlu0 %v2117, 16
    %v2717 = vpop.permute.xlu0 %2716
    %2718 = vrot.lane.b32.xlu0 %v2118, 16
    %v2719 = vpop.permute.xlu0 %2718
    %2720 = vrot.lane.b32.xlu0 %v2119, 16
    %v2721 = vpop.permute.xlu0 %2720
    %2722 = vrot.lane.b32.xlu0 %v2120, 16
    %v2723 = vpop.permute.xlu0 %2722
    %2724 = vrot.lane.b32.xlu0 %v2121, 16
    %v2725 = vpop.permute.xlu0 %2724
    %2726 = vrot.lane.b32.xlu0 %v2122, 16
    %v2727 = vpop.permute.xlu0 %2726
    %2728 = vrot.lane.b32.xlu0 %v2123, 16
    %v2729 = vpop.permute.xlu0 %2728
    %2730 = vrot.lane.b32.xlu0 %v2124, 16
    %v2731 = vpop.permute.xlu0 %2730
    %2732 = vrot.lane.b32.xlu0 %v2125, 16
    %v2733 = vpop.permute.xlu0 %2732
    %2734 = vrot.lane.b32.xlu0 %v2126, 16
    %v2735 = vpop.permute.xlu0 %2734
    %2800 = vrot.lane.b32.xlu0 %v2127, 20
    %v2801 = vpop.permute.xlu0 %2800
    %2802 = vrot.lane.b32.xlu0 %v2128, 20
    %v2803 = vpop.permute.xlu0 %2802
    %2804 = vrot.lane.b32.xlu0 %v2129, 20
    %v2805 = vpop.permute.xlu0 %2804
    %2806 = vrot.lane.b32.xlu0 %v2130, 20
    %v2807 = vpop.permute.xlu0 %2806
    %2808 = vrot.lane.b32.xlu0 %v2131, 20
    %v2809 = vpop.permute.xlu0 %2808
    %2810 = vrot.lane.b32.xlu0 %v2132, 20
    %v2811 = vpop.permute.xlu0 %2810
    %2812 = vrot.lane.b32.xlu0 %v2133, 20
    %v2813 = vpop.permute.xlu0 %2812
    %2814 = vrot.lane.b32.xlu0 %v2134, 20
    %v2815 = vpop.permute.xlu0 %2814
    %2816 = vrot.lane.b32.xlu0 %v2135, 20
    %v2817 = vpop.permute.xlu0 %2816
    %2818 = vrot.lane.b32.xlu0 %v2136, 20
    %v2819 = vpop.permute.xlu0 %2818
    %2820 = vrot.lane.b32.xlu0 %v2137, 20
    %v2821 = vpop.permute.xlu0 %2820
    %2822 = vrot.lane.b32.xlu0 %v2138, 20
    %v2823 = vpop.permute.xlu0 %2822
    %2824 = vrot.lane.b32.xlu0 %v2139, 20
    %v2825 = vpop.permute.xlu0 %2824
    %2826 = vrot.lane.b32.xlu0 %v2140, 20
    %v2827 = vpop.permute.xlu0 %2826
    %2828 = vrot.lane.b32.xlu0 %v2141, 20
    %v2829 = vpop.permute.xlu0 %2828
    %2830 = vrot.lane.b32.xlu0 %v2142, 20
    %v2831 = vpop.permute.xlu0 %2830
    %2832 = vrot.lane.b32.xlu0 %v2143, 20
    %v2833 = vpop.permute.xlu0 %2832
    %2834 = vrot.lane.b32.xlu0 %v2144, 20
    %v2835 = vpop.permute.xlu0 %2834
    %2836 = vrot.lane.b32.xlu0 %v2145, 20
    %v2837 = vpop.permute.xlu0 %2836
    %2838 = vrot.lane.b32.xlu0 %v2146, 20
    %v2839 = vpop.permute.xlu0 %2838
    %2840 = vrot.lane.b32.xlu0 %v2147, 20
    %v2841 = vpop.permute.xlu0 %2840
    %2842 = vrot.lane.b32.xlu0 %v2148, 20
    %v2843 = vpop.permute.xlu0 %2842
    %2844 = vrot.lane.b32.xlu0 %v2149, 20
    %v2845 = vpop.permute.xlu0 %2844
    %2846 = vrot.lane.b32.xlu0 %v2150, 20
    %v2847 = vpop.permute.xlu0 %2846
    %2848 = vrot.lane.b32.xlu0 %v2151, 20
    %v2849 = vpop.permute.xlu0 %2848
    %2850 = vrot.lane.b32.xlu0 %v2152, 20
    %v2851 = vpop.permute.xlu0 %2850
    %2852 = vrot.lane.b32.xlu0 %v2153, 20
    %v2853 = vpop.permute.xlu0 %2852
    %2854 = vrot.lane.b32.xlu0 %v2154, 20
    %v2855 = vpop.permute.xlu0 %2854
    %2856 = vrot.lane.b32.xlu0 %v2155, 20
    %v2857 = vpop.permute.xlu0 %2856
    %2858 = vrot.lane.b32.xlu0 %v2156, 20
    %v2859 = vpop.permute.xlu0 %2858
    %2860 = vrot.lane.b32.xlu0 %v2157, 20
    %v2861 = vpop.permute.xlu0 %2860
    %2862 = vrot.lane.b32.xlu0 %v2158, 20
    %v2863 = vpop.permute.xlu0 %2862
    %2928 = vrot.lane.b32.xlu0 %v2160, 24
    %v2929 = vpop.permute.xlu0 %2928
    %2930 = vrot.lane.b32.xlu0 %v2161, 24
    %v2931 = vpop.permute.xlu0 %2930
    %2932 = vrot.lane.b32.xlu0 %v2162, 24
    %v2933 = vpop.permute.xlu0 %2932
    %2934 = vrot.lane.b32.xlu0 %v2163, 24
    %v2935 = vpop.permute.xlu0 %2934
    %2936 = vrot.lane.b32.xlu0 %v2164, 24
    %v2937 = vpop.permute.xlu0 %2936
    %2938 = vrot.lane.b32.xlu0 %v2165, 24
    %v2939 = vpop.permute.xlu0 %2938
    %2940 = vrot.lane.b32.xlu0 %v2166, 24
    %v2941 = vpop.permute.xlu0 %2940
    %2942 = vrot.lane.b32.xlu0 %v2167, 24
    %v2943 = vpop.permute.xlu0 %2942
    %2944 = vrot.lane.b32.xlu0 %v2168, 24
    %v2945 = vpop.permute.xlu0 %2944
    %2946 = vrot.lane.b32.xlu0 %v2169, 24
    %v2947 = vpop.permute.xlu0 %2946
    %2948 = vrot.lane.b32.xlu0 %v2170, 24
    %v2949 = vpop.permute.xlu0 %2948
    %2950 = vrot.lane.b32.xlu0 %v2171, 24
    %v2951 = vpop.permute.xlu0 %2950
    %2952 = vrot.lane.b32.xlu0 %v2172, 24
    %v2953 = vpop.permute.xlu0 %2952
    %2954 = vrot.lane.b32.xlu0 %v2173, 24
    %v2955 = vpop.permute.xlu0 %2954
    %2956 = vrot.lane.b32.xlu0 %v2174, 24
    %v2957 = vpop.permute.xlu0 %2956
    %2958 = vrot.lane.b32.xlu0 %v2175, 24
    %v2959 = vpop.permute.xlu0 %2958
    %2960 = vrot.lane.b32.xlu0 %v2176, 24
    %v2961 = vpop.permute.xlu0 %2960
    %2962 = vrot.lane.b32.xlu0 %v2177, 24
    %v2963 = vpop.permute.xlu0 %2962
    %2964 = vrot.lane.b32.xlu0 %v2178, 24
    %v2965 = vpop.permute.xlu0 %2964
    %2966 = vrot.lane.b32.xlu0 %v2179, 24
    %v2967 = vpop.permute.xlu0 %2966
    %2968 = vrot.lane.b32.xlu0 %v2180, 24
    %v2969 = vpop.permute.xlu0 %2968
    %2970 = vrot.lane.b32.xlu0 %v2181, 24
    %v2971 = vpop.permute.xlu0 %2970
    %2972 = vrot.lane.b32.xlu0 %v2182, 24
    %v2973 = vpop.permute.xlu0 %2972
    %2974 = vrot.lane.b32.xlu0 %v2183, 24
    %v2975 = vpop.permute.xlu0 %2974
    %2976 = vrot.lane.b32.xlu0 %v2184, 24
    %v2977 = vpop.permute.xlu0 %2976
    %2978 = vrot.lane.b32.xlu0 %v2185, 24
    %v2979 = vpop.permute.xlu0 %2978
    %2980 = vrot.lane.b32.xlu0 %v2186, 24
    %v2981 = vpop.permute.xlu0 %2980
    %2982 = vrot.lane.b32.xlu0 %v2187, 24
    %v2983 = vpop.permute.xlu0 %2982
    %2984 = vrot.lane.b32.xlu0 %v2188, 24
    %v2985 = vpop.permute.xlu0 %2984
    %2986 = vrot.lane.b32.xlu0 %v2189, 24
    %v2987 = vpop.permute.xlu0 %2986
    %2988 = vrot.lane.b32.xlu0 %v2190, 24
    %v2989 = vpop.permute.xlu0 %2988
    %2990 = vrot.lane.b32.xlu0 %v2191, 24
    %v2991 = vpop.permute.xlu0 %2990
    %3056 = vrot.lane.b32.xlu0 %v2192, 28
    %v3057 = vpop.permute.xlu0 %3056
    %3058 = vrot.lane.b32.xlu0 %v2193, 28
    %v3059 = vpop.permute.xlu0 %3058
    %3060 = vrot.lane.b32.xlu0 %v2194, 28
    %v3061 = vpop.permute.xlu0 %3060
    %3062 = vrot.lane.b32.xlu0 %v2195, 28
    %v3063 = vpop.permute.xlu0 %3062
    %3064 = vrot.lane.b32.xlu0 %v2196, 28
    %v3065 = vpop.permute.xlu0 %3064
    %3066 = vrot.lane.b32.xlu0 %v2197, 28
    %v3067 = vpop.permute.xlu0 %3066
    %3068 = vrot.lane.b32.xlu0 %v2198, 28
    %v3069 = vpop.permute.xlu0 %3068
    %3070 = vrot.lane.b32.xlu0 %v2199, 28
    %v3071 = vpop.permute.xlu0 %3070
    %3072 = vrot.lane.b32.xlu0 %v2200, 28
    %v3073 = vpop.permute.xlu0 %3072
    %3074 = vrot.lane.b32.xlu0 %v2201, 28
    %v3075 = vpop.permute.xlu0 %3074
    %3076 = vrot.lane.b32.xlu0 %v2202, 28
    %v3077 = vpop.permute.xlu0 %3076
    %3078 = vrot.lane.b32.xlu0 %v2203, 28
    %v3079 = vpop.permute.xlu0 %3078
    %3080 = vrot.lane.b32.xlu0 %v2204, 28
    %v3081 = vpop.permute.xlu0 %3080
    %3082 = vrot.lane.b32.xlu0 %v2205, 28
    %v3083 = vpop.permute.xlu0 %3082
    %3084 = vrot.lane.b32.xlu0 %v2206, 28
    %v3085 = vpop.permute.xlu0 %3084
    %3086 = vrot.lane.b32.xlu0 %v2207, 28
    %v3087 = vpop.permute.xlu0 %3086
    %3088 = vrot.lane.b32.xlu0 %v2208, 28
    %v3089 = vpop.permute.xlu0 %3088
    %3090 = vrot.lane.b32.xlu0 %v2209, 28
    %v3091 = vpop.permute.xlu0 %3090
    %3092 = vrot.lane.b32.xlu0 %v2210, 28
    %v3093 = vpop.permute.xlu0 %3092
    %3094 = vrot.lane.b32.xlu0 %v2211, 28
    %v3095 = vpop.permute.xlu0 %3094
    %3096 = vrot.lane.b32.xlu0 %v2212, 28
    %v3097 = vpop.permute.xlu0 %3096
    %3098 = vrot.lane.b32.xlu0 %v2213, 28
    %v3099 = vpop.permute.xlu0 %3098
    %3100 = vrot.lane.b32.xlu0 %v2214, 28
    %v3101 = vpop.permute.xlu0 %3100
    %3102 = vrot.lane.b32.xlu0 %v2215, 28
    %v3103 = vpop.permute.xlu0 %3102
    %3104 = vrot.lane.b32.xlu0 %v2216, 28
    %v3105 = vpop.permute.xlu0 %3104
    %3106 = vrot.lane.b32.xlu0 %v2217, 28
    %v3107 = vpop.permute.xlu0 %3106
    %3108 = vrot.lane.b32.xlu0 %v2218, 28
    %v3109 = vpop.permute.xlu0 %3108
    %3110 = vrot.lane.b32.xlu0 %v2219, 28
    %v3111 = vpop.permute.xlu0 %3110
    %3112 = vrot.lane.b32.xlu0 %v2220, 28
    %v3113 = vpop.permute.xlu0 %3112
    %3114 = vrot.lane.b32.xlu0 %v2221, 28
    %v3115 = vpop.permute.xlu0 %3114
    %3116 = vrot.lane.b32.xlu0 %v2222, 28
    %v3117 = vpop.permute.xlu0 %3116
    %3118 = vrot.lane.b32.xlu0 %v2223, 28
    %v3119 = vpop.permute.xlu0 %3118
    %3184 = vrot.lane.b32.xlu0 %v2224, 32
    %v3185 = vpop.permute.xlu0 %3184
    %3186 = vrot.lane.b32.xlu0 %v2225, 32
    %v3187 = vpop.permute.xlu0 %3186
    %3188 = vrot.lane.b32.xlu0 %v2226, 32
    %v3189 = vpop.permute.xlu0 %3188
    %3190 = vrot.lane.b32.xlu0 %v2227, 32
    %v3191 = vpop.permute.xlu0 %3190
    %3192 = vrot.lane.b32.xlu0 %v2228, 32
    %v3193 = vpop.permute.xlu0 %3192
    %3194 = vrot.lane.b32.xlu0 %v2229, 32
    %v3195 = vpop.permute.xlu0 %3194
    %3196 = vrot.lane.b32.xlu0 %v2230, 32
    %v3197 = vpop.permute.xlu0 %3196
    %3198 = vrot.lane.b32.xlu0 %v2231, 32
    %v3199 = vpop.permute.xlu0 %3198
    %3200 = vrot.lane.b32.xlu0 %v2232, 32
    %v3201 = vpop.permute.xlu0 %3200
    %3202 = vrot.lane.b32.xlu0 %v2233, 32
    %v3203 = vpop.permute.xlu0 %3202
    %3204 = vrot.lane.b32.xlu0 %v2234, 32
    %v3205 = vpop.permute.xlu0 %3204
    %3206 = vrot.lane.b32.xlu0 %v2235, 32
    %v3207 = vpop.permute.xlu0 %3206
    %3208 = vrot.lane.b32.xlu0 %v2236, 32
    %v3209 = vpop.permute.xlu0 %3208
    %3210 = vrot.lane.b32.xlu0 %v2237, 32
    %v3211 = vpop.permute.xlu0 %3210
    %3212 = vrot.lane.b32.xlu0 %v2238, 32
    %v3213 = vpop.permute.xlu0 %3212
    %3214 = vrot.lane.b32.xlu0 %v2239, 32
    %v3215 = vpop.permute.xlu0 %3214
    %3216 = vrot.lane.b32.xlu0 %v2240, 32
    %v3217 = vpop.permute.xlu0 %3216
    %3218 = vrot.lane.b32.xlu0 %v2241, 32
    %v3219 = vpop.permute.xlu0 %3218
    %3220 = vrot.lane.b32.xlu0 %v2242, 32
    %v3221 = vpop.permute.xlu0 %3220
    %3222 = vrot.lane.b32.xlu0 %v2243, 32
    %v3223 = vpop.permute.xlu0 %3222
    %3224 = vrot.lane.b32.xlu0 %v2244, 32
    %v3225 = vpop.permute.xlu0 %3224
    %3226 = vrot.lane.b32.xlu0 %v2245, 32
    %v3227 = vpop.permute.xlu0 %3226
    %3228 = vrot.lane.b32.xlu0 %v2246, 32
    %v3229 = vpop.permute.xlu0 %3228
    %3230 = vrot.lane.b32.xlu0 %v2247, 32
    %v3231 = vpop.permute.xlu0 %3230
    %3232 = vrot.lane.b32.xlu0 %v2248, 32
    %v3233 = vpop.permute.xlu0 %3232
    %3234 = vrot.lane.b32.xlu0 %v2249, 32
    %v3235 = vpop.permute.xlu0 %3234
    %3236 = vrot.lane.b32.xlu0 %v2250, 32
    %v3237 = vpop.permute.xlu0 %3236
    %3238 = vrot.lane.b32.xlu0 %v2251, 32
    %v3239 = vpop.permute.xlu0 %3238
    %3240 = vrot.lane.b32.xlu0 %v2252, 32
    %v3241 = vpop.permute.xlu0 %3240
    %3242 = vrot.lane.b32.xlu0 %v2253, 32
    %v3243 = vpop.permute.xlu0 %3242
    %3244 = vrot.lane.b32.xlu0 %v2254, 32
    %v3245 = vpop.permute.xlu0 %3244
    %3246 = vrot.lane.b32.xlu0 %v2255, 32
    %v3247 = vpop.permute.xlu0 %3246
    %v3280 = vsel %vm1342, %v1966, %v2289
    %v3281 = vsel %vm1342, %v1967, %v2291
    %v3282 = vsel %vm1342, %v1968, %v2293
    %v3283 = vsel %vm1342, %v1969, %v2295
    %v3284 = vsel %vm1342, %v1970, %v2297
    %v3285 = vsel %vm1342, %v1971, %v2299
    %v3286 = vsel %vm1342, %v1972, %v2301
    %v3287 = vsel %vm1342, %v1973, %v2303
    %v3288 = vsel %vm1342, %v1974, %v2305
    %v3289 = vsel %vm1342, %v1975, %v2307
    %v3290 = vsel %vm1342, %v1976, %v2309
    %v3291 = vsel %vm1342, %v1977, %v2311
    %v3292 = vsel %vm1342, %v1978, %v2313
    %v3293 = vsel %vm1342, %v1979, %v2315
    %v3294 = vsel %vm1342, %v1980, %v2317
    %v3295 = vsel %vm1342, %v1981, %v2319
    %v3296 = vsel %vm1342, %v1982, %v2321
    %v3297 = vsel %vm1342, %v1983, %v2323
    %v3298 = vsel %vm1342, %v1984, %v2325
    %v3299 = vsel %vm1342, %v1985, %v2327
    %v3300 = vsel %vm1342, %v1986, %v2329
    %v3301 = vsel %vm1342, %v1987, %v2331
    %v3302 = vsel %vm1342, %v1988, %v2333
    %v3303 = vsel %vm1342, %v1989, %v2335
    %v3304 = vsel %vm1342, %v1990, %v2337
    %v3305 = vsel %vm1342, %v1991, %v2339
    %v3306 = vsel %vm1342, %v1992, %v2341
    %v3307 = vsel %vm1342, %v1993, %v2343
    %v3308 = vsel %vm1342, %v1994, %v2345
    %v3309 = vsel %vm1342, %v1995, %v2347
    %v3310 = vsel %vm1342, %v1996, %v2349
    %v3311 = vsel %vm1342, %v1997, %v2351
    %v3312 = vsel %vm1375, %v3280, %v2417
    %v3313 = vsel %vm1375, %v3281, %v2419
    %v3314 = vsel %vm1375, %v3282, %v2421
    %v3315 = vsel %vm1375, %v3283, %v2423
    %v3316 = vsel %vm1375, %v3284, %v2425
    %v3317 = vsel %vm1375, %v3285, %v2427
    %v3318 = vsel %vm1375, %v3286, %v2429
    %v3319 = vsel %vm1375, %v3287, %v2431
    %v3320 = vsel %vm1375, %v3288, %v2433
    %v3321 = vsel %vm1375, %v3289, %v2435
    %v3322 = vsel %vm1375, %v3290, %v2437
    %v3323 = vsel %vm1375, %v3291, %v2439
    %v3324 = vsel %vm1375, %v3292, %v2441
    %v3325 = vsel %vm1375, %v3293, %v2443
    %v3326 = vsel %vm1375, %v3294, %v2445
    %v3327 = vsel %vm1375, %v3295, %v2447
    %v3328 = vsel %vm1375, %v3296, %v2449
    %v3329 = vsel %vm1375, %v3297, %v2451
    %v3330 = vsel %vm1375, %v3298, %v2453
    %v3331 = vsel %vm1375, %v3299, %v2455
    %v3332 = vsel %vm1375, %v3300, %v2457
    %v3333 = vsel %vm1375, %v3301, %v2459
    %v3334 = vsel %vm1375, %v3302, %v2461
    %v3335 = vsel %vm1375, %v3303, %v2463
    %v3336 = vsel %vm1375, %v3304, %v2465
    %v3337 = vsel %vm1375, %v3305, %v2467
    %v3338 = vsel %vm1375, %v3306, %v2469
    %v3339 = vsel %vm1375, %v3307, %v2471
    %v3340 = vsel %vm1375, %v3308, %v2473
    %v3341 = vsel %vm1375, %v3309, %v2475
    %v3342 = vsel %vm1375, %v3310, %v2477
    %v3343 = vsel %vm1375, %v3311, %v2479
    %v3344 = vsel %vm1408, %v3312, %v2545
    %v3345 = vsel %vm1408, %v3313, %v2547
    %v3346 = vsel %vm1408, %v3314, %v2549
    %v3347 = vsel %vm1408, %v3315, %v2551
    %v3348 = vsel %vm1408, %v3316, %v2553
    %v3349 = vsel %vm1408, %v3317, %v2555
    %v3350 = vsel %vm1408, %v3318, %v2557
    %v3351 = vsel %vm1408, %v3319, %v2559
    %v3352 = vsel %vm1408, %v3320, %v2561
    %v3353 = vsel %vm1408, %v3321, %v2563
    %v3354 = vsel %vm1408, %v3322, %v2565
    %v3355 = vsel %vm1408, %v3323, %v2567
    %v3356 = vsel %vm1408, %v3324, %v2569
    %v3357 = vsel %vm1408, %v3325, %v2571
    %v3358 = vsel %vm1408, %v3326, %v2573
    %v3359 = vsel %vm1408, %v3327, %v2575
    %v3360 = vsel %vm1408, %v3328, %v2577
    %v3361 = vsel %vm1408, %v3329, %v2579
    %v3362 = vsel %vm1408, %v3330, %v2581
    %v3363 = vsel %vm1408, %v3331, %v2583
    %v3364 = vsel %vm1408, %v3332, %v2585
    %v3365 = vsel %vm1408, %v3333, %v2587
    %v3366 = vsel %vm1408, %v3334, %v2589
    %v3367 = vsel %vm1408, %v3335, %v2591
    %v3368 = vsel %vm1408, %v3336, %v2593
    %v3369 = vsel %vm1408, %v3337, %v2595
    %v3370 = vsel %vm1408, %v3338, %v2597
    %v3371 = vsel %vm1408, %v3339, %v2599
    %v3372 = vsel %vm1408, %v3340, %v2601
    %v3373 = vsel %vm1408, %v3341, %v2603
    %v3374 = vsel %vm1408, %v3342, %v2605
    %v3375 = vsel %vm1408, %v3343, %v2607
    %v3376 = vsel %vm1441, %v3344, %v2673
    %v3377 = vsel %vm1441, %v3345, %v2675
    %v3378 = vsel %vm1441, %v3346, %v2677
    %v3379 = vsel %vm1441, %v3347, %v2679
    %v3380 = vsel %vm1441, %v3348, %v2681
    %v3381 = vsel %vm1441, %v3349, %v2683
    %v3382 = vsel %vm1441, %v3350, %v2685
    %v3383 = vsel %vm1441, %v3351, %v2687
    %v3384 = vsel %vm1441, %v3352, %v2689
    %v3385 = vsel %vm1441, %v3353, %v2691
    %v3386 = vsel %vm1441, %v3354, %v2693
    %v3387 = vsel %vm1441, %v3355, %v2695
    %v3388 = vsel %vm1441, %v3356, %v2697
    %v3389 = vsel %vm1441, %v3357, %v2699
    %v3390 = vsel %vm1441, %v3358, %v2701
    %v3391 = vsel %vm1441, %v3359, %v2703
    %v3392 = vsel %vm1441, %v3360, %v2705
    %v3393 = vsel %vm1441, %v3361, %v2707
    %v3394 = vsel %vm1441, %v3362, %v2709
    %v3395 = vsel %vm1441, %v3363, %v2711
    %v3396 = vsel %vm1441, %v3364, %v2713
    %v3397 = vsel %vm1441, %v3365, %v2715
    %v3398 = vsel %vm1441, %v3366, %v2717
    %v3399 = vsel %vm1441, %v3367, %v2719
    %v3400 = vsel %vm1441, %v3368, %v2721
    %v3401 = vsel %vm1441, %v3369, %v2723
    %v3402 = vsel %vm1441, %v3370, %v2725
    %v3403 = vsel %vm1441, %v3371, %v2727
    %v3404 = vsel %vm1441, %v3372, %v2729
    %v3405 = vsel %vm1441, %v3373, %v2731
    %v3406 = vsel %vm1441, %v3374, %v2733
    %v3407 = vsel %vm1441, %v3375, %v2735
    %v3408 = vsel %vm1474, %v3376, %v2801
    %v3409 = vsel %vm1474, %v3377, %v2803
    %v3410 = vsel %vm1474, %v3378, %v2805
    %v3411 = vsel %vm1474, %v3379, %v2807
    %v3412 = vsel %vm1474, %v3380, %v2809
    %v3413 = vsel %vm1474, %v3381, %v2811
    %v3414 = vsel %vm1474, %v3382, %v2813
    %v3415 = vsel %vm1474, %v3383, %v2815
    %v3416 = vsel %vm1474, %v3384, %v2817
    %v3417 = vsel %vm1474, %v3385, %v2819
    %v3418 = vsel %vm1474, %v3386, %v2821
    %v3419 = vsel %vm1474, %v3387, %v2823
    %v3420 = vsel %vm1474, %v3388, %v2825
    %v3421 = vsel %vm1474, %v3389, %v2827
    %v3422 = vsel %vm1474, %v3390, %v2829
    %v3423 = vsel %vm1474, %v3391, %v2831
    %v3424 = vsel %vm1474, %v3392, %v2833
    %v3425 = vsel %vm1474, %v3393, %v2835
    %v3426 = vsel %vm1474, %v3394, %v2837
    %v3427 = vsel %vm1474, %v3395, %v2839
    %v3428 = vsel %vm1474, %v3396, %v2841
    %v3429 = vsel %vm1474, %v3397, %v2843
    %v3430 = vsel %vm1474, %v3398, %v2845
    %v3431 = vsel %vm1474, %v3399, %v2847
    %v3432 = vsel %vm1474, %v3400, %v2849
    %v3433 = vsel %vm1474, %v3401, %v2851
    %v3434 = vsel %vm1474, %v3402, %v2853
    %v3435 = vsel %vm1474, %v3403, %v2855
    %v3436 = vsel %vm1474, %v3404, %v2857
    %v3437 = vsel %vm1474, %v3405, %v2859
    %v3438 = vsel %vm1474, %v3406, %v2861
    %v3439 = vsel %vm1474, %v3407, %v2863
    %v3440 = vsel %vm1507, %v3408, %v2929
    %v3441 = vsel %vm1507, %v3409, %v2931
    %v3442 = vsel %vm1507, %v3410, %v2933
    %v3443 = vsel %vm1507, %v3411, %v2935
    %v3444 = vsel %vm1507, %v3412, %v2937
    %v3445 = vsel %vm1507, %v3413, %v2939
    %v3446 = vsel %vm1507, %v3414, %v2941
    %v3447 = vsel %vm1507, %v3415, %v2943
    %v3448 = vsel %vm1507, %v3416, %v2945
    %v3449 = vsel %vm1507, %v3417, %v2947
    %v3450 = vsel %vm1507, %v3418, %v2949
    %v3451 = vsel %vm1507, %v3419, %v2951
    %v3452 = vsel %vm1507, %v3420, %v2953
    %v3453 = vsel %vm1507, %v3421, %v2955
    %v3454 = vsel %vm1507, %v3422, %v2957
    %v3455 = vsel %vm1507, %v3423, %v2959
    %v3456 = vsel %vm1507, %v3424, %v2961
    %v3457 = vsel %vm1507, %v3425, %v2963
    %v3458 = vsel %vm1507, %v3426, %v2965
    %v3459 = vsel %vm1507, %v3427, %v2967
    %v3460 = vsel %vm1507, %v3428, %v2969
    %v3461 = vsel %vm1507, %v3429, %v2971
    %v3462 = vsel %vm1507, %v3430, %v2973
    %v3463 = vsel %vm1507, %v3431, %v2975
    %v3464 = vsel %vm1507, %v3432, %v2977
    %v3465 = vsel %vm1507, %v3433, %v2979
    %v3466 = vsel %vm1507, %v3434, %v2981
    %v3467 = vsel %vm1507, %v3435, %v2983
    %v3468 = vsel %vm1507, %v3436, %v2985
    %v3469 = vsel %vm1507, %v3437, %v2987
    %v3470 = vsel %vm1507, %v3438, %v2989
    %v3471 = vsel %vm1507, %v3439, %v2991
    %v3472 = vsel %vm1540, %v3440, %v3057
    %v3473 = vsel %vm1540, %v3441, %v3059
    %v3474 = vsel %vm1540, %v3442, %v3061
    %v3475 = vsel %vm1540, %v3443, %v3063
    %v3476 = vsel %vm1540, %v3444, %v3065
    %v3477 = vsel %vm1540, %v3445, %v3067
    %v3478 = vsel %vm1540, %v3446, %v3069
    %v3479 = vsel %vm1540, %v3447, %v3071
    %v3480 = vsel %vm1540, %v3448, %v3073
    %v3481 = vsel %vm1540, %v3449, %v3075
    %v3482 = vsel %vm1540, %v3450, %v3077
    %v3483 = vsel %vm1540, %v3451, %v3079
    %v3484 = vsel %vm1540, %v3452, %v3081
    %v3485 = vsel %vm1540, %v3453, %v3083
    %v3486 = vsel %vm1540, %v3454, %v3085
    %v3487 = vsel %vm1540, %v3455, %v3087
    %v3488 = vsel %vm1540, %v3456, %v3089
    %v3489 = vsel %vm1540, %v3457, %v3091
    %v3490 = vsel %vm1540, %v3458, %v3093
    %v3491 = vsel %vm1540, %v3459, %v3095
    %v3492 = vsel %vm1540, %v3460, %v3097
    %v3493 = vsel %vm1540, %v3461, %v3099
    %v3494 = vsel %vm1540, %v3462, %v3101
    %v3495 = vsel %vm1540, %v3463, %v3103
    %v3496 = vsel %vm1540, %v3464, %v3105
    %v3497 = vsel %vm1540, %v3465, %v3107
    %v3498 = vsel %vm1540, %v3466, %v3109
    %v3499 = vsel %vm1540, %v3467, %v3111
    %v3500 = vsel %vm1540, %v3468, %v3113
    %v3501 = vsel %vm1540, %v3469, %v3115
    %v3502 = vsel %vm1540, %v3470, %v3117
    %v3503 = vsel %vm1540, %v3471, %v3119
    %v3504 = vsel %vm1573, %v3472, %v3185
    %v3505 = vsel %vm1573, %v3473, %v3187
    %v3506 = vsel %vm1573, %v3474, %v3189
    %v3507 = vsel %vm1573, %v3475, %v3191
    %v3508 = vsel %vm1573, %v3476, %v3193
    %v3509 = vsel %vm1573, %v3477, %v3195
    %v3510 = vsel %vm1573, %v3478, %v3197
    %v3511 = vsel %vm1573, %v3479, %v3199
    %v3512 = vsel %vm1573, %v3480, %v3201
    %v3513 = vsel %vm1573, %v3481, %v3203
    %v3514 = vsel %vm1573, %v3482, %v3205
    %v3515 = vsel %vm1573, %v3483, %v3207
    %v3516 = vsel %vm1573, %v3484, %v3209
    %v3517 = vsel %vm1573, %v3485, %v3211
    %v3518 = vsel %vm1573, %v3486, %v3213
    %v3519 = vsel %vm1573, %v3487, %v3215
    %v3520 = vsel %vm1573, %v3488, %v3217
    %v3521 = vsel %vm1573, %v3489, %v3219
    %v3522 = vsel %vm1573, %v3490, %v3221
    %v3523 = vsel %vm1573, %v3491, %v3223
    %v3524 = vsel %vm1573, %v3492, %v3225
    %v3525 = vsel %vm1573, %v3493, %v3227
    %v3526 = vsel %vm1573, %v3494, %v3229
    %v3527 = vsel %vm1573, %v3495, %v3231
    %v3528 = vsel %vm1573, %v3496, %v3233
    %v3529 = vsel %vm1573, %v3497, %v3235
    %v3530 = vsel %vm1573, %v3498, %v3237
    %v3531 = vsel %vm1573, %v3499, %v3239
    %v3532 = vsel %vm1573, %v3500, %v3241
    %v3533 = vsel %vm1573, %v3501, %v3243
    %v3534 = vsel %vm1573, %v3502, %v3245
    %v3535 = vsel %vm1573, %v3503, %v3247
    %v3536 = vpack.c.bf16 %v3505, %v3504
    %v3537 = vpack.c.bf16 %v3507, %v3506
    %v3538 = vpack.c.bf16 %v3509, %v3508
    %v3539 = vpack.c.bf16 %v3511, %v3510
    %v3540 = vpack.c.bf16 %v3513, %v3512
    %v3541 = vpack.c.bf16 %v3515, %v3514
    %v3542 = vpack.c.bf16 %v3517, %v3516
    %v3543 = vpack.c.bf16 %v3519, %v3518
    %v3544 = vpack.c.bf16 %v3521, %v3520
    %v3545 = vpack.c.bf16 %v3523, %v3522
    %v3546 = vpack.c.bf16 %v3525, %v3524
    %v3547 = vpack.c.bf16 %v3527, %v3526
    %v3548 = vpack.c.bf16 %v3529, %v3528
    %v3549 = vpack.c.bf16 %v3531, %v3530
    %v3550 = vpack.c.bf16 %v3533, %v3532
    %v3551 = vpack.c.bf16 %v3535, %v3534
    %v3553 = vsel %vm1649, %v3536, 0
    %v3556 = vsel %vm1649, %v3537, 0
    %v3559 = vsel %vm1649, %v3538, 0
    %v3562 = vsel %vm1649, %v3539, 0
    %v3565 = vsel %vm1649, %v3540, 0
    %v3568 = vsel %vm1649, %v3541, 0
    %v3571 = vsel %vm1649, %v3542, 0
    %v3574 = vsel %vm1649, %v3543, 0
    %v3577 = vsel %vm1649, %v3544, 0
    %v3580 = vsel %vm1649, %v3545, 0
    %v3583 = vsel %vm1649, %v3546, 0
    %v3586 = vsel %vm1649, %v3547, 0
    %v3589 = vsel %vm1649, %v3548, 0
    %v3592 = vsel %vm1649, %v3549, 0
    %v3595 = vsel %vm1649, %v3550, 0
    %v3598 = vsel %vm1649, %v3551, 0
    %3600 = vmatprep.subr.bf16.mxu0 0
    %3601 = vmatpush1.bf16.msra.mxu0 %v1644
    %3602 = vmatprep.subr.bf16.mxu0 0
    %3603 = vmatpush1.bf16.msra.mxu0 %v1645
    %3604 = vmatprep.subr.bf16.mxu0 0
    %3605 = vmatpush1.bf16.msra.mxu0 %v1700
    %3606 = vmatprep.subr.bf16.mxu0 0
    %3607 = vmatpush1.bf16.msra.mxu0 0
    %3608 = vmatprep.subr.bf16.mxu0 0
    %3609 = vmatpush1.bf16.msra.mxu0 0
    %3610 = vmatprep.subr.bf16.mxu0 0
    %3611 = vmatpush1.bf16.msra.mxu0 0
    %3612 = vmatprep.subr.bf16.mxu0 0
    %3613 = vmatpush1.bf16.msra.mxu0 0
    %3614 = vmatprep.subr.bf16.mxu0 0
    %3615 = vmatpush1.bf16.msra.mxu0 0
    %3616 = vmatprep.subr.bf16.mxu0 0
    %3617 = vmatpush1.bf16.msra.mxu0 0
    %3618 = vmatprep.subr.bf16.mxu0 0
    %3619 = vmatpush1.bf16.msra.mxu0 0
    %3620 = vmatprep.subr.bf16.mxu0 0
    %3621 = vmatpush1.bf16.msra.mxu0 0
    %3622 = vmatprep.subr.bf16.mxu0 0
    %3623 = vmatpush1.bf16.msra.mxu0 0
    %3624 = vmatprep.subr.bf16.mxu0 0
    %3625 = vmatpush1.bf16.msra.mxu0 0
    %3626 = vmatprep.subr.bf16.mxu0 0
    %3627 = vmatpush1.bf16.msra.mxu0 0
    %3628 = vmatprep.subr.bf16.mxu0 0
    %3629 = vmatpush1.bf16.msra.mxu0 0
    %3630 = vmatprep.subr.bf16.mxu0 0
    %3631 = vmatpush1.bf16.msra.mxu0 0
    %3632 = vmatprep.mubr.bf16.mxu0 0
    %3633 = vmatmul.mubr.bf16.gmra.mrb[0].mxu0 %v3553
    %v3634 = vpop.f32.mrb[0].mxu0
    %v3635 = vadd.f32 %v1632, %v3634
    %v3636 = vpop.f32.mrb[0].mxu0
    %v3637 = vpop.f32.mrb[0].mxu0
    %v3638 = vadd.f32 %v1632, %v3637
    %v3639 = vpop.f32.mrb[0].mxu0
    %3640 = vmatprep.mubr.bf16.mxu0 0
    %3641 = vmatmul.mubr.bf16.gmra.mrb[0].mxu0 %v3556
    %v3642 = vpop.f32.mrb[0].mxu0
    %v3643 = vadd.f32 %v1632, %v3642
    %v3644 = vpop.f32.mrb[0].mxu0
    %v3645 = vpop.f32.mrb[0].mxu0
    %v3646 = vadd.f32 %v1632, %v3645
    %v3647 = vpop.f32.mrb[0].mxu0
    %3648 = vmatprep.mubr.bf16.mxu0 0
    %3649 = vmatmul.mubr.bf16.gmra.mrb[0].mxu0 %v3559
    %v3650 = vpop.f32.mrb[0].mxu0
    %v3651 = vadd.f32 %v1632, %v3650
    %v3652 = vpop.f32.mrb[0].mxu0
    %v3653 = vpop.f32.mrb[0].mxu0
    %v3654 = vadd.f32 %v1632, %v3653
    %v3655 = vpop.f32.mrb[0].mxu0
    %3656 = vmatprep.mubr.bf16.mxu0 0
    %3657 = vmatmul.mubr.bf16.gmra.mrb[0].mxu0 %v3562
    %v3658 = vpop.f32.mrb[0].mxu0
    %v3659 = vadd.f32 %v1632, %v3658
    %v3660 = vpop.f32.mrb[0].mxu0
    %v3661 = vpop.f32.mrb[0].mxu0
    %v3662 = vadd.f32 %v1632, %v3661
    %v3663 = vpop.f32.mrb[0].mxu0
    %3664 = vmatprep.mubr.bf16.mxu0 0
    %3665 = vmatmul.mubr.bf16.gmra.mrb[0].mxu0 %v3565
    %v3666 = vpop.f32.mrb[0].mxu0
    %v3667 = vadd.f32 %v1632, %v3666
    %v3668 = vpop.f32.mrb[0].mxu0
    %v3669 = vpop.f32.mrb[0].mxu0
    %v3670 = vadd.f32 %v1632, %v3669
    %v3671 = vpop.f32.mrb[0].mxu0
    %3672 = vmatprep.mubr.bf16.mxu0 0
    %3673 = vmatmul.mubr.bf16.gmra.mrb[0].mxu0 %v3568
    %v3674 = vpop.f32.mrb[0].mxu0
    %v3675 = vadd.f32 %v1632, %v3674
    %v3676 = vpop.f32.mrb[0].mxu0
    %v3677 = vpop.f32.mrb[0].mxu0
    %v3678 = vadd.f32 %v1632, %v3677
    %v3679 = vpop.f32.mrb[0].mxu0
    %3680 = vmatprep.mubr.bf16.mxu0 0
    %3681 = vmatmul.mubr.bf16.gmra.mrb[0].mxu0 %v3571
    %v3682 = vpop.f32.mrb[0].mxu0
    %v3683 = vadd.f32 %v1632, %v3682
    %v3684 = vpop.f32.mrb[0].mxu0
    %v3685 = vpop.f32.mrb[0].mxu0
    %v3686 = vadd.f32 %v1632, %v3685
    %v3687 = vpop.f32.mrb[0].mxu0
    %3688 = vmatprep.mubr.bf16.mxu0 0
    %3689 = vmatmul.mubr.bf16.gmra.mrb[0].mxu0 %v3574
    %v3690 = vpop.f32.mrb[0].mxu0
    %v3691 = vadd.f32 %v1632, %v3690
    %v3692 = vpop.f32.mrb[0].mxu0
    %v3693 = vpop.f32.mrb[0].mxu0
    %v3694 = vadd.f32 %v1632, %v3693
    %v3695 = vpop.f32.mrb[0].mxu0
    %3696 = vmatprep.mubr.bf16.mxu0 0
    %3697 = vmatmul.mubr.bf16.gmra.mrb[0].mxu0 %v3577
    %v3698 = vpop.f32.mrb[0].mxu0
    %v3699 = vadd.f32 %v1632, %v3698
    %v3700 = vpop.f32.mrb[0].mxu0
    %v3701 = vpop.f32.mrb[0].mxu0
    %v3702 = vadd.f32 %v1632, %v3701
    %v3703 = vpop.f32.mrb[0].mxu0
    %3704 = vmatprep.mubr.bf16.mxu0 0
    %3705 = vmatmul.mubr.bf16.gmra.mrb[0].mxu0 %v3580
    %v3706 = vpop.f32.mrb[0].mxu0
    %v3707 = vadd.f32 %v1632, %v3706
    %v3708 = vpop.f32.mrb[0].mxu0
    %v3709 = vpop.f32.mrb[0].mxu0
    %v3710 = vadd.f32 %v1632, %v3709
    %v3711 = vpop.f32.mrb[0].mxu0
    %3712 = vmatprep.mubr.bf16.mxu0 0
    %3713 = vmatmul.mubr.bf16.gmra.mrb[0].mxu0 %v3583
    %v3714 = vpop.f32.mrb[0].mxu0
    %v3715 = vadd.f32 %v1632, %v3714
    %v3716 = vpop.f32.mrb[0].mxu0
    %v3717 = vpop.f32.mrb[0].mxu0
    %v3718 = vadd.f32 %v1632, %v3717
    %v3719 = vpop.f32.mrb[0].mxu0
    %3720 = vmatprep.mubr.bf16.mxu0 0
    %3721 = vmatmul.mubr.bf16.gmra.mrb[0].mxu0 %v3586
    %v3722 = vpop.f32.mrb[0].mxu0
    %v3723 = vadd.f32 %v1632, %v3722
    %v3724 = vpop.f32.mrb[0].mxu0
    %v3725 = vpop.f32.mrb[0].mxu0
    %v3726 = vadd.f32 %v1632, %v3725
    %v3727 = vpop.f32.mrb[0].mxu0
    %3728 = vmatprep.mubr.bf16.mxu0 0
    %3729 = vmatmul.mubr.bf16.gmra.mrb[0].mxu0 %v3589
    %v3730 = vpop.f32.mrb[0].mxu0
    %v3731 = vadd.f32 %v1632, %v3730
    %v3732 = vpop.f32.mrb[0].mxu0
    %v3733 = vpop.f32.mrb[0].mxu0
    %v3734 = vadd.f32 %v1632, %v3733
    %v3735 = vpop.f32.mrb[0].mxu0
    %3736 = vmatprep.mubr.bf16.mxu0 0
    %3737 = vmatmul.mubr.bf16.gmra.mrb[0].mxu0 %v3592
    %v3738 = vpop.f32.mrb[0].mxu0
    %v3739 = vadd.f32 %v1632, %v3738
    %v3740 = vpop.f32.mrb[0].mxu0
    %v3741 = vpop.f32.mrb[0].mxu0
    %v3742 = vadd.f32 %v1632, %v3741
    %v3743 = vpop.f32.mrb[0].mxu0
    %3744 = vmatprep.mubr.bf16.mxu0 0
    %3745 = vmatmul.mubr.bf16.gmra.mrb[0].mxu0 %v3595
    %v3746 = vpop.f32.mrb[0].mxu0
    %v3747 = vadd.f32 %v1632, %v3746
    %v3748 = vpop.f32.mrb[0].mxu0
    %v3749 = vpop.f32.mrb[0].mxu0
    %v3750 = vadd.f32 %v1632, %v3749
    %v3751 = vpop.f32.mrb[0].mxu0
    %3752 = vmatprep.mubr.bf16.mxu0 0
    %3753 = vmatmul.mubr.bf16.gmra.mrb[0].mxu0 %v3598
    %v3754 = vpop.f32.mrb[0].mxu0
    %v3755 = vadd.f32 %v1632, %v3754
    %v3756 = vpop.f32.mrb[0].mxu0
    %v3757 = vpop.f32.mrb[0].mxu0
    %v3758 = vadd.f32 %v1632, %v3757
    %v3759 = vpop.f32.mrb[0].mxu0
    %3760 = vdwg.mxu0
    %v3761 = vmax.f32 %v3635, 0.0
    %v3762 = vmax.f32 %v3638, 0.0
    %v3763 = vmax.f32 %v3643, 0.0
    %v3764 = vmax.f32 %v3646, 0.0
    %v3765 = vmax.f32 %v3651, 0.0
    %v3766 = vmax.f32 %v3654, 0.0
    %v3767 = vmax.f32 %v3659, 0.0
    %v3768 = vmax.f32 %v3662, 0.0
    %v3769 = vmax.f32 %v3667, 0.0
    %v3770 = vmax.f32 %v3670, 0.0
    %v3771 = vmax.f32 %v3675, 0.0
    %v3772 = vmax.f32 %v3678, 0.0
    %v3773 = vmax.f32 %v3683, 0.0
    %v3774 = vmax.f32 %v3686, 0.0
    %v3775 = vmax.f32 %v3691, 0.0
    %v3776 = vmax.f32 %v3694, 0.0
    %v3777 = vmax.f32 %v3699, 0.0
    %v3778 = vmax.f32 %v3702, 0.0
    %v3779 = vmax.f32 %v3707, 0.0
    %v3780 = vmax.f32 %v3710, 0.0
    %v3781 = vmax.f32 %v3715, 0.0
    %v3782 = vmax.f32 %v3718, 0.0
    %v3783 = vmax.f32 %v3723, 0.0
    %v3784 = vmax.f32 %v3726, 0.0
    %v3785 = vmax.f32 %v3731, 0.0
    %v3786 = vmax.f32 %v3734, 0.0
    %v3787 = vmax.f32 %v3739, 0.0
    %v3788 = vmax.f32 %v3742, 0.0
    %v3789 = vmax.f32 %v3747, 0.0
    %v3790 = vmax.f32 %v3750, 0.0
    %v3791 = vmax.f32 %v3755, 0.0
    %v3792 = vmax.f32 %v3758, 0.0
    %v3793 = vsel %vm1441, %v3761, 0.0
    %v3794 = vsel %vm1441, %v3762, 0.0
    %v3795 = vadd.f32 %v3793, %v3794
    %v3796 = vsel %vm1441, %v3763, 0.0
    %v3797 = vadd.f32 %v3795, %v3796
    %v3798 = vsel %vm1441, %v3764, 0.0
    %v3799 = vadd.f32 %v3797, %v3798
    %v3800 = vsel %vm1441, %v3765, 0.0
    %v3801 = vadd.f32 %v3799, %v3800
    %v3802 = vsel %vm1441, %v3766, 0.0
    %v3803 = vadd.f32 %v3801, %v3802
    %v3804 = vsel %vm1441, %v3767, 0.0
    %v3805 = vadd.f32 %v3803, %v3804
    %v3806 = vsel %vm1441, %v3768, 0.0
    %v3807 = vadd.f32 %v3805, %v3806
    %v3808 = vsel %vm1441, %v3769, 0.0
    %v3809 = vadd.f32 %v3807, %v3808
    %v3810 = vsel %vm1441, %v3770, 0.0
    %v3811 = vadd.f32 %v3809, %v3810
    %v3812 = vsel %vm1441, %v3771, 0.0
    %v3813 = vadd.f32 %v3811, %v3812
    %v3814 = vsel %vm1441, %v3772, 0.0
    %v3815 = vadd.f32 %v3813, %v3814
    %v3816 = vsel %vm1441, %v3773, 0.0
    %v3817 = vadd.f32 %v3815, %v3816
    %v3818 = vsel %vm1441, %v3774, 0.0
    %v3819 = vadd.f32 %v3817, %v3818
    %v3820 = vsel %vm1441, %v3775, 0.0
    %v3821 = vadd.f32 %v3819, %v3820
    %v3822 = vsel %vm1441, %v3776, 0.0
    %v3823 = vadd.f32 %v3821, %v3822
    %v3824 = vsel %vm1441, %v3777, 0.0
    %v3825 = vadd.f32 %v3823, %v3824
    %v3826 = vsel %vm1441, %v3778, 0.0
    %v3827 = vadd.f32 %v3825, %v3826
    %v3828 = vsel %vm1441, %v3779, 0.0
    %v3829 = vadd.f32 %v3827, %v3828
    %v3830 = vsel %vm1441, %v3780, 0.0
    %v3831 = vadd.f32 %v3829, %v3830
    %v3832 = vsel %vm1441, %v3781, 0.0
    %v3833 = vadd.f32 %v3831, %v3832
    %v3834 = vsel %vm1441, %v3782, 0.0
    %v3835 = vadd.f32 %v3833, %v3834
    %v3836 = vsel %vm1441, %v3783, 0.0
    %v3837 = vadd.f32 %v3835, %v3836
    %v3838 = vsel %vm1441, %v3784, 0.0
    %v3839 = vadd.f32 %v3837, %v3838
    %v3840 = vsel %vm1441, %v3785, 0.0
    %v3841 = vadd.f32 %v3839, %v3840
    %v3842 = vsel %vm1441, %v3786, 0.0
    %v3843 = vadd.f32 %v3841, %v3842
    %v3844 = vsel %vm1441, %v3787, 0.0
    %v3845 = vadd.f32 %v3843, %v3844
    %v3846 = vsel %vm1441, %v3788, 0.0
    %v3847 = vadd.f32 %v3845, %v3846
    %v3848 = vsel %vm1441, %v3789, 0.0
    %v3849 = vadd.f32 %v3847, %v3848
    %v3850 = vsel %vm1441, %v3790, 0.0
    %v3851 = vadd.f32 %v3849, %v3850
    %v3852 = vsel %vm1441, %v3791, 0.0
    %v3853 = vadd.f32 %v3851, %v3852
    %v3854 = vsel %vm1441, %v3792, 0.0
    %v3855 = vadd.f32 %v3853, %v3854
    %v3856 = vrot.slane %v3855, 4
    %v3857 = vadd.f32 %v3855, %v3856
    %v3858 = vrot.slane %v3857, 2
    %v3859 = vadd.f32 %v3857, %v3858
    %v3860 = vrot.slane %v3859, 1
    %v3861 = vadd.f32 %v3859, %v3860
    %v3862 = vmul.f32 %v3861, 0.00390625
    %vm3863 = vcmask 1040384
    %v3864 = vsel %vm3863, %v1964, %v3862
    %v3865 = vpack.c.bf16 %v3864, %v3864
    %v3866 = vld [vmem:[%s3] sm:$0xf]
    %v3867 = vld [vmem:[%s3 + $0x4] sm:$0xf]
    %v3868 = vld [vmem:[%s4] sm:$0x1]
    %v3870 = vlaneseq
    %v3871 = vshrl.u32 %v3870, 7
    %v3872 = vsub.s32 0, %v3871
    %v3873 = vrot.slane %v3868, %v3872
    %v3877 = vunpack.c.l.b16 %v3866
    %v3878 = vunpack.c.l.b16 %v3867
    %v3879 = vpack.c.b16 %v3878, %v3877
    %v3882 = vsel %vm1441, %v3865, 0
    %3884 = vmatprep.subr.bf16.mxu0 0
    %3885 = vmatpush1.bf16.msra.mxu0 %v3879
    %3886 = vmatprep.subr.bf16.mxu0 0
    %3887 = vmatpush1.bf16.msra.mxu0 0
    %3888 = vmatprep.subr.bf16.mxu0 0
    %3889 = vmatpush1.bf16.msra.mxu0 0
    %3890 = vmatprep.subr.bf16.mxu0 0
    %3891 = vmatpush1.bf16.msra.mxu0 0
    %3892 = vmatprep.subr.bf16.mxu0 0
    %3893 = vmatpush1.bf16.msra.mxu0 0
    %3894 = vmatprep.subr.bf16.mxu0 0
    %3895 = vmatpush1.bf16.msra.mxu0 0
    %3896 = vmatprep.subr.bf16.mxu0 0
    %3897 = vmatpush1.bf16.msra.mxu0 0
    %3898 = vmatprep.subr.bf16.mxu0 0
    %3899 = vmatpush1.bf16.msra.mxu0 0
    %3900 = vmatprep.subr.bf16.mxu0 0
    %3901 = vmatpush1.bf16.msra.mxu0 0
    %3902 = vmatprep.subr.bf16.mxu0 0
    %3903 = vmatpush1.bf16.msra.mxu0 0
    %3904 = vmatprep.subr.bf16.mxu0 0
    %3905 = vmatpush1.bf16.msra.mxu0 0
    %3906 = vmatprep.subr.bf16.mxu0 0
    %3907 = vmatpush1.bf16.msra.mxu0 0
    %3908 = vmatprep.subr.bf16.mxu0 0
    %3909 = vmatpush1.bf16.msra.mxu0 0
    %3910 = vmatprep.subr.bf16.mxu0 0
    %3911 = vmatpush1.bf16.msra.mxu0 0
    %3912 = vmatprep.subr.bf16.mxu0 0
    %3913 = vmatpush1.bf16.msra.mxu0 0
    %3914 = vmatprep.subr.bf16.mxu0 0
    %3915 = vmatpush1.bf16.msra.mxu0 0
    %3916 = vmatprep.mubr.bf16.mxu0 0
    %3917 = vmatmul.mubr.bf16.gmra.mrb[0].mxu0 %v3882
    %v3918 = vpop.f32.mrb[0].mxu0
    %v3919 = vadd.f32 %v3873, %v3918
    %v3920 = vpop.f32.mrb[0].mxu0
    %v3921 = vpop.f32.mrb[0].mxu0
    %v3922 = vpop.f32.mrb[0].mxu0
    %3923 = vdwg.mxu0
    %v3924 = vpack.c.bf16 %v3919, %v3919
    %v3925 = vld [vmem:[%s5] sm:$0xf]
    %v3926 = vld [vmem:[%s5 + $0x4] sm:$0xf]
    %v3927 = vld [vmem:[%s5 + $0x8] sm:$0xf]
    %v3928 = vld [vmem:[%s5 + $0xc] sm:$0xf]
    %v3929 = vld [vmem:[%s5 + $0x10] sm:$0xf]
    %v3930 = vld [vmem:[%s5 + $0x14] sm:$0xf]
    %v3931 = vld [vmem:[%s5 + $0x18] sm:$0xf]
    %v3932 = vld [vmem:[%s5 + $0x1c] sm:$0xf]
    %v3933 = vld [vmem:[%s5 + $0x20] sm:$0xf]
    %v3934 = vld [vmem:[%s5 + $0x24] sm:$0xf]
    %v3935 = vld [vmem:[%s5 + $0x28] sm:$0xf]
    %v3936 = vld [vmem:[%s5 + $0x2c] sm:$0xf]
    %v3937 = vld [vmem:[%s5 + $0x30] sm:$0xf]
    %v3938 = vld [vmem:[%s5 + $0x34] sm:$0xf]
    %v3939 = vld [vmem:[%s5 + $0x38] sm:$0xf]
    %v3940 = vld [vmem:[%s5 + $0x3c] sm:$0xf]
    %v3941 = vld [vmem:[%s6] sm:$0x1]
    %v3943 = vlaneseq
    %v3944 = vshrl.u32 %v3943, 7
    %v3945 = vsub.s32 0, %v3944
    %v3946 = vrot.slane %v3941, %v3945
    %v3964 = vunpack.c.l.b16 %v3925
    %v3965 = vunpack.c.l.b16 %v3926
    %v3966 = vunpack.c.l.b16 %v3927
    %v3967 = vunpack.c.l.b16 %v3928
    %v3968 = vunpack.c.l.b16 %v3929
    %v3969 = vunpack.c.l.b16 %v3930
    %v3970 = vunpack.c.l.b16 %v3931
    %v3971 = vunpack.c.l.b16 %v3932
    %v3972 = vunpack.c.l.b16 %v3933
    %v3973 = vunpack.c.l.b16 %v3934
    %v3974 = vunpack.c.l.b16 %v3935
    %v3975 = vunpack.c.l.b16 %v3936
    %v3976 = vunpack.c.l.b16 %v3937
    %v3977 = vunpack.c.l.b16 %v3938
    %v3978 = vunpack.c.l.b16 %v3939
    %v3979 = vunpack.c.l.b16 %v3940
    %v3980 = vpack.c.b16 %v3965, %v3964
    %v3981 = vpack.c.b16 %v3967, %v3966
    %v3982 = vpack.c.b16 %v3969, %v3968
    %v3983 = vpack.c.b16 %v3971, %v3970
    %v3984 = vpack.c.b16 %v3973, %v3972
    %v3985 = vpack.c.b16 %v3975, %v3974
    %v3986 = vpack.c.b16 %v3977, %v3976
    %v3987 = vpack.c.b16 %v3979, %v3978
    %3996 = vmatprep.subr.bf16.mxu0 0
    %3997 = vmatpush1.bf16.msra.mxu0 %v3980
    %3998 = vmatprep.subr.bf16.mxu0 0
    %3999 = vmatpush1.bf16.msra.mxu0 %v3981
    %4000 = vmatprep.subr.bf16.mxu0 0
    %4001 = vmatpush1.bf16.msra.mxu0 %v3982
    %4002 = vmatprep.subr.bf16.mxu0 0
    %4003 = vmatpush1.bf16.msra.mxu0 %v3983
    %4004 = vmatprep.subr.bf16.mxu0 0
    %4005 = vmatpush1.bf16.msra.mxu0 %v3984
    %4006 = vmatprep.subr.bf16.mxu0 0
    %4007 = vmatpush1.bf16.msra.mxu0 %v3985
    %4008 = vmatprep.subr.bf16.mxu0 0
    %4009 = vmatpush1.bf16.msra.mxu0 %v3986
    %4010 = vmatprep.subr.bf16.mxu0 0
    %4011 = vmatpush1.bf16.msra.mxu0 %v3987
    %4012 = vmatprep.subr.bf16.mxu0 0
    %4013 = vmatpush1.bf16.msra.mxu0 0
    %4014 = vmatprep.subr.bf16.mxu0 0
    %4015 = vmatpush1.bf16.msra.mxu0 0
    %4016 = vmatprep.subr.bf16.mxu0 0
    %4017 = vmatpush1.bf16.msra.mxu0 0
    %4018 = vmatprep.subr.bf16.mxu0 0
    %4019 = vmatpush1.bf16.msra.mxu0 0
    %4020 = vmatprep.subr.bf16.mxu0 0
    %4021 = vmatpush1.bf16.msra.mxu0 0
    %4022 = vmatprep.subr.bf16.mxu0 0
    %4023 = vmatpush1.bf16.msra.mxu0 0
    %4024 = vmatprep.subr.bf16.mxu0 0
    %4025 = vmatpush1.bf16.msra.mxu0 0
    %4026 = vmatprep.subr.bf16.mxu0 0
    %4027 = vmatpush1.bf16.msra.mxu0 0
    %4028 = vmatprep.mubr.bf16.mxu0 0
    %4029 = vmatmul.mubr.bf16.gmra.mrb[0].mxu0 %v3924
    %v4030 = vpop.f32.mrb[0].mxu0
    %v4031 = vadd.f32 %v3946, %v4030
    %v4032 = vpop.f32.mrb[0].mxu0
    %v4033 = vpop.f32.mrb[0].mxu0
    %v4034 = vpop.f32.mrb[0].mxu0
    %4035 = vdwg.mxu0
    %4036 = vst [vmem:[#allocation2] sm:$0x3] %v4031
    // Predicated region
    $region30: #{plcil_forward.1} parent=1 // pred_check
      _
    $region31: #{plcil_forward.1} parent=1 // pred_check_branch
      %4038 = sbr.rel (0) target = $region33
    $region32: #{plcil_forward.1} parent=1 // pred_region
      %s4040 = ssub.s32 32, 32
      %4041 = vsyncadd [#allocation3], %s4040
      %s4043 = sshll.u32 [#allocation2], 4
      %s4044 = int_to_ptr.vmem [resolvable:$true] %s4043
      %4046 = dma.vmem_to_hbm [thread:$0]  %s4044, 32, %s7, [#allocation3]
    $region33: #{plcil_forward.1} parent=1 // pred_fallthru
      _
    // Predicated region
    $region34: #{plcil_forward.1} parent=1 // pred_check
      _
    $region35: #{plcil_forward.1} parent=1 // pred_check_branch
      %4048 = sbr.rel (0) target = $region37
    $region36: #{plcil_forward.1} parent=1 // pred_region
      %4049 = dma.done [#allocation3], 32
    $region37: #{plcil_forward.1} parent=1 // pred_fallthru
      _
    %4050 = vsyncpa [#allocation3], 1

</llo_original>
